<compile_context>
chip_gen: v6e
topology: v6e:2x2x1
jax: 0.10.0
libtpu: 0.0.40
codegen_flags: <defaults>
</compile_context>

<pallas_src>
import functools
import math

import jax
import jax.numpy as jnp
from jax import lax
from jax.experimental import pallas as pl
from jax.experimental.pallas import tpu as pltpu

NORM_EPS = 1e-5

# parameter tuple layout (per layer); indices of weight matrices cast to bf16 for the MXU
_BF16_IDX = frozenset({2, 6, 8, 12, 14})

_VMEM_LIMIT_CACHE = [False, None]


def _vmem_limit_bytes():
    """Generation-aware scoped-VMEM limit (~85% of physical); None -> compiler default."""
    if not _VMEM_LIMIT_CACHE[0]:
        limit = None
        try:
            cap = getattr(pltpu.get_tpu_info(), "vmem_capacity_bytes", None)
            if cap:
                limit = int(cap * 0.85)
        except Exception:
            limit = None
        _VMEM_LIMIT_CACHE[0] = True
        _VMEM_LIMIT_CACHE[1] = limit
    return _VMEM_LIMIT_CACHE[1]


def _layer_norm(x, gamma, beta, eps=NORM_EPS):
    # x: (N, E) f32; gamma/beta: (1, E) f32
    mu = jnp.mean(x, axis=-1, keepdims=True)
    var = jnp.mean((x - mu) * (x - mu), axis=-1, keepdims=True)
    return (x - mu) * lax.rsqrt(var + eps) * gamma + beta


def _softmax_lastdim(s):
    s = s - jnp.max(s, axis=-1, keepdims=True)
    e = jnp.exp(s)
    return e * pl.reciprocal(jnp.sum(e, axis=-1, keepdims=True), approx=True)


def encoder_layer_kernel(*refs, num_heads, fuse_final_norm):
    n_in = 18 + (2 if fuse_final_norm else 0)
    in_refs, out_refs = refs[:n_in], refs[n_in:]
    (seq_ref, prior_ref,
     gn_g, gn_b, gqk_w, gqk_b,
     n1_g, n1_b, w_in, b_in, w_out, b_out,
     n2_g, n2_b, w1, b1, w2, b2) = in_refs[:18]
    seq_out_ref, gp_out_ref, bp_out_ref, attn_out_ref = out_refs[:4]

    seq = seq_ref[0]          # (N, E) f32
    prior = prior_ref[0]      # (N, N) f32 (zeros for the first layer)
    N, E = seq.shape
    H = num_heads
    Dh = E // H

    row = lax.broadcasted_iota(jnp.int32, (N, N), 0)
    col = lax.broadcasted_iota(jnp.int32, (N, N), 1)
    a_mask = col == row + 1        # super-diagonal
    c_mask = col == row - 1        # sub-diagonal
    diag = col == row

    # ---------------- GroupAttention (constituent prior) ----------------
    gx = _layer_norm(seq, gn_g[...], gn_b[...]).astype(jnp.bfloat16)
    gqk = jnp.dot(gx, gqk_w[...], preferred_element_type=jnp.float32) + gqk_b[...]   # (N, 2E) f32
    gq = gqk[:, :E]
    gk = gqk[:, E:]
    inv_scale = 1.0 / float(E)

    # Only the super/sub-diagonals of the score matrix are ever used: compute them with a
    # sublane roll + row reductions + a 2-way softmax (no O(N^2*E) score matmul, no N^2 exp).
    gk_next = pltpu.roll(gk, shift=N - 1, axis=0)    # gk[(i+1) % N]
    gk_prev = pltpu.roll(gk, shift=1, axis=0)        # gk[(i-1) % N]
    s_up = jnp.sum(gq * gk_next, axis=-1, keepdims=True) * inv_scale   # (N, 1)
    s_dn = jnp.sum(gq * gk_prev, axis=-1, keepdims=True) * inv_scale   # (N, 1)
    ridx = lax.broadcasted_iota(jnp.int32, (N, 1), 0)
    s_up = jnp.where(ridx == N - 1, -1e9, s_up)      # last row has no right neighbor
    s_dn = jnp.where(ridx == 0, -1e9, s_dn)          # first row has no left neighbor
    m = jnp.maximum(s_up, s_dn)
    e_up = jnp.exp(s_up - m)
    e_dn = jnp.exp(s_dn - m)
    # exact divide here: (N,1) work is negligible and it feeds the log/exp prior chain
    inv_den = 1.0 / (e_up + e_dn)
    p_up = e_up * inv_den                            # prob of right neighbor, per row
    p_dn = e_dn * inv_den                            # prob of left neighbor, per row

    a_f32 = a_mask.astype(jnp.float32)
    c_f32 = c_mask.astype(jnp.float32)
    # symmetric break prob built from vectors: value at (i,i+1) = sqrt(p_up[i]*p_dn[i+1] + 1e-9),
    # (i,i-1) mirrors it, sqrt(1e-9) background everywhere else (incl. diagonal).
    d_next = jnp.dot(a_f32, p_dn, preferred_element_type=jnp.float32)      # p_dn[i+1] (0 on last row)
    sym_up = jnp.sqrt(p_up * d_next + 1e-9)                                # (N, 1)
    sym_dn = jnp.dot(c_f32, sym_up, preferred_element_type=jnp.float32)    # sym_up[i-1] (0 on row 0)
    bg = math.sqrt(1e-9)
    neibor_raw = jnp.where(a_mask, sym_up, jnp.where(c_mask, sym_dn, bg))  # (N, N)
    neibor = prior + (1.0 - prior) * neibor_raw                            # blended break prob

    # constituent prior: g[i,j] = exp(sum_{k=i}^{j-1} log(neibor[k,k+1] + 1e-9)) for j > i,
    # computed with an exclusive prefix sum C and a single masked exp of the outer difference.
    prior_up = jnp.sum(jnp.where(a_mask, prior, 0.0), axis=-1, keepdims=True)   # prior super-diag
    blend_up = prior_up + (1.0 - prior_up) * sym_up
    logv = jnp.log(blend_up + 1e-9)                                             # (N, 1); last row unused
    low_strict = (col < row).astype(jnp.float32)
    c_col = jnp.dot(low_strict, logv, preferred_element_type=jnp.float32)       # (N, 1): C[i]
    c_row = jnp.sum(jnp.where(row < col, logv, 0.0), axis=0, keepdims=True)     # (1, N): C[j]
    delta = c_row - c_col                                                        # C[j] - C[i]
    arg = jnp.where(col >= row, delta, -delta)       # upper: g ; lower: g.T (both args <= ~0)
    g = jnp.exp(arg)
    group_prob = jnp.where(diag, neibor, g + 1e-9)

    # ---------------- Sparse multi-head self-attention ----------------
    x = _layer_norm(seq, n1_g[...], n1_b[...]).astype(jnp.bfloat16)              # (N, E)
    qkv = jnp.dot(x, w_in[...], preferred_element_type=jnp.float32) + b_in[...]  # (N, 3E) f32
    inv_sqrt_dh = 1.0 / math.sqrt(Dh)
    # head split via static lane slices + leading-dim stack (relayout only, O(N*E));
    # the 1/sqrt(Dh) scale is folded into q (N*E mults instead of H*N^2).
    q = jnp.stack([qkv[:, h * Dh:(h + 1) * Dh] for h in range(H)]) * inv_sqrt_dh
    k = jnp.stack([qkv[:, E + h * Dh:E + (h + 1) * Dh] for h in range(H)])
    v = jnp.stack([qkv[:, 2 * E + h * Dh:2 * E + (h + 1) * Dh] for h in range(H)])
    s = jnp.einsum('hnd,hmd->hnm', q.astype(jnp.bfloat16), k.astype(jnp.bfloat16),
                   preferred_element_type=jnp.float32)                           # (H, N, N)
    p = _softmax_lastdim(s) * group_prob[None]
    attn_out_ref[0] = p                                                          # one whole-block store
    ctx = jnp.einsum('hnm,hmd->hnd', p.astype(jnp.bfloat16), v.astype(jnp.bfloat16),
                     preferred_element_type=jnp.float32)                         # (H, N, Dh)
    ctx_cat = jnp.concatenate([ctx[h] for h in range(H)], axis=-1).astype(jnp.bfloat16)  # (N, E)
    attn_o = jnp.dot(ctx_cat, w_out[...], preferred_element_type=jnp.float32) + b_out[...]
    seq1 = seq + attn_o                                                          # residual (dropout=None)

    # ---------------- MLP ----------------
    y = _layer_norm(seq1, n2_g[...], n2_b[...]).astype(jnp.bfloat16)
    h1 = jnp.maximum(jnp.dot(y, w1[...], preferred_element_type=jnp.float32) + b1[...], 0.0)
    h2 = jnp.dot(h1.astype(jnp.bfloat16), w2[...],
                 preferred_element_type=jnp.float32) + b2[...]
    seq2 = seq1 + h2

    seq_out_ref[0] = seq2
    gp_out_ref[0] = group_prob
    bp_out_ref[0] = neibor
    if fuse_final_norm:
        fg, fb = in_refs[18], in_refs[19]
        out_refs[4][0] = _layer_norm(seq2, fg[...], fb[...])


def _weight_spec(shape, buffered):
    nd = len(shape)
    idx = lambda b, nd=nd: (0,) * nd
    if buffered:
        # grid-invariant operand: single VMEM copy instead of default double buffering
        return pl.BlockSpec(shape, idx, pipeline_mode=pl.Buffered(1))
    return pl.BlockSpec(shape, idx)


def _cast_params(params):
    return tuple(p.astype(jnp.bfloat16) if i in _BF16_IDX else p
                 for i, p in enumerate(params))


def encoder_layer(seq, prior, params, *, num_heads, final_norm_params=None):
    B, N, E = seq.shape
    H = num_heads
    fuse = final_norm_params is not None
    all_params = _cast_params(params) + (tuple(final_norm_params) if fuse else ())

    def build(buffered):
        kern = functools.partial(encoder_layer_kernel, num_heads=H, fuse_final_norm=fuse)
        spec_e = pl.BlockSpec((1, N, E), lambda b: (b, 0, 0))
        spec_n = pl.BlockSpec((1, N, N), lambda b: (b, 0, 0))
        in_specs = [spec_e, spec_n] + [_weight_spec(p.shape, buffered) for p in all_params]
        out_specs = [spec_e, spec_n, spec_n,
                     pl.BlockSpec((1, H, N, N), lambda b: (b, 0, 0, 0))]
        out_shape = [jax.ShapeDtypeStruct((B, N, E), jnp.float32),
                     jax.ShapeDtypeStruct((B, N, N), jnp.float32),
                     jax.ShapeDtypeStruct((B, N, N), jnp.float32),
                     jax.ShapeDtypeStruct((B, H, N, N), jnp.float32)]
        if fuse:
            out_specs.append(spec_e)
            out_shape.append(jax.ShapeDtypeStruct((B, N, E), jnp.float32))
        return pl.pallas_call(
            kern,
            out_shape=tuple(out_shape),
            grid_spec=pltpu.PrefetchScalarGridSpec(
                num_scalar_prefetch=0, grid=(B,),
                in_specs=in_specs, out_specs=tuple(out_specs)),
            compiler_params=pltpu.CompilerParams(
                dimension_semantics=("parallel",),
                vmem_limit_bytes=_vmem_limit_bytes()),
        )

    try:
        return build(True)(seq, prior, *all_params)
    except Exception:
        # only the buffering depth differs; numerics are identical
        return build(False)(seq, prior, *all_params)


def sparse_transformer_forward(seq, layer_params, final_g, final_b, *, num_heads):
    """pre_norm=True forward: returns (seq, seq_tokens, break_probs, constituent_prior, attns)."""
    B, N, _ = seq.shape
    group_prob = jnp.zeros((B, N, N), jnp.float32)   # == float 0.0 prior for first layer
    seq_tokens, break_probs, constituent_prior, attns = [], [], [], []
    n_layers = len(layer_params)
    normed = seq
    for li, params in enumerate(layer_params):
        is_last = li == n_layers - 1
        outs = encoder_layer(seq, group_prob, params, num_heads=num_heads,
                             final_norm_params=(final_g, final_b) if is_last else None)
        if is_last:
            seq, group_prob, break_prob, attn, normed = outs
        else:
            seq, group_prob, break_prob, attn = outs
        seq_tokens.append(seq)           # pre-final-norm sequence, matching the PyTorch module
        break_probs.append(break_prob)
        constituent_prior.append(group_prob)
        attns.append(attn)
    return normed, seq_tokens, break_probs, constituent_prior, attns


# ---------------- deterministic parameter init ----------------
def _xavier(key, fan_in, fan_out):
    lim = math.sqrt(6.0 / (fan_in + fan_out))
    return jax.random.uniform(key, (fan_in, fan_out), jnp.float32, -lim, lim)


def init_layer_params(key, E, H, F):
    del H  # head split is a pure reshape of the (E, 3E) projection columns
    ks = jax.random.split(key, 6)
    ones_e = jnp.ones((1, E), jnp.float32)
    zeros_e = jnp.zeros((1, E), jnp.float32)
    bias_e = jnp.full((1, E), 1e-6, jnp.float32)
    gqk_w = jnp.concatenate([_xavier(ks[0], E, E), _xavier(ks[1], E, E)], axis=1)   # (E, 2E) [q|k]
    gqk_b = jnp.full((1, 2 * E), 1e-6, jnp.float32)
    w_in = _xavier(ks[2], E, 3 * E)               # (E, 3E) columns [q|k|v], head-contiguous
    b_in = jnp.full((1, 3 * E), 1e-6, jnp.float32)
    w_out = _xavier(ks[3], E, E)                  # (E, E), rows = concatenated heads
    return (
        ones_e, zeros_e,                                   # 0,1   group_norm gamma/beta
        gqk_w, gqk_b,                                      # 2,3   group-attn fused q|k proj
        ones_e, zeros_e,                                   # 4,5   norm1 gamma/beta
        w_in, b_in,                                        # 6,7   qkv in-proj (fused wide)
        w_out, bias_e,                                     # 8,9   out-proj W/b
        ones_e, zeros_e,                                   # 10,11 norm2 gamma/beta
        _xavier(ks[4], E, F), jnp.full((1, F), 1e-6, jnp.float32),   # 12,13 mlp linear1
        _xavier(ks[5], F, E), bias_e,                      # 14,15 mlp linear2
    )


if __name__ == "__main__":
    B, N, E, H, F, L = 2, 16, 32, 4, 64, 2
    seq = jax.random.normal(jax.random.PRNGKey(0), (B, N, E), jnp.float32)

    layer_keys = jax.random.split(jax.random.PRNGKey(1), L)
    layer_params = [init_layer_params(k, E, H, F) for k in layer_keys]
    final_g = jnp.ones((1, E), jnp.float32)
    final_b = jnp.zeros((1, E), jnp.float32)

    out_seq, seq_tokens, break_probs, constituent_prior, attns = sparse_transformer_forward(
        seq, layer_params, final_g, final_b, num_heads=H)

    jax.block_until_ready(out_seq)
    jax.block_until_ready(attns[-1])
    assert out_seq.shape == (B, N, E)
    assert seq_tokens[-1].shape == (B, N, E)
    assert break_probs[0].shape == (B, N, N)
    assert constituent_prior[0].shape == (B, N, N)
    assert attns[0].shape == (B, H, N, N)
    assert bool(jnp.all(jnp.isfinite(out_seq)))
    assert bool(jnp.all(jnp.isfinite(attns[-1])))
    assert bool(jnp.all(jnp.isfinite(constituent_prior[-1])))
    print("KERNEL_OK")
</pallas_src>

<mosaic_0001>
module attributes {stable_mosaic.version = 11 : i64} {
  func.func @encoder_layer_kernel(%arg0: i32, %arg1: memref<1x16x32xf32, #tpu.memory_space<vmem>>, %arg2: memref<1x16x16xf32, #tpu.memory_space<vmem>>, %arg3: memref<1x32xf32, #tpu.memory_space<vmem>>, %arg4: memref<1x32xf32, #tpu.memory_space<vmem>>, %arg5: memref<32x64xbf16, #tpu.memory_space<vmem>>, %arg6: memref<1x64xf32, #tpu.memory_space<vmem>>, %arg7: memref<1x32xf32, #tpu.memory_space<vmem>>, %arg8: memref<1x32xf32, #tpu.memory_space<vmem>>, %arg9: memref<32x96xbf16, #tpu.memory_space<vmem>>, %arg10: memref<1x96xf32, #tpu.memory_space<vmem>>, %arg11: memref<32x32xbf16, #tpu.memory_space<vmem>>, %arg12: memref<1x32xf32, #tpu.memory_space<vmem>>, %arg13: memref<1x32xf32, #tpu.memory_space<vmem>>, %arg14: memref<1x32xf32, #tpu.memory_space<vmem>>, %arg15: memref<32x64xbf16, #tpu.memory_space<vmem>>, %arg16: memref<1x64xf32, #tpu.memory_space<vmem>>, %arg17: memref<64x32xbf16, #tpu.memory_space<vmem>>, %arg18: memref<1x32xf32, #tpu.memory_space<vmem>>, %arg19: memref<1x16x32xf32, #tpu.memory_space<vmem>>, %arg20: memref<1x16x16xf32, #tpu.memory_space<vmem>>, %arg21: memref<1x16x16xf32, #tpu.memory_space<vmem>>, %arg22: memref<1x4x16x16xf32, #tpu.memory_space<vmem>>) attributes {dimension_semantics = [#tpu.dimension_semantics<parallel>], iteration_bounds = array<i64: 2>, scalar_prefetch = 0 : i64, scratch_operands = 0 : i64, tpu.core_type = #tpu.core_type<tc>, window_params = [{transform_indices = @transform_0, window_bounds = array<i64: 1, 16, 32>}, {transform_indices = @transform_1, window_bounds = array<i64: 1, 16, 16>}, {pipeline_mode = #tpu.pipeline_mode<synchronous>, transform_indices = @transform_2, window_bounds = array<i64: 1, 32>}, {pipeline_mode = #tpu.pipeline_mode<synchronous>, transform_indices = @transform_3, window_bounds = array<i64: 1, 32>}, {pipeline_mode = #tpu.pipeline_mode<synchronous>, transform_indices = @transform_4, window_bounds = array<i64: 32, 64>}, {pipeline_mode = #tpu.pipeline_mode<synchronous>, transform_indices = @transform_5, window_bounds = array<i64: 1, 64>}, {pipeline_mode = #tpu.pipeline_mode<synchronous>, transform_indices = @transform_6, window_bounds = array<i64: 1, 32>}, {pipeline_mode = #tpu.pipeline_mode<synchronous>, transform_indices = @transform_7, window_bounds = array<i64: 1, 32>}, {pipeline_mode = #tpu.pipeline_mode<synchronous>, transform_indices = @transform_8, window_bounds = array<i64: 32, 96>}, {pipeline_mode = #tpu.pipeline_mode<synchronous>, transform_indices = @transform_9, window_bounds = array<i64: 1, 96>}, {pipeline_mode = #tpu.pipeline_mode<synchronous>, transform_indices = @transform_10, window_bounds = array<i64: 32, 32>}, {pipeline_mode = #tpu.pipeline_mode<synchronous>, transform_indices = @transform_11, window_bounds = array<i64: 1, 32>}, {pipeline_mode = #tpu.pipeline_mode<synchronous>, transform_indices = @transform_12, window_bounds = array<i64: 1, 32>}, {pipeline_mode = #tpu.pipeline_mode<synchronous>, transform_indices = @transform_13, window_bounds = array<i64: 1, 32>}, {pipeline_mode = #tpu.pipeline_mode<synchronous>, transform_indices = @transform_14, window_bounds = array<i64: 32, 64>}, {pipeline_mode = #tpu.pipeline_mode<synchronous>, transform_indices = @transform_15, window_bounds = array<i64: 1, 64>}, {pipeline_mode = #tpu.pipeline_mode<synchronous>, transform_indices = @transform_16, window_bounds = array<i64: 64, 32>}, {pipeline_mode = #tpu.pipeline_mode<synchronous>, transform_indices = @transform_17, window_bounds = array<i64: 1, 32>}, {transform_indices = @transform_18, window_bounds = array<i64: 1, 16, 32>}, {transform_indices = @transform_19, window_bounds = array<i64: 1, 16, 16>}, {transform_indices = @transform_20, window_bounds = array<i64: 1, 16, 16>}, {transform_indices = @transform_21, window_bounds = array<i64: 1, 4, 16, 16>}]} {
    %c0 = arith.constant 0 : index
    %c0_0 = arith.constant 0 : index
    %c0_1 = arith.constant 0 : index
    %0 = vector.load %arg1[%c0, %c0_0, %c0_1] : memref<1x16x32xf32, #tpu.memory_space<vmem>>, vector<1x16x32xf32>
    %1 = vector.shape_cast %0 : vector<1x16x32xf32> to vector<16x32xf32>
    %c0_2 = arith.constant 0 : index
    %c0_3 = arith.constant 0 : index
    %c0_4 = arith.constant 0 : index
    %2 = vector.load %arg2[%c0_2, %c0_3, %c0_4] : memref<1x16x16xf32, #tpu.memory_space<vmem>>, vector<1x16x16xf32>
    %3 = vector.shape_cast %2 : vector<1x16x16xf32> to vector<16x16xf32>
    %4 = tpu.iota {dimensions = array<i32: 0>} : vector<16x16xi32>
    %5 = tpu.iota {dimensions = array<i32: 1>} : vector<16x16xi32>
    %c1_i32 = arith.constant 1 : i32
    %6 = vector.broadcast %c1_i32 : i32 to vector<16x16xi32>
    %7 = arith.addi %4, %6 : vector<16x16xi32>
    %8 = arith.cmpi eq, %5, %7 : vector<16x16xi32>
    %c1_i32_5 = arith.constant 1 : i32
    %9 = vector.broadcast %c1_i32_5 : i32 to vector<16x16xi32>
    %10 = arith.subi %4, %9 : vector<16x16xi32>
    %11 = arith.cmpi eq, %5, %10 : vector<16x16xi32>
    %12 = arith.cmpi eq, %5, %4 : vector<16x16xi32>
    %c0_6 = arith.constant 0 : index
    %c0_7 = arith.constant 0 : index
    %13 = vector.load %arg3[%c0_6, %c0_7] : memref<1x32xf32, #tpu.memory_space<vmem>>, vector<1x32xf32>
    %c0_8 = arith.constant 0 : index
    %c0_9 = arith.constant 0 : index
    %14 = vector.load %arg4[%c0_8, %c0_9] : memref<1x32xf32, #tpu.memory_space<vmem>>, vector<1x32xf32>
    %cst = arith.constant dense<0.000000e+00> : vector<16xf32>
    %15 = vector.multi_reduction <add>, %1, %cst [1] : vector<16x32xf32> to vector<16xf32>
    %16 = vector.shape_cast %15 : vector<16xf32> to vector<16x1xf32>
    %cst_10 = arith.constant 3.200000e+01 : f32
    %17 = vector.broadcast %cst_10 : f32 to vector<16x1xf32>
    %18 = arith.divf %16, %17 : vector<16x1xf32>
    %19 = vector.broadcast %18 : vector<16x1xf32> to vector<16x32xf32>
    %20 = arith.subf %1, %19 : vector<16x32xf32>
    %21 = vector.broadcast %18 : vector<16x1xf32> to vector<16x32xf32>
    %22 = arith.subf %1, %21 : vector<16x32xf32>
    %23 = arith.mulf %20, %22 : vector<16x32xf32>
    %cst_11 = arith.constant dense<0.000000e+00> : vector<16xf32>
    %24 = vector.multi_reduction <add>, %23, %cst_11 [1] : vector<16x32xf32> to vector<16xf32>
    %25 = vector.shape_cast %24 : vector<16xf32> to vector<16x1xf32>
    %cst_12 = arith.constant 3.200000e+01 : f32
    %26 = vector.broadcast %cst_12 : f32 to vector<16x1xf32>
    %27 = arith.divf %25, %26 : vector<16x1xf32>
    %28 = vector.broadcast %18 : vector<16x1xf32> to vector<16x32xf32>
    %29 = arith.subf %1, %28 : vector<16x32xf32>
    %cst_13 = arith.constant 9.99999974E-6 : f32
    %30 = vector.broadcast %cst_13 : f32 to vector<16x1xf32>
    %31 = arith.addf %27, %30 : vector<16x1xf32>
    %32 = math.rsqrt %31 : vector<16x1xf32>
    %33 = vector.broadcast %32 : vector<16x1xf32> to vector<16x32xf32>
    %34 = arith.mulf %29, %33 : vector<16x32xf32>
    %35 = vector.broadcast %13 : vector<1x32xf32> to vector<16x32xf32>
    %36 = arith.mulf %34, %35 : vector<16x32xf32>
    %37 = vector.broadcast %14 : vector<1x32xf32> to vector<16x32xf32>
    %38 = arith.addf %36, %37 : vector<16x32xf32>
    %39 = arith.truncf %38 : vector<16x32xf32> to vector<16x32xbf16>
    %c0_14 = arith.constant 0 : index
    %c0_15 = arith.constant 0 : index
    %40 = vector.load %arg5[%c0_14, %c0_15] : memref<32x64xbf16, #tpu.memory_space<vmem>>, vector<32x64xbf16>
    %cst_16 = arith.constant dense<0.000000e+00> : vector<16x64xf32>
    %41 = tpu.matmul %39, %40, %cst_16 {dimension_numbers = #tpu.dot_dimension_numbers<[1], [0], [0], [1], [0, 0, 1, 1], [], []>} : vector<16x32xbf16>, vector<32x64xbf16>, vector<16x64xf32> -> vector<16x64xf32>
    %c0_17 = arith.constant 0 : index
    %c0_18 = arith.constant 0 : index
    %42 = vector.load %arg6[%c0_17, %c0_18] : memref<1x64xf32, #tpu.memory_space<vmem>>, vector<1x64xf32>
    %43 = vector.broadcast %42 : vector<1x64xf32> to vector<16x64xf32>
    %44 = arith.addf %41, %43 : vector<16x64xf32>
    %45 = vector.extract_strided_slice %44 {offsets = [0, 0], sizes = [16, 32], strides = [1, 1]} : vector<16x64xf32> to vector<16x32xf32>
    %46 = vector.extract_strided_slice %44 {offsets = [0, 32], sizes = [16, 32], strides = [1, 1]} : vector<16x64xf32> to vector<16x32xf32>
    %c15_i32 = arith.constant 15 : i32
    %47 = tpu.dynamic_rotate %46 by %c15_i32 dim 0 : vector<16x32xf32>, i32 -> vector<16x32xf32>
    %c1_i32_19 = arith.constant 1 : i32
    %48 = tpu.dynamic_rotate %46 by %c1_i32_19 dim 0 : vector<16x32xf32>, i32 -> vector<16x32xf32>
    %49 = arith.mulf %45, %47 : vector<16x32xf32>
    %cst_20 = arith.constant dense<0.000000e+00> : vector<16xf32>
    %50 = vector.multi_reduction <add>, %49, %cst_20 [1] : vector<16x32xf32> to vector<16xf32>
    %51 = vector.shape_cast %50 : vector<16xf32> to vector<16x1xf32>
    %cst_21 = arith.constant 3.125000e-02 : f32
    %52 = vector.broadcast %cst_21 : f32 to vector<16x1xf32>
    %53 = arith.mulf %51, %52 : vector<16x1xf32>
    %54 = arith.mulf %45, %48 : vector<16x32xf32>
    %cst_22 = arith.constant dense<0.000000e+00> : vector<16xf32>
    %55 = vector.multi_reduction <add>, %54, %cst_22 [1] : vector<16x32xf32> to vector<16xf32>
    %56 = vector.shape_cast %55 : vector<16xf32> to vector<16x1xf32>
    %cst_23 = arith.constant 3.125000e-02 : f32
    %57 = vector.broadcast %cst_23 : f32 to vector<16x1xf32>
    %58 = arith.mulf %56, %57 : vector<16x1xf32>
    %59 = tpu.iota {dimensions = array<i32: 0>} : vector<16x1xi32>
    %c15_i32_24 = arith.constant 15 : i32
    %60 = vector.broadcast %c15_i32_24 : i32 to vector<16x1xi32>
    %61 = arith.cmpi eq, %59, %60 : vector<16x1xi32>
    %cst_25 = arith.constant -1.000000e+09 : f32
    %62 = vector.broadcast %cst_25 : f32 to vector<16x1xf32>
    %63 = arith.select %61, %62, %53 : vector<16x1xi1>, vector<16x1xf32>
    %c0_i32 = arith.constant 0 : i32
    %64 = vector.broadcast %c0_i32 : i32 to vector<16x1xi32>
    %65 = arith.cmpi eq, %59, %64 : vector<16x1xi32>
    %cst_26 = arith.constant -1.000000e+09 : f32
    %66 = vector.broadcast %cst_26 : f32 to vector<16x1xf32>
    %67 = arith.select %65, %66, %58 : vector<16x1xi1>, vector<16x1xf32>
    %68 = arith.maximumf %63, %67 : vector<16x1xf32>
    %69 = arith.subf %63, %68 : vector<16x1xf32>
    %70 = math.exp %69 : vector<16x1xf32>
    %71 = arith.subf %67, %68 : vector<16x1xf32>
    %72 = math.exp %71 : vector<16x1xf32>
    %73 = arith.addf %70, %72 : vector<16x1xf32>
    %cst_27 = arith.constant 1.000000e+00 : f32
    %74 = vector.broadcast %cst_27 : f32 to vector<16x1xf32>
    %75 = arith.divf %74, %73 : vector<16x1xf32>
    %76 = arith.mulf %70, %75 : vector<16x1xf32>
    %77 = arith.mulf %72, %75 : vector<16x1xf32>
    %78 = arith.extui %8 : vector<16x16xi1> to vector<16x16xi32>
    %79 = arith.sitofp %78 : vector<16x16xi32> to vector<16x16xf32>
    %80 = arith.extui %11 : vector<16x16xi1> to vector<16x16xi32>
    %81 = arith.sitofp %80 : vector<16x16xi32> to vector<16x16xf32>
    %cst_28 = arith.constant dense<0.000000e+00> : vector<16x1xf32>
    %82 = tpu.matmul %79, %77, %cst_28 {dimension_numbers = #tpu.dot_dimension_numbers<[1], [0], [0], [1], [0, 0, 1, 1], [], []>} : vector<16x16xf32>, vector<16x1xf32>, vector<16x1xf32> -> vector<16x1xf32>
    %83 = arith.mulf %76, %82 : vector<16x1xf32>
    %cst_29 = arith.constant 9.99999971E-10 : f32
    %84 = vector.broadcast %cst_29 : f32 to vector<16x1xf32>
    %85 = arith.addf %83, %84 : vector<16x1xf32>
    %86 = math.sqrt %85 : vector<16x1xf32>
    %cst_30 = arith.constant dense<0.000000e+00> : vector<16x1xf32>
    %87 = tpu.matmul %81, %86, %cst_30 {dimension_numbers = #tpu.dot_dimension_numbers<[1], [0], [0], [1], [0, 0, 1, 1], [], []>} : vector<16x16xf32>, vector<16x1xf32>, vector<16x1xf32> -> vector<16x1xf32>
    %cst_31 = arith.constant 3.16227779E-5 : f32
    %88 = vector.shape_cast %87 : vector<16x1xf32> to vector<16x1xf32>
    %89 = vector.broadcast %88 : vector<16x1xf32> to vector<16x16xf32>
    %90 = vector.broadcast %cst_31 : f32 to vector<16x16xf32>
    %91 = arith.select %11, %89, %90 : vector<16x16xi1>, vector<16x16xf32>
    %92 = vector.shape_cast %86 : vector<16x1xf32> to vector<16x1xf32>
    %93 = vector.broadcast %92 : vector<16x1xf32> to vector<16x16xf32>
    %94 = arith.select %8, %93, %91 : vector<16x16xi1>, vector<16x16xf32>
    %cst_32 = arith.constant 1.000000e+00 : f32
    %95 = vector.broadcast %cst_32 : f32 to vector<16x16xf32>
    %96 = arith.subf %95, %3 : vector<16x16xf32>
    %97 = arith.mulf %96, %94 : vector<16x16xf32>
    %98 = arith.addf %3, %97 : vector<16x16xf32>
    %cst_33 = arith.constant 0.000000e+00 : f32
    %99 = vector.broadcast %cst_33 : f32 to vector<16x16xf32>
    %100 = arith.select %8, %3, %99 : vector<16x16xi1>, vector<16x16xf32>
    %cst_34 = arith.constant dense<0.000000e+00> : vector<16xf32>
    %101 = vector.multi_reduction <add>, %100, %cst_34 [1] : vector<16x16xf32> to vector<16xf32>
    %102 = vector.shape_cast %101 : vector<16xf32> to vector<16x1xf32>
    %cst_35 = arith.constant 1.000000e+00 : f32
    %103 = vector.broadcast %cst_35 : f32 to vector<16x1xf32>
    %104 = arith.subf %103, %102 : vector<16x1xf32>
    %105 = arith.mulf %104, %86 : vector<16x1xf32>
    %106 = arith.addf %102, %105 : vector<16x1xf32>
    %cst_36 = arith.constant 9.99999971E-10 : f32
    %107 = vector.broadcast %cst_36 : f32 to vector<16x1xf32>
    %108 = arith.addf %106, %107 : vector<16x1xf32>
    %109 = math.log %108 : vector<16x1xf32>
    %110 = arith.cmpi slt, %5, %4 : vector<16x16xi32>
    %111 = arith.extui %110 : vector<16x16xi1> to vector<16x16xi32>
    %112 = arith.sitofp %111 : vector<16x16xi32> to vector<16x16xf32>
    %cst_37 = arith.constant dense<0.000000e+00> : vector<16x1xf32>
    %113 = tpu.matmul %112, %109, %cst_37 {dimension_numbers = #tpu.dot_dimension_numbers<[1], [0], [0], [1], [0, 0, 1, 1], [], []>} : vector<16x16xf32>, vector<16x1xf32>, vector<16x1xf32> -> vector<16x1xf32>
    %114 = arith.cmpi slt, %4, %5 : vector<16x16xi32>
    %cst_38 = arith.constant 0.000000e+00 : f32
    %115 = vector.shape_cast %109 : vector<16x1xf32> to vector<16x1xf32>
    %116 = vector.broadcast %115 : vector<16x1xf32> to vector<16x16xf32>
    %117 = vector.broadcast %cst_38 : f32 to vector<16x16xf32>
    %118 = arith.select %114, %116, %117 : vector<16x16xi1>, vector<16x16xf32>
    %cst_39 = arith.constant dense<0.000000e+00> : vector<16xf32>
    %119 = vector.multi_reduction <add>, %118, %cst_39 [0] : vector<16x16xf32> to vector<16xf32>
    %120 = vector.shape_cast %119 : vector<16xf32> to vector<1x16xf32>
    %121 = vector.broadcast %120 : vector<1x16xf32> to vector<16x16xf32>
    %122 = vector.broadcast %113 : vector<16x1xf32> to vector<16x16xf32>
    %123 = arith.subf %121, %122 : vector<16x16xf32>
    %124 = arith.cmpi sge, %5, %4 : vector<16x16xi32>
    %cst_40 = arith.constant 0.000000e+00 : f32
    %125 = vector.broadcast %cst_40 : f32 to vector<16x16xf32>
    %126 = arith.subf %125, %123 : vector<16x16xf32>
    %127 = arith.select %124, %123, %126 : vector<16x16xi1>, vector<16x16xf32>
    %128 = math.exp %127 : vector<16x16xf32>
    %cst_41 = arith.constant 9.99999971E-10 : f32
    %129 = vector.broadcast %cst_41 : f32 to vector<16x16xf32>
    %130 = arith.addf %128, %129 : vector<16x16xf32>
    %131 = arith.select %12, %98, %130 : vector<16x16xi1>, vector<16x16xf32>
    %c0_42 = arith.constant 0 : index
    %c0_43 = arith.constant 0 : index
    %132 = vector.load %arg7[%c0_42, %c0_43] : memref<1x32xf32, #tpu.memory_space<vmem>>, vector<1x32xf32>
    %c0_44 = arith.constant 0 : index
    %c0_45 = arith.constant 0 : index
    %133 = vector.load %arg8[%c0_44, %c0_45] : memref<1x32xf32, #tpu.memory_space<vmem>>, vector<1x32xf32>
    %cst_46 = arith.constant dense<0.000000e+00> : vector<16xf32>
    %134 = vector.multi_reduction <add>, %1, %cst_46 [1] : vector<16x32xf32> to vector<16xf32>
    %135 = vector.shape_cast %134 : vector<16xf32> to vector<16x1xf32>
    %cst_47 = arith.constant 3.200000e+01 : f32
    %136 = vector.broadcast %cst_47 : f32 to vector<16x1xf32>
    %137 = arith.divf %135, %136 : vector<16x1xf32>
    %138 = vector.broadcast %137 : vector<16x1xf32> to vector<16x32xf32>
    %139 = arith.subf %1, %138 : vector<16x32xf32>
    %140 = vector.broadcast %137 : vector<16x1xf32> to vector<16x32xf32>
    %141 = arith.subf %1, %140 : vector<16x32xf32>
    %142 = arith.mulf %139, %141 : vector<16x32xf32>
    %cst_48 = arith.constant dense<0.000000e+00> : vector<16xf32>
    %143 = vector.multi_reduction <add>, %142, %cst_48 [1] : vector<16x32xf32> to vector<16xf32>
    %144 = vector.shape_cast %143 : vector<16xf32> to vector<16x1xf32>
    %cst_49 = arith.constant 3.200000e+01 : f32
    %145 = vector.broadcast %cst_49 : f32 to vector<16x1xf32>
    %146 = arith.divf %144, %145 : vector<16x1xf32>
    %147 = vector.broadcast %137 : vector<16x1xf32> to vector<16x32xf32>
    %148 = arith.subf %1, %147 : vector<16x32xf32>
    %cst_50 = arith.constant 9.99999974E-6 : f32
    %149 = vector.broadcast %cst_50 : f32 to vector<16x1xf32>
    %150 = arith.addf %146, %149 : vector<16x1xf32>
    %151 = math.rsqrt %150 : vector<16x1xf32>
    %152 = vector.broadcast %151 : vector<16x1xf32> to vector<16x32xf32>
    %153 = arith.mulf %148, %152 : vector<16x32xf32>
    %154 = vector.broadcast %132 : vector<1x32xf32> to vector<16x32xf32>
    %155 = arith.mulf %153, %154 : vector<16x32xf32>
    %156 = vector.broadcast %133 : vector<1x32xf32> to vector<16x32xf32>
    %157 = arith.addf %155, %156 : vector<16x32xf32>
    %158 = arith.truncf %157 : vector<16x32xf32> to vector<16x32xbf16>
    %c0_51 = arith.constant 0 : index
    %c0_52 = arith.constant 0 : index
    %159 = vector.load %arg9[%c0_51, %c0_52] : memref<32x96xbf16, #tpu.memory_space<vmem>>, vector<32x96xbf16>
    %cst_53 = arith.constant dense<0.000000e+00> : vector<16x96xf32>
    %160 = tpu.matmul %158, %159, %cst_53 {dimension_numbers = #tpu.dot_dimension_numbers<[1], [0], [0], [1], [0, 0, 1, 1], [], []>} : vector<16x32xbf16>, vector<32x96xbf16>, vector<16x96xf32> -> vector<16x96xf32>
    %c0_54 = arith.constant 0 : index
    %c0_55 = arith.constant 0 : index
    %161 = vector.load %arg10[%c0_54, %c0_55] : memref<1x96xf32, #tpu.memory_space<vmem>>, vector<1x96xf32>
    %162 = vector.broadcast %161 : vector<1x96xf32> to vector<16x96xf32>
    %163 = arith.addf %160, %162 : vector<16x96xf32>
    %164 = vector.extract_strided_slice %163 {offsets = [0, 0], sizes = [16, 8], strides = [1, 1]} : vector<16x96xf32> to vector<16x8xf32>
    %165 = vector.extract_strided_slice %163 {offsets = [0, 8], sizes = [16, 8], strides = [1, 1]} : vector<16x96xf32> to vector<16x8xf32>
    %166 = vector.extract_strided_slice %163 {offsets = [0, 16], sizes = [16, 8], strides = [1, 1]} : vector<16x96xf32> to vector<16x8xf32>
    %167 = vector.extract_strided_slice %163 {offsets = [0, 24], sizes = [16, 8], strides = [1, 1]} : vector<16x96xf32> to vector<16x8xf32>
    %168 = vector.shape_cast %164 : vector<16x8xf32> to vector<1x16x8xf32>
    %169 = vector.shape_cast %165 : vector<16x8xf32> to vector<1x16x8xf32>
    %170 = vector.shape_cast %166 : vector<16x8xf32> to vector<1x16x8xf32>
    %171 = vector.shape_cast %167 : vector<16x8xf32> to vector<1x16x8xf32>
    %172 = tpu.concatenate %168, %169, %170, %171 in 0 : vector<1x16x8xf32>, vector<1x16x8xf32>, vector<1x16x8xf32>, vector<1x16x8xf32> -> vector<4x16x8xf32>
    %cst_56 = arith.constant 0.353553385 : f32
    %173 = vector.broadcast %cst_56 : f32 to vector<4x16x8xf32>
    %174 = arith.mulf %172, %173 : vector<4x16x8xf32>
    %175 = vector.extract_strided_slice %163 {offsets = [0, 32], sizes = [16, 8], strides = [1, 1]} : vector<16x96xf32> to vector<16x8xf32>
    %176 = vector.extract_strided_slice %163 {offsets = [0, 40], sizes = [16, 8], strides = [1, 1]} : vector<16x96xf32> to vector<16x8xf32>
    %177 = vector.extract_strided_slice %163 {offsets = [0, 48], sizes = [16, 8], strides = [1, 1]} : vector<16x96xf32> to vector<16x8xf32>
    %178 = vector.extract_strided_slice %163 {offsets = [0, 56], sizes = [16, 8], strides = [1, 1]} : vector<16x96xf32> to vector<16x8xf32>
    %179 = vector.shape_cast %175 : vector<16x8xf32> to vector<1x16x8xf32>
    %180 = vector.shape_cast %176 : vector<16x8xf32> to vector<1x16x8xf32>
    %181 = vector.shape_cast %177 : vector<16x8xf32> to vector<1x16x8xf32>
    %182 = vector.shape_cast %178 : vector<16x8xf32> to vector<1x16x8xf32>
    %183 = tpu.concatenate %179, %180, %181, %182 in 0 : vector<1x16x8xf32>, vector<1x16x8xf32>, vector<1x16x8xf32>, vector<1x16x8xf32> -> vector<4x16x8xf32>
    %184 = vector.extract_strided_slice %163 {offsets = [0, 64], sizes = [16, 8], strides = [1, 1]} : vector<16x96xf32> to vector<16x8xf32>
    %185 = vector.extract_strided_slice %163 {offsets = [0, 72], sizes = [16, 8], strides = [1, 1]} : vector<16x96xf32> to vector<16x8xf32>
    %186 = vector.extract_strided_slice %163 {offsets = [0, 80], sizes = [16, 8], strides = [1, 1]} : vector<16x96xf32> to vector<16x8xf32>
    %187 = vector.extract_strided_slice %163 {offsets = [0, 88], sizes = [16, 8], strides = [1, 1]} : vector<16x96xf32> to vector<16x8xf32>
    %188 = vector.shape_cast %184 : vector<16x8xf32> to vector<1x16x8xf32>
    %189 = vector.shape_cast %185 : vector<16x8xf32> to vector<1x16x8xf32>
    %190 = vector.shape_cast %186 : vector<16x8xf32> to vector<1x16x8xf32>
    %191 = vector.shape_cast %187 : vector<16x8xf32> to vector<1x16x8xf32>
    %192 = tpu.concatenate %188, %189, %190, %191 in 0 : vector<1x16x8xf32>, vector<1x16x8xf32>, vector<1x16x8xf32>, vector<1x16x8xf32> -> vector<4x16x8xf32>
    %193 = arith.truncf %174 : vector<4x16x8xf32> to vector<4x16x8xbf16>
    %194 = arith.truncf %183 : vector<4x16x8xf32> to vector<4x16x8xbf16>
    "tpu.trace_start"() <{level = 10 : i32, message = "hnd,hmd->hnm"}> : () -> ()
    %cst_57 = arith.constant dense<0.000000e+00> : vector<4x16x16xf32>
    %195 = tpu.matmul %193, %194, %cst_57 {dimension_numbers = #tpu.dot_dimension_numbers<[2], [2], [1], [1], [0, 0, 0, 1, 1, 1], [0], [0]>} : vector<4x16x8xbf16>, vector<4x16x8xbf16>, vector<4x16x16xf32> -> vector<4x16x16xf32>
    "tpu.trace_stop"() : () -> ()
    %cst_58 = arith.constant dense<0xFF800000> : vector<4x16xf32>
    %196 = vector.multi_reduction <maximumf>, %195, %cst_58 [2] : vector<4x16x16xf32> to vector<4x16xf32>
    %197 = vector.shape_cast %196 : vector<4x16xf32> to vector<4x16x1xf32>
    %198 = vector.broadcast %197 : vector<4x16x1xf32> to vector<4x16x16xf32>
    %199 = arith.subf %195, %198 : vector<4x16x16xf32>
    %200 = math.exp %199 : vector<4x16x16xf32>
    %cst_59 = arith.constant dense<0.000000e+00> : vector<4x16xf32>
    %201 = vector.multi_reduction <add>, %200, %cst_59 [2] : vector<4x16x16xf32> to vector<4x16xf32>
    %202 = vector.shape_cast %201 : vector<4x16xf32> to vector<4x16x1xf32>
    %203 = tpu.reciprocal %202 {approx = true} : vector<4x16x1xf32> -> vector<4x16x1xf32>
    %204 = vector.broadcast %203 : vector<4x16x1xf32> to vector<4x16x16xf32>
    %205 = arith.mulf %200, %204 : vector<4x16x16xf32>
    %206 = vector.shape_cast %131 : vector<16x16xf32> to vector<1x16x16xf32>
    %207 = vector.broadcast %206 : vector<1x16x16xf32> to vector<4x16x16xf32>
    %208 = arith.mulf %205, %207 : vector<4x16x16xf32>
    %c0_60 = arith.constant 0 : index
    %c0_61 = arith.constant 0 : index
    %c0_62 = arith.constant 0 : index
    %c0_63 = arith.constant 0 : index
    %209 = vector.load %arg22[%c0_60, %c0_61, %c0_62, %c0_63] : memref<1x4x16x16xf32, #tpu.memory_space<vmem>>, vector<1x4x16x16xf32>
    %210 = vector.shape_cast %209 : vector<1x4x16x16xf32> to vector<4x16x16xf32>
    %211 = vector.shape_cast %208 : vector<4x16x16xf32> to vector<1x4x16x16xf32>
    tpu.vector_store %arg22[%c0_60, %c0_61, %c0_62, %c0_63], %211 {strides = array<i32>} : memref<1x4x16x16xf32, #tpu.memory_space<vmem>>, vector<1x4x16x16xf32>,
    %212 = arith.truncf %208 : vector<4x16x16xf32> to vector<4x16x16xbf16>
    %213 = arith.truncf %192 : vector<4x16x8xf32> to vector<4x16x8xbf16>
    "tpu.trace_start"() <{level = 10 : i32, message = "hnm,hmd->hnd"}> : () -> ()
    %cst_64 = arith.constant dense<0.000000e+00> : vector<4x16x8xf32>
    %214 = tpu.matmul %212, %213, %cst_64 {dimension_numbers = #tpu.dot_dimension_numbers<[2], [1], [1], [2], [0, 0, 0, 1, 1, 2], [0], [0]>} : vector<4x16x16xbf16>, vector<4x16x8xbf16>, vector<4x16x8xf32> -> vector<4x16x8xf32>
    "tpu.trace_stop"() : () -> ()
    %215 = vector.extract_strided_slice %214 {offsets = [0, 0, 0], sizes = [1, 16, 8], strides = [1, 1, 1]} : vector<4x16x8xf32> to vector<1x16x8xf32>
    %216 = vector.shape_cast %215 : vector<1x16x8xf32> to vector<16x8xf32>
    %217 = vector.extract_strided_slice %214 {offsets = [1, 0, 0], sizes = [1, 16, 8], strides = [1, 1, 1]} : vector<4x16x8xf32> to vector<1x16x8xf32>
    %218 = vector.shape_cast %217 : vector<1x16x8xf32> to vector<16x8xf32>
    %219 = vector.extract_strided_slice %214 {offsets = [2, 0, 0], sizes = [1, 16, 8], strides = [1, 1, 1]} : vector<4x16x8xf32> to vector<1x16x8xf32>
    %220 = vector.shape_cast %219 : vector<1x16x8xf32> to vector<16x8xf32>
    %221 = vector.extract_strided_slice %214 {offsets = [3, 0, 0], sizes = [1, 16, 8], strides = [1, 1, 1]} : vector<4x16x8xf32> to vector<1x16x8xf32>
    %222 = vector.shape_cast %221 : vector<1x16x8xf32> to vector<16x8xf32>
    %223 = tpu.concatenate %216, %218, %220, %222 in 1 : vector<16x8xf32>, vector<16x8xf32>, vector<16x8xf32>, vector<16x8xf32> -> vector<16x32xf32>
    %224 = arith.truncf %223 : vector<16x32xf32> to vector<16x32xbf16>
    %c0_65 = arith.constant 0 : index
    %c0_66 = arith.constant 0 : index
    %225 = vector.load %arg11[%c0_65, %c0_66] : memref<32x32xbf16, #tpu.memory_space<vmem>>, vector<32x32xbf16>
    %cst_67 = arith.constant dense<0.000000e+00> : vector<16x32xf32>
    %226 = tpu.matmul %224, %225, %cst_67 {dimension_numbers = #tpu.dot_dimension_numbers<[1], [0], [0], [1], [0, 0, 1, 1], [], []>} : vector<16x32xbf16>, vector<32x32xbf16>, vector<16x32xf32> -> vector<16x32xf32>
    %c0_68 = arith.constant 0 : index
    %c0_69 = arith.constant 0 : index
    %227 = vector.load %arg12[%c0_68, %c0_69] : memref<1x32xf32, #tpu.memory_space<vmem>>, vector<1x32xf32>
    %228 = vector.broadcast %227 : vector<1x32xf32> to vector<16x32xf32>
    %229 = arith.addf %226, %228 : vector<16x32xf32>
    %230 = arith.addf %1, %229 : vector<16x32xf32>
    %c0_70 = arith.constant 0 : index
    %c0_71 = arith.constant 0 : index
    %231 = vector.load %arg13[%c0_70, %c0_71] : memref<1x32xf32, #tpu.memory_space<vmem>>, vector<1x32xf32>
    %c0_72 = arith.constant 0 : index
    %c0_73 = arith.constant 0 : index
    %232 = vector.load %arg14[%c0_72, %c0_73] : memref<1x32xf32, #tpu.memory_space<vmem>>, vector<1x32xf32>
    %cst_74 = arith.constant dense<0.000000e+00> : vector<16xf32>
    %233 = vector.multi_reduction <add>, %230, %cst_74 [1] : vector<16x32xf32> to vector<16xf32>
    %234 = vector.shape_cast %233 : vector<16xf32> to vector<16x1xf32>
    %cst_75 = arith.constant 3.200000e+01 : f32
    %235 = vector.broadcast %cst_75 : f32 to vector<16x1xf32>
    %236 = arith.divf %234, %235 : vector<16x1xf32>
    %237 = vector.broadcast %236 : vector<16x1xf32> to vector<16x32xf32>
    %238 = arith.subf %230, %237 : vector<16x32xf32>
    %239 = vector.broadcast %236 : vector<16x1xf32> to vector<16x32xf32>
    %240 = arith.subf %230, %239 : vector<16x32xf32>
    %241 = arith.mulf %238, %240 : vector<16x32xf32>
    %cst_76 = arith.constant dense<0.000000e+00> : vector<16xf32>
    %242 = vector.multi_reduction <add>, %241, %cst_76 [1] : vector<16x32xf32> to vector<16xf32>
    %243 = vector.shape_cast %242 : vector<16xf32> to vector<16x1xf32>
    %cst_77 = arith.constant 3.200000e+01 : f32
    %244 = vector.broadcast %cst_77 : f32 to vector<16x1xf32>
    %245 = arith.divf %243, %244 : vector<16x1xf32>
    %246 = vector.broadcast %236 : vector<16x1xf32> to vector<16x32xf32>
    %247 = arith.subf %230, %246 : vector<16x32xf32>
    %cst_78 = arith.constant 9.99999974E-6 : f32
    %248 = vector.broadcast %cst_78 : f32 to vector<16x1xf32>
    %249 = arith.addf %245, %248 : vector<16x1xf32>
    %250 = math.rsqrt %249 : vector<16x1xf32>
    %251 = vector.broadcast %250 : vector<16x1xf32> to vector<16x32xf32>
    %252 = arith.mulf %247, %251 : vector<16x32xf32>
    %253 = vector.broadcast %231 : vector<1x32xf32> to vector<16x32xf32>
    %254 = arith.mulf %252, %253 : vector<16x32xf32>
    %255 = vector.broadcast %232 : vector<1x32xf32> to vector<16x32xf32>
    %256 = arith.addf %254, %255 : vector<16x32xf32>
    %257 = arith.truncf %256 : vector<16x32xf32> to vector<16x32xbf16>
    %c0_79 = arith.constant 0 : index
    %c0_80 = arith.constant 0 : index
    %258 = vector.load %arg15[%c0_79, %c0_80] : memref<32x64xbf16, #tpu.memory_space<vmem>>, vector<32x64xbf16>
    %cst_81 = arith.constant dense<0.000000e+00> : vector<16x64xf32>
    %259 = tpu.matmul %257, %258, %cst_81 {dimension_numbers = #tpu.dot_dimension_numbers<[1], [0], [0], [1], [0, 0, 1, 1], [], []>} : vector<16x32xbf16>, vector<32x64xbf16>, vector<16x64xf32> -> vector<16x64xf32>
    %c0_82 = arith.constant 0 : index
    %c0_83 = arith.constant 0 : index
    %260 = vector.load %arg16[%c0_82, %c0_83] : memref<1x64xf32, #tpu.memory_space<vmem>>, vector<1x64xf32>
    %261 = vector.broadcast %260 : vector<1x64xf32> to vector<16x64xf32>
    %262 = arith.addf %259, %261 : vector<16x64xf32>
    %cst_84 = arith.constant 0.000000e+00 : f32
    %263 = vector.broadcast %cst_84 : f32 to vector<16x64xf32>
    %264 = arith.maximumf %262, %263 : vector<16x64xf32>
    %265 = arith.truncf %264 : vector<16x64xf32> to vector<16x64xbf16>
    %c0_85 = arith.constant 0 : index
    %c0_86 = arith.constant 0 : index
    %266 = vector.load %arg17[%c0_85, %c0_86] : memref<64x32xbf16, #tpu.memory_space<vmem>>, vector<64x32xbf16>
    %cst_87 = arith.constant dense<0.000000e+00> : vector<16x32xf32>
    %267 = tpu.matmul %265, %266, %cst_87 {dimension_numbers = #tpu.dot_dimension_numbers<[1], [0], [0], [1], [0, 0, 1, 1], [], []>} : vector<16x64xbf16>, vector<64x32xbf16>, vector<16x32xf32> -> vector<16x32xf32>
    %c0_88 = arith.constant 0 : index
    %c0_89 = arith.constant 0 : index
    %268 = vector.load %arg18[%c0_88, %c0_89] : memref<1x32xf32, #tpu.memory_space<vmem>>, vector<1x32xf32>
    %269 = vector.broadcast %268 : vector<1x32xf32> to vector<16x32xf32>
    %270 = arith.addf %267, %269 : vector<16x32xf32>
    %271 = arith.addf %230, %270 : vector<16x32xf32>
    %c0_90 = arith.constant 0 : index
    %c0_91 = arith.constant 0 : index
    %c0_92 = arith.constant 0 : index
    %272 = vector.load %arg19[%c0_90, %c0_91, %c0_92] : memref<1x16x32xf32, #tpu.memory_space<vmem>>, vector<1x16x32xf32>
    %273 = vector.shape_cast %272 : vector<1x16x32xf32> to vector<16x32xf32>
    %274 = vector.shape_cast %271 : vector<16x32xf32> to vector<1x16x32xf32>
    tpu.vector_store %arg19[%c0_90, %c0_91, %c0_92], %274 {strides = array<i32>} : memref<1x16x32xf32, #tpu.memory_space<vmem>>, vector<1x16x32xf32>,
    %c0_93 = arith.constant 0 : index
    %c0_94 = arith.constant 0 : index
    %c0_95 = arith.constant 0 : index
    %275 = vector.load %arg20[%c0_93, %c0_94, %c0_95] : memref<1x16x16xf32, #tpu.memory_space<vmem>>, vector<1x16x16xf32>
    %276 = vector.shape_cast %275 : vector<1x16x16xf32> to vector<16x16xf32>
    %277 = vector.shape_cast %131 : vector<16x16xf32> to vector<1x16x16xf32>
    tpu.vector_store %arg20[%c0_93, %c0_94, %c0_95], %277 {strides = array<i32>} : memref<1x16x16xf32, #tpu.memory_space<vmem>>, vector<1x16x16xf32>,
    %c0_96 = arith.constant 0 : index
    %c0_97 = arith.constant 0 : index
    %c0_98 = arith.constant 0 : index
    %278 = vector.load %arg21[%c0_96, %c0_97, %c0_98] : memref<1x16x16xf32, #tpu.memory_space<vmem>>, vector<1x16x16xf32>
    %279 = vector.shape_cast %278 : vector<1x16x16xf32> to vector<16x16xf32>
    %280 = vector.shape_cast %98 : vector<16x16xf32> to vector<1x16x16xf32>
    tpu.vector_store %arg21[%c0_96, %c0_97, %c0_98], %280 {strides = array<i32>} : memref<1x16x16xf32, #tpu.memory_space<vmem>>, vector<1x16x16xf32>,
    return
  }
  func.func @transform_0(%arg0: i32) -> (i32, i32, i32) {
    %c0_i32 = arith.constant 0 : i32
    %c0_i32_0 = arith.constant 0 : i32
    %c0_i32_1 = arith.constant 0 : i32
    return %arg0, %c0_i32, %c0_i32_0 : i32, i32, i32
  }
  func.func @transform_1(%arg0: i32) -> (i32, i32, i32) {
    %c0_i32 = arith.constant 0 : i32
    %c0_i32_0 = arith.constant 0 : i32
    %c0_i32_1 = arith.constant 0 : i32
    return %arg0, %c0_i32, %c0_i32_0 : i32, i32, i32
  }
  func.func @transform_2(%arg0: i32) -> (i32, i32) {
    %c0_i32 = arith.constant 0 : i32
    %c0_i32_0 = arith.constant 0 : i32
    %c0_i32_1 = arith.constant 0 : i32
    return %c0_i32, %c0_i32_0 : i32, i32
  }
  func.func @transform_3(%arg0: i32) -> (i32, i32) {
    %c0_i32 = arith.constant 0 : i32
    %c0_i32_0 = arith.constant 0 : i32
    %c0_i32_1 = arith.constant 0 : i32
    return %c0_i32, %c0_i32_0 : i32, i32
  }
  func.func @transform_4(%arg0: i32) -> (i32, i32) {
    %c0_i32 = arith.constant 0 : i32
    %c0_i32_0 = arith.constant 0 : i32
    %c0_i32_1 = arith.constant 0 : i32
    return %c0_i32, %c0_i32_0 : i32, i32
  }
  func.func @transform_5(%arg0: i32) -> (i32, i32) {
    %c0_i32 = arith.constant 0 : i32
    %c0_i32_0 = arith.constant 0 : i32
    %c0_i32_1 = arith.constant 0 : i32
    return %c0_i32, %c0_i32_0 : i32, i32
  }
  func.func @transform_6(%arg0: i32) -> (i32, i32) {
    %c0_i32 = arith.constant 0 : i32
    %c0_i32_0 = arith.constant 0 : i32
    %c0_i32_1 = arith.constant 0 : i32
    return %c0_i32, %c0_i32_0 : i32, i32
  }
  func.func @transform_7(%arg0: i32) -> (i32, i32) {
    %c0_i32 = arith.constant 0 : i32
    %c0_i32_0 = arith.constant 0 : i32
    %c0_i32_1 = arith.constant 0 : i32
    return %c0_i32, %c0_i32_0 : i32, i32
  }
  func.func @transform_8(%arg0: i32) -> (i32, i32) {
    %c0_i32 = arith.constant 0 : i32
    %c0_i32_0 = arith.constant 0 : i32
    %c0_i32_1 = arith.constant 0 : i32
    return %c0_i32, %c0_i32_0 : i32, i32
  }
  func.func @transform_9(%arg0: i32) -> (i32, i32) {
    %c0_i32 = arith.constant 0 : i32
    %c0_i32_0 = arith.constant 0 : i32
    %c0_i32_1 = arith.constant 0 : i32
    return %c0_i32, %c0_i32_0 : i32, i32
  }
  func.func @transform_10(%arg0: i32) -> (i32, i32) {
    %c0_i32 = arith.constant 0 : i32
    %c0_i32_0 = arith.constant 0 : i32
    %c0_i32_1 = arith.constant 0 : i32
    return %c0_i32, %c0_i32_0 : i32, i32
  }
  func.func @transform_11(%arg0: i32) -> (i32, i32) {
    %c0_i32 = arith.constant 0 : i32
    %c0_i32_0 = arith.constant 0 : i32
    %c0_i32_1 = arith.constant 0 : i32
    return %c0_i32, %c0_i32_0 : i32, i32
  }
  func.func @transform_12(%arg0: i32) -> (i32, i32) {
    %c0_i32 = arith.constant 0 : i32
    %c0_i32_0 = arith.constant 0 : i32
    %c0_i32_1 = arith.constant 0 : i32
    return %c0_i32, %c0_i32_0 : i32, i32
  }
  func.func @transform_13(%arg0: i32) -> (i32, i32) {
    %c0_i32 = arith.constant 0 : i32
    %c0_i32_0 = arith.constant 0 : i32
    %c0_i32_1 = arith.constant 0 : i32
    return %c0_i32, %c0_i32_0 : i32, i32
  }
  func.func @transform_14(%arg0: i32) -> (i32, i32) {
    %c0_i32 = arith.constant 0 : i32
    %c0_i32_0 = arith.constant 0 : i32
    %c0_i32_1 = arith.constant 0 : i32
    return %c0_i32, %c0_i32_0 : i32, i32
  }
  func.func @transform_15(%arg0: i32) -> (i32, i32) {
    %c0_i32 = arith.constant 0 : i32
    %c0_i32_0 = arith.constant 0 : i32
    %c0_i32_1 = arith.constant 0 : i32
    return %c0_i32, %c0_i32_0 : i32, i32
  }
  func.func @transform_16(%arg0: i32) -> (i32, i32) {
    %c0_i32 = arith.constant 0 : i32
    %c0_i32_0 = arith.constant 0 : i32
    %c0_i32_1 = arith.constant 0 : i32
    return %c0_i32, %c0_i32_0 : i32, i32
  }
  func.func @transform_17(%arg0: i32) -> (i32, i32) {
    %c0_i32 = arith.constant 0 : i32
    %c0_i32_0 = arith.constant 0 : i32
    %c0_i32_1 = arith.constant 0 : i32
    return %c0_i32, %c0_i32_0 : i32, i32
  }
  func.func @transform_18(%arg0: i32) -> (i32, i32, i32) {
    %c0_i32 = arith.constant 0 : i32
    %c0_i32_0 = arith.constant 0 : i32
    %c0_i32_1 = arith.constant 0 : i32
    return %arg0, %c0_i32, %c0_i32_0 : i32, i32, i32
  }
  func.func @transform_19(%arg0: i32) -> (i32, i32, i32) {
    %c0_i32 = arith.constant 0 : i32
    %c0_i32_0 = arith.constant 0 : i32
    %c0_i32_1 = arith.constant 0 : i32
    return %arg0, %c0_i32, %c0_i32_0 : i32, i32, i32
  }
  func.func @transform_20(%arg0: i32) -> (i32, i32, i32) {
    %c0_i32 = arith.constant 0 : i32
    %c0_i32_0 = arith.constant 0 : i32
    %c0_i32_1 = arith.constant 0 : i32
    return %arg0, %c0_i32, %c0_i32_0 : i32, i32, i32
  }
  func.func @transform_21(%arg0: i32) -> (i32, i32, i32, i32) {
    %c0_i32 = arith.constant 0 : i32
    %c0_i32_0 = arith.constant 0 : i32
    %c0_i32_1 = arith.constant 0 : i32
    %c0_i32_2 = arith.constant 0 : i32
    return %arg0, %c0_i32, %c0_i32_0, %c0_i32_1 : i32, i32, i32, i32
  }
}

module attributes {stable_mosaic.version = 11 : i64} {
  func.func @encoder_layer_kernel(%arg0: i32, %arg1: memref<1x16x32xf32, #tpu.memory_space<vmem>>, %arg2: memref<1x16x16xf32, #tpu.memory_space<vmem>>, %arg3: memref<1x32xf32, #tpu.memory_space<vmem>>, %arg4: memref<1x32xf32, #tpu.memory_space<vmem>>, %arg5: memref<32x64xbf16, #tpu.memory_space<vmem>>, %arg6: memref<1x64xf32, #tpu.memory_space<vmem>>, %arg7: memref<1x32xf32, #tpu.memory_space<vmem>>, %arg8: memref<1x32xf32, #tpu.memory_space<vmem>>, %arg9: memref<32x96xbf16, #tpu.memory_space<vmem>>, %arg10: memref<1x96xf32, #tpu.memory_space<vmem>>, %arg11: memref<32x32xbf16, #tpu.memory_space<vmem>>, %arg12: memref<1x32xf32, #tpu.memory_space<vmem>>, %arg13: memref<1x32xf32, #tpu.memory_space<vmem>>, %arg14: memref<1x32xf32, #tpu.memory_space<vmem>>, %arg15: memref<32x64xbf16, #tpu.memory_space<vmem>>, %arg16: memref<1x64xf32, #tpu.memory_space<vmem>>, %arg17: memref<64x32xbf16, #tpu.memory_space<vmem>>, %arg18: memref<1x32xf32, #tpu.memory_space<vmem>>, %arg19: memref<1x16x32xf32, #tpu.memory_space<vmem>>, %arg20: memref<1x16x16xf32, #tpu.memory_space<vmem>>, %arg21: memref<1x16x16xf32, #tpu.memory_space<vmem>>, %arg22: memref<1x4x16x16xf32, #tpu.memory_space<vmem>>) attributes {dimension_semantics = [#tpu.dimension_semantics<parallel>], iteration_bounds = array<i64: 2>, scalar_prefetch = 0 : i64, scratch_operands = 0 : i64, tpu.core_type = #tpu.core_type<tc>, window_params = [{transform_indices = @transform_0, window_bounds = array<i64: 1, 16, 32>}, {transform_indices = @transform_1, window_bounds = array<i64: 1, 16, 16>}, {pipeline_mode = #tpu.pipeline_mode<synchronous>, transform_indices = @transform_2, window_bounds = array<i64: 1, 32>}, {pipeline_mode = #tpu.pipeline_mode<synchronous>, transform_indices = @transform_3, window_bounds = array<i64: 1, 32>}, {pipeline_mode = #tpu.pipeline_mode<synchronous>, transform_indices = @transform_4, window_bounds = array<i64: 32, 64>}, {pipeline_mode = #tpu.pipeline_mode<synchronous>, transform_indices = @transform_5, window_bounds = array<i64: 1, 64>}, {pipeline_mode = #tpu.pipeline_mode<synchronous>, transform_indices = @transform_6, window_bounds = array<i64: 1, 32>}, {pipeline_mode = #tpu.pipeline_mode<synchronous>, transform_indices = @transform_7, window_bounds = array<i64: 1, 32>}, {pipeline_mode = #tpu.pipeline_mode<synchronous>, transform_indices = @transform_8, window_bounds = array<i64: 32, 96>}, {pipeline_mode = #tpu.pipeline_mode<synchronous>, transform_indices = @transform_9, window_bounds = array<i64: 1, 96>}, {pipeline_mode = #tpu.pipeline_mode<synchronous>, transform_indices = @transform_10, window_bounds = array<i64: 32, 32>}, {pipeline_mode = #tpu.pipeline_mode<synchronous>, transform_indices = @transform_11, window_bounds = array<i64: 1, 32>}, {pipeline_mode = #tpu.pipeline_mode<synchronous>, transform_indices = @transform_12, window_bounds = array<i64: 1, 32>}, {pipeline_mode = #tpu.pipeline_mode<synchronous>, transform_indices = @transform_13, window_bounds = array<i64: 1, 32>}, {pipeline_mode = #tpu.pipeline_mode<synchronous>, transform_indices = @transform_14, window_bounds = array<i64: 32, 64>}, {pipeline_mode = #tpu.pipeline_mode<synchronous>, transform_indices = @transform_15, window_bounds = array<i64: 1, 64>}, {pipeline_mode = #tpu.pipeline_mode<synchronous>, transform_indices = @transform_16, window_bounds = array<i64: 64, 32>}, {pipeline_mode = #tpu.pipeline_mode<synchronous>, transform_indices = @transform_17, window_bounds = array<i64: 1, 32>}, {transform_indices = @transform_18, window_bounds = array<i64: 1, 16, 32>}, {transform_indices = @transform_19, window_bounds = array<i64: 1, 16, 16>}, {transform_indices = @transform_20, window_bounds = array<i64: 1, 16, 16>}, {transform_indices = @transform_21, window_bounds = array<i64: 1, 4, 16, 16>}]} {
    %c0 = arith.constant 0 : index
    %c0_0 = arith.constant 0 : index
    %c0_1 = arith.constant 0 : index
    %0 = vector.load %arg1[%c0, %c0_0, %c0_1] : memref<1x16x32xf32, #tpu.memory_space<vmem>>, vector<1x16x32xf32>
    %1 = vector.shape_cast %0 : vector<1x16x32xf32> to vector<16x32xf32>
    %c0_2 = arith.constant 0 : index
    %c0_3 = arith.constant 0 : index
    %c0_4 = arith.constant 0 : index
    %2 = vector.load %arg2[%c0_2, %c0_3, %c0_4] : memref<1x16x16xf32, #tpu.memory_space<vmem>>, vector<1x16x16xf32>
    %3 = vector.shape_cast %2 : vector<1x16x16xf32> to vector<16x16xf32>
    %4 = tpu.iota {dimensions = array<i32: 0>} : vector<16x16xi32>
    %5 = tpu.iota {dimensions = array<i32: 1>} : vector<16x16xi32>
    %c1_i32 = arith.constant 1 : i32
    %6 = vector.broadcast %c1_i32 : i32 to vector<16x16xi32>
    %7 = arith.addi %4, %6 : vector<16x16xi32>
    %8 = arith.cmpi eq, %5, %7 : vector<16x16xi32>
    %c1_i32_5 = arith.constant 1 : i32
    %9 = vector.broadcast %c1_i32_5 : i32 to vector<16x16xi32>
    %10 = arith.subi %4, %9 : vector<16x16xi32>
    %11 = arith.cmpi eq, %5, %10 : vector<16x16xi32>
    %12 = arith.cmpi eq, %5, %4 : vector<16x16xi32>
    %c0_6 = arith.constant 0 : index
    %c0_7 = arith.constant 0 : index
    %13 = vector.load %arg3[%c0_6, %c0_7] : memref<1x32xf32, #tpu.memory_space<vmem>>, vector<1x32xf32>
    %c0_8 = arith.constant 0 : index
    %c0_9 = arith.constant 0 : index
    %14 = vector.load %arg4[%c0_8, %c0_9] : memref<1x32xf32, #tpu.memory_space<vmem>>, vector<1x32xf32>
    %cst = arith.constant dense<0.000000e+00> : vector<16xf32>
    %15 = vector.multi_reduction <add>, %1, %cst [1] : vector<16x32xf32> to vector<16xf32>
    %16 = vector.shape_cast %15 : vector<16xf32> to vector<16x1xf32>
    %cst_10 = arith.constant 3.200000e+01 : f32
    %17 = vector.broadcast %cst_10 : f32 to vector<16x1xf32>
    %18 = arith.divf %16, %17 : vector<16x1xf32>
    %19 = vector.broadcast %18 : vector<16x1xf32> to vector<16x32xf32>
    %20 = arith.subf %1, %19 : vector<16x32xf32>
    %21 = vector.broadcast %18 : vector<16x1xf32> to vector<16x32xf32>
    %22 = arith.subf %1, %21 : vector<16x32xf32>
    %23 = arith.mulf %20, %22 : vector<16x32xf32>
    %cst_11 = arith.constant dense<0.000000e+00> : vector<16xf32>
    %24 = vector.multi_reduction <add>, %23, %cst_11 [1] : vector<16x32xf32> to vector<16xf32>
    %25 = vector.shape_cast %24 : vector<16xf32> to vector<16x1xf32>
    %cst_12 = arith.constant 3.200000e+01 : f32
    %26 = vector.broadcast %cst_12 : f32 to vector<16x1xf32>
    %27 = arith.divf %25, %26 : vector<16x1xf32>
    %28 = vector.broadcast %18 : vector<16x1xf32> to vector<16x32xf32>
    %29 = arith.subf %1, %28 : vector<16x32xf32>
    %cst_13 = arith.constant 9.99999974E-6 : f32
    %30 = vector.broadcast %cst_13 : f32 to vector<16x1xf32>
    %31 = arith.addf %27, %30 : vector<16x1xf32>
    %32 = math.rsqrt %31 : vector<16x1xf32>
    %33 = vector.broadcast %32 : vector<16x1xf32> to vector<16x32xf32>
    %34 = arith.mulf %29, %33 : vector<16x32xf32>
    %35 = vector.broadcast %13 : vector<1x32xf32> to vector<16x32xf32>
    %36 = arith.mulf %34, %35 : vector<16x32xf32>
    %37 = vector.broadcast %14 : vector<1x32xf32> to vector<16x32xf32>
    %38 = arith.addf %36, %37 : vector<16x32xf32>
    %39 = arith.truncf %38 : vector<16x32xf32> to vector<16x32xbf16>
    %c0_14 = arith.constant 0 : index
    %c0_15 = arith.constant 0 : index
    %40 = vector.load %arg5[%c0_14, %c0_15] : memref<32x64xbf16, #tpu.memory_space<vmem>>, vector<32x64xbf16>
    %cst_16 = arith.constant dense<0.000000e+00> : vector<16x64xf32>
    %41 = tpu.matmul %39, %40, %cst_16 {dimension_numbers = #tpu.dot_dimension_numbers<[1], [0], [0], [1], [0, 0, 1, 1], [], []>} : vector<16x32xbf16>, vector<32x64xbf16>, vector<16x64xf32> -> vector<16x64xf32>
    %c0_17 = arith.constant 0 : index
    %c0_18 = arith.constant 0 : index
    %42 = vector.load %arg6[%c0_17, %c0_18] : memref<1x64xf32, #tpu.memory_space<vmem>>, vector<1x64xf32>
    %43 = vector.broadcast %42 : vector<1x64xf32> to vector<16x64xf32>
    %44 = arith.addf %41, %43 : vector<16x64xf32>
    %45 = vector.extract_strided_slice %44 {offsets = [0, 0], sizes = [16, 32], strides = [1, 1]} : vector<16x64xf32> to vector<16x32xf32>
    %46 = vector.extract_strided_slice %44 {offsets = [0, 32], sizes = [16, 32], strides = [1, 1]} : vector<16x64xf32> to vector<16x32xf32>
    %c15_i32 = arith.constant 15 : i32
    %47 = tpu.dynamic_rotate %46 by %c15_i32 dim 0 : vector<16x32xf32>, i32 -> vector<16x32xf32>
    %c1_i32_19 = arith.constant 1 : i32
    %48 = tpu.dynamic_rotate %46 by %c1_i32_19 dim 0 : vector<16x32xf32>, i32 -> vector<16x32xf32>
    %49 = arith.mulf %45, %47 : vector<16x32xf32>
    %cst_20 = arith.constant dense<0.000000e+00> : vector<16xf32>
    %50 = vector.multi_reduction <add>, %49, %cst_20 [1] : vector<16x32xf32> to vector<16xf32>
    %51 = vector.shape_cast %50 : vector<16xf32> to vector<16x1xf32>
    %cst_21 = arith.constant 3.125000e-02 : f32
    %52 = vector.broadcast %cst_21 : f32 to vector<16x1xf32>
    %53 = arith.mulf %51, %52 : vector<16x1xf32>
    %54 = arith.mulf %45, %48 : vector<16x32xf32>
    %cst_22 = arith.constant dense<0.000000e+00> : vector<16xf32>
    %55 = vector.multi_reduction <add>, %54, %cst_22 [1] : vector<16x32xf32> to vector<16xf32>
    %56 = vector.shape_cast %55 : vector<16xf32> to vector<16x1xf32>
    %cst_23 = arith.constant 3.125000e-02 : f32
    %57 = vector.broadcast %cst_23 : f32 to vector<16x1xf32>
    %58 = arith.mulf %56, %57 : vector<16x1xf32>
    %59 = tpu.iota {dimensions = array<i32: 0>} : vector<16x1xi32>
    %c15_i32_24 = arith.constant 15 : i32
    %60 = vector.broadcast %c15_i32_24 : i32 to vector<16x1xi32>
    %61 = arith.cmpi eq, %59, %60 : vector<16x1xi32>
    %cst_25 = arith.constant -1.000000e+09 : f32
    %62 = vector.broadcast %cst_25 : f32 to vector<16x1xf32>
    %63 = arith.select %61, %62, %53 : vector<16x1xi1>, vector<16x1xf32>
    %c0_i32 = arith.constant 0 : i32
    %64 = vector.broadcast %c0_i32 : i32 to vector<16x1xi32>
    %65 = arith.cmpi eq, %59, %64 : vector<16x1xi32>
    %cst_26 = arith.constant -1.000000e+09 : f32
    %66 = vector.broadcast %cst_26 : f32 to vector<16x1xf32>
    %67 = arith.select %65, %66, %58 : vector<16x1xi1>, vector<16x1xf32>
    %68 = arith.maximumf %63, %67 : vector<16x1xf32>
    %69 = arith.subf %63, %68 : vector<16x1xf32>
    %70 = math.exp %69 : vector<16x1xf32>
    %71 = arith.subf %67, %68 : vector<16x1xf32>
    %72 = math.exp %71 : vector<16x1xf32>
    %73 = arith.addf %70, %72 : vector<16x1xf32>
    %cst_27 = arith.constant 1.000000e+00 : f32
    %74 = vector.broadcast %cst_27 : f32 to vector<16x1xf32>
    %75 = arith.divf %74, %73 : vector<16x1xf32>
    %76 = arith.mulf %70, %75 : vector<16x1xf32>
    %77 = arith.mulf %72, %75 : vector<16x1xf32>
    %78 = arith.extui %8 : vector<16x16xi1> to vector<16x16xi32>
    %79 = arith.sitofp %78 : vector<16x16xi32> to vector<16x16xf32>
    %80 = arith.extui %11 : vector<16x16xi1> to vector<16x16xi32>
    %81 = arith.sitofp %80 : vector<16x16xi32> to vector<16x16xf32>
    %cst_28 = arith.constant dense<0.000000e+00> : vector<16x1xf32>
    %82 = tpu.matmul %79, %77, %cst_28 {dimension_numbers = #tpu.dot_dimension_numbers<[1], [0], [0], [1], [0, 0, 1, 1], [], []>} : vector<16x16xf32>, vector<16x1xf32>, vector<16x1xf32> -> vector<16x1xf32>
    %83 = arith.mulf %76, %82 : vector<16x1xf32>
    %cst_29 = arith.constant 9.99999971E-10 : f32
    %84 = vector.broadcast %cst_29 : f32 to vector<16x1xf32>
    %85 = arith.addf %83, %84 : vector<16x1xf32>
    %86 = math.sqrt %85 : vector<16x1xf32>
    %cst_30 = arith.constant dense<0.000000e+00> : vector<16x1xf32>
    %87 = tpu.matmul %81, %86, %cst_30 {dimension_numbers = #tpu.dot_dimension_numbers<[1], [0], [0], [1], [0, 0, 1, 1], [], []>} : vector<16x16xf32>, vector<16x1xf32>, vector<16x1xf32> -> vector<16x1xf32>
    %cst_31 = arith.constant 3.16227779E-5 : f32
    %88 = vector.shape_cast %87 : vector<16x1xf32> to vector<16x1xf32>
    %89 = vector.broadcast %88 : vector<16x1xf32> to vector<16x16xf32>
    %90 = vector.broadcast %cst_31 : f32 to vector<16x16xf32>
    %91 = arith.select %11, %89, %90 : vector<16x16xi1>, vector<16x16xf32>
    %92 = vector.shape_cast %86 : vector<16x1xf32> to vector<16x1xf32>
    %93 = vector.broadcast %92 : vector<16x1xf32> to vector<16x16xf32>
    %94 = arith.select %8, %93, %91 : vector<16x16xi1>, vector<16x16xf32>
    %cst_32 = arith.constant 1.000000e+00 : f32
    %95 = vector.broadcast %cst_32 : f32 to vector<16x16xf32>
    %96 = arith.subf %95, %3 : vector<16x16xf32>
    %97 = arith.mulf %96, %94 : vector<16x16xf32>
    %98 = arith.addf %3, %97 : vector<16x16xf32>
    %cst_33 = arith.constant 0.000000e+00 : f32
    %99 = vector.broadcast %cst_33 : f32 to vector<16x16xf32>
    %100 = arith.select %8, %3, %99 : vector<16x16xi1>, vector<16x16xf32>
    %cst_34 = arith.constant dense<0.000000e+00> : vector<16xf32>
    %101 = vector.multi_reduction <add>, %100, %cst_34 [1] : vector<16x16xf32> to vector<16xf32>
    %102 = vector.shape_cast %101 : vector<16xf32> to vector<16x1xf32>
    %cst_35 = arith.constant 1.000000e+00 : f32
    %103 = vector.broadcast %cst_35 : f32 to vector<16x1xf32>
    %104 = arith.subf %103, %102 : vector<16x1xf32>
    %105 = arith.mulf %104, %86 : vector<16x1xf32>
    %106 = arith.addf %102, %105 : vector<16x1xf32>
    %cst_36 = arith.constant 9.99999971E-10 : f32
    %107 = vector.broadcast %cst_36 : f32 to vector<16x1xf32>
    %108 = arith.addf %106, %107 : vector<16x1xf32>
    %109 = math.log %108 : vector<16x1xf32>
    %110 = arith.cmpi slt, %5, %4 : vector<16x16xi32>
    %111 = arith.extui %110 : vector<16x16xi1> to vector<16x16xi32>
    %112 = arith.sitofp %111 : vector<16x16xi32> to vector<16x16xf32>
    %cst_37 = arith.constant dense<0.000000e+00> : vector<16x1xf32>
    %113 = tpu.matmul %112, %109, %cst_37 {dimension_numbers = #tpu.dot_dimension_numbers<[1], [0], [0], [1], [0, 0, 1, 1], [], []>} : vector<16x16xf32>, vector<16x1xf32>, vector<16x1xf32> -> vector<16x1xf32>
    %114 = arith.cmpi slt, %4, %5 : vector<16x16xi32>
    %cst_38 = arith.constant 0.000000e+00 : f32
    %115 = vector.shape_cast %109 : vector<16x1xf32> to vector<16x1xf32>
    %116 = vector.broadcast %115 : vector<16x1xf32> to vector<16x16xf32>
    %117 = vector.broadcast %cst_38 : f32 to vector<16x16xf32>
    %118 = arith.select %114, %116, %117 : vector<16x16xi1>, vector<16x16xf32>
    %cst_39 = arith.constant dense<0.000000e+00> : vector<16xf32>
    %119 = vector.multi_reduction <add>, %118, %cst_39 [0] : vector<16x16xf32> to vector<16xf32>
    %120 = vector.shape_cast %119 : vector<16xf32> to vector<1x16xf32>
    %121 = vector.broadcast %120 : vector<1x16xf32> to vector<16x16xf32>
    %122 = vector.broadcast %113 : vector<16x1xf32> to vector<16x16xf32>
    %123 = arith.subf %121, %122 : vector<16x16xf32>
    %124 = arith.cmpi sge, %5, %4 : vector<16x16xi32>
    %cst_40 = arith.constant 0.000000e+00 : f32
    %125 = vector.broadcast %cst_40 : f32 to vector<16x16xf32>
    %126 = arith.subf %125, %123 : vector<16x16xf32>
    %127 = arith.select %124, %123, %126 : vector<16x16xi1>, vector<16x16xf32>
    %128 = math.exp %127 : vector<16x16xf32>
    %cst_41 = arith.constant 9.99999971E-10 : f32
    %129 = vector.broadcast %cst_41 : f32 to vector<16x16xf32>
    %130 = arith.addf %128, %129 : vector<16x16xf32>
    %131 = arith.select %12, %98, %130 : vector<16x16xi1>, vector<16x16xf32>
    %c0_42 = arith.constant 0 : index
    %c0_43 = arith.constant 0 : index
    %132 = vector.load %arg7[%c0_42, %c0_43] : memref<1x32xf32, #tpu.memory_space<vmem>>, vector<1x32xf32>
    %c0_44 = arith.constant 0 : index
    %c0_45 = arith.constant 0 : index
    %133 = vector.load %arg8[%c0_44, %c0_45] : memref<1x32xf32, #tpu.memory_space<vmem>>, vector<1x32xf32>
    %cst_46 = arith.constant dense<0.000000e+00> : vector<16xf32>
    %134 = vector.multi_reduction <add>, %1, %cst_46 [1] : vector<16x32xf32> to vector<16xf32>
    %135 = vector.shape_cast %134 : vector<16xf32> to vector<16x1xf32>
    %cst_47 = arith.constant 3.200000e+01 : f32
    %136 = vector.broadcast %cst_47 : f32 to vector<16x1xf32>
    %137 = arith.divf %135, %136 : vector<16x1xf32>
    %138 = vector.broadcast %137 : vector<16x1xf32> to vector<16x32xf32>
    %139 = arith.subf %1, %138 : vector<16x32xf32>
    %140 = vector.broadcast %137 : vector<16x1xf32> to vector<16x32xf32>
    %141 = arith.subf %1, %140 : vector<16x32xf32>
    %142 = arith.mulf %139, %141 : vector<16x32xf32>
    %cst_48 = arith.constant dense<0.000000e+00> : vector<16xf32>
    %143 = vector.multi_reduction <add>, %142, %cst_48 [1] : vector<16x32xf32> to vector<16xf32>
    %144 = vector.shape_cast %143 : vector<16xf32> to vector<16x1xf32>
    %cst_49 = arith.constant 3.200000e+01 : f32
    %145 = vector.broadcast %cst_49 : f32 to vector<16x1xf32>
    %146 = arith.divf %144, %145 : vector<16x1xf32>
    %147 = vector.broadcast %137 : vector<16x1xf32> to vector<16x32xf32>
    %148 = arith.subf %1, %147 : vector<16x32xf32>
    %cst_50 = arith.constant 9.99999974E-6 : f32
    %149 = vector.broadcast %cst_50 : f32 to vector<16x1xf32>
    %150 = arith.addf %146, %149 : vector<16x1xf32>
    %151 = math.rsqrt %150 : vector<16x1xf32>
    %152 = vector.broadcast %151 : vector<16x1xf32> to vector<16x32xf32>
    %153 = arith.mulf %148, %152 : vector<16x32xf32>
    %154 = vector.broadcast %132 : vector<1x32xf32> to vector<16x32xf32>
    %155 = arith.mulf %153, %154 : vector<16x32xf32>
    %156 = vector.broadcast %133 : vector<1x32xf32> to vector<16x32xf32>
    %157 = arith.addf %155, %156 : vector<16x32xf32>
    %158 = arith.truncf %157 : vector<16x32xf32> to vector<16x32xbf16>
    %c0_51 = arith.constant 0 : index
    %c0_52 = arith.constant 0 : index
    %159 = vector.load %arg9[%c0_51, %c0_52] : memref<32x96xbf16, #tpu.memory_space<vmem>>, vector<32x96xbf16>
    %cst_53 = arith.constant dense<0.000000e+00> : vector<16x96xf32>
    %160 = tpu.matmul %158, %159, %cst_53 {dimension_numbers = #tpu.dot_dimension_numbers<[1], [0], [0], [1], [0, 0, 1, 1], [], []>} : vector<16x32xbf16>, vector<32x96xbf16>, vector<16x96xf32> -> vector<16x96xf32>
    %c0_54 = arith.constant 0 : index
    %c0_55 = arith.constant 0 : index
    %161 = vector.load %arg10[%c0_54, %c0_55] : memref<1x96xf32, #tpu.memory_space<vmem>>, vector<1x96xf32>
    %162 = vector.broadcast %161 : vector<1x96xf32> to vector<16x96xf32>
    %163 = arith.addf %160, %162 : vector<16x96xf32>
    %164 = vector.extract_strided_slice %163 {offsets = [0, 0], sizes = [16, 8], strides = [1, 1]} : vector<16x96xf32> to vector<16x8xf32>
    %165 = vector.extract_strided_slice %163 {offsets = [0, 8], sizes = [16, 8], strides = [1, 1]} : vector<16x96xf32> to vector<16x8xf32>
    %166 = vector.extract_strided_slice %163 {offsets = [0, 16], sizes = [16, 8], strides = [1, 1]} : vector<16x96xf32> to vector<16x8xf32>
    %167 = vector.extract_strided_slice %163 {offsets = [0, 24], sizes = [16, 8], strides = [1, 1]} : vector<16x96xf32> to vector<16x8xf32>
    %168 = vector.shape_cast %164 : vector<16x8xf32> to vector<1x16x8xf32>
    %169 = vector.shape_cast %165 : vector<16x8xf32> to vector<1x16x8xf32>
    %170 = vector.shape_cast %166 : vector<16x8xf32> to vector<1x16x8xf32>
    %171 = vector.shape_cast %167 : vector<16x8xf32> to vector<1x16x8xf32>
    %172 = tpu.concatenate %168, %169, %170, %171 in 0 : vector<1x16x8xf32>, vector<1x16x8xf32>, vector<1x16x8xf32>, vector<1x16x8xf32> -> vector<4x16x8xf32>
    %cst_56 = arith.constant 0.353553385 : f32
    %173 = vector.broadcast %cst_56 : f32 to vector<4x16x8xf32>
    %174 = arith.mulf %172, %173 : vector<4x16x8xf32>
    %175 = vector.extract_strided_slice %163 {offsets = [0, 32], sizes = [16, 8], strides = [1, 1]} : vector<16x96xf32> to vector<16x8xf32>
    %176 = vector.extract_strided_slice %163 {offsets = [0, 40], sizes = [16, 8], strides = [1, 1]} : vector<16x96xf32> to vector<16x8xf32>
    %177 = vector.extract_strided_slice %163 {offsets = [0, 48], sizes = [16, 8], strides = [1, 1]} : vector<16x96xf32> to vector<16x8xf32>
    %178 = vector.extract_strided_slice %163 {offsets = [0, 56], sizes = [16, 8], strides = [1, 1]} : vector<16x96xf32> to vector<16x8xf32>
    %179 = vector.shape_cast %175 : vector<16x8xf32> to vector<1x16x8xf32>
    %180 = vector.shape_cast %176 : vector<16x8xf32> to vector<1x16x8xf32>
    %181 = vector.shape_cast %177 : vector<16x8xf32> to vector<1x16x8xf32>
    %182 = vector.shape_cast %178 : vector<16x8xf32> to vector<1x16x8xf32>
    %183 = tpu.concatenate %179, %180, %181, %182 in 0 : vector<1x16x8xf32>, vector<1x16x8xf32>, vector<1x16x8xf32>, vector<1x16x8xf32> -> vector<4x16x8xf32>
    %184 = vector.extract_strided_slice %163 {offsets = [0, 64], sizes = [16, 8], strides = [1, 1]} : vector<16x96xf32> to vector<16x8xf32>
    %185 = vector.extract_strided_slice %163 {offsets = [0, 72], sizes = [16, 8], strides = [1, 1]} : vector<16x96xf32> to vector<16x8xf32>
    %186 = vector.extract_strided_slice %163 {offsets = [0, 80], sizes = [16, 8], strides = [1, 1]} : vector<16x96xf32> to vector<16x8xf32>
    %187 = vector.extract_strided_slice %163 {offsets = [0, 88], sizes = [16, 8], strides = [1, 1]} : vector<16x96xf32> to vector<16x8xf32>
    %188 = vector.shape_cast %184 : vector<16x8xf32> to vector<1x16x8xf32>
    %189 = vector.shape_cast %185 : vector<16x8xf32> to vector<1x16x8xf32>
    %190 = vector.shape_cast %186 : vector<16x8xf32> to vector<1x16x8xf32>
    %191 = vector.shape_cast %187 : vector<16x8xf32> to vector<1x16x8xf32>
    %192 = tpu.concatenate %188, %189, %190, %191 in 0 : vector<1x16x8xf32>, vector<1x16x8xf32>, vector<1x16x8xf32>, vector<1x16x8xf32> -> vector<4x16x8xf32>
    %193 = arith.truncf %174 : vector<4x16x8xf32> to vector<4x16x8xbf16>
    %194 = arith.truncf %183 : vector<4x16x8xf32> to vector<4x16x8xbf16>
    "tpu.trace_start"() <{level = 10 : i32, message = "hnd,hmd->hnm"}> : () -> ()
    %cst_57 = arith.constant dense<0.000000e+00> : vector<4x16x16xf32>
    %195 = tpu.matmul %193, %194, %cst_57 {dimension_numbers = #tpu.dot_dimension_numbers<[2], [2], [1], [1], [0, 0, 0, 1, 1, 1], [0], [0]>} : vector<4x16x8xbf16>, vector<4x16x8xbf16>, vector<4x16x16xf32> -> vector<4x16x16xf32>
    "tpu.trace_stop"() : () -> ()
    %cst_58 = arith.constant dense<0xFF800000> : vector<4x16xf32>
    %196 = vector.multi_reduction <maximumf>, %195, %cst_58 [2] : vector<4x16x16xf32> to vector<4x16xf32>
    %197 = vector.shape_cast %196 : vector<4x16xf32> to vector<4x16x1xf32>
    %198 = vector.broadcast %197 : vector<4x16x1xf32> to vector<4x16x16xf32>
    %199 = arith.subf %195, %198 : vector<4x16x16xf32>
    %200 = math.exp %199 : vector<4x16x16xf32>
    %cst_59 = arith.constant dense<0.000000e+00> : vector<4x16xf32>
    %201 = vector.multi_reduction <add>, %200, %cst_59 [2] : vector<4x16x16xf32> to vector<4x16xf32>
    %202 = vector.shape_cast %201 : vector<4x16xf32> to vector<4x16x1xf32>
    %203 = tpu.reciprocal %202 {approx = true} : vector<4x16x1xf32> -> vector<4x16x1xf32>
    %204 = vector.broadcast %203 : vector<4x16x1xf32> to vector<4x16x16xf32>
    %205 = arith.mulf %200, %204 : vector<4x16x16xf32>
    %206 = vector.shape_cast %131 : vector<16x16xf32> to vector<1x16x16xf32>
    %207 = vector.broadcast %206 : vector<1x16x16xf32> to vector<4x16x16xf32>
    %208 = arith.mulf %205, %207 : vector<4x16x16xf32>
    %c0_60 = arith.constant 0 : index
    %c0_61 = arith.constant 0 : index
    %c0_62 = arith.constant 0 : index
    %c0_63 = arith.constant 0 : index
    %209 = vector.load %arg22[%c0_60, %c0_61, %c0_62, %c0_63] : memref<1x4x16x16xf32, #tpu.memory_space<vmem>>, vector<1x4x16x16xf32>
    %210 = vector.shape_cast %209 : vector<1x4x16x16xf32> to vector<4x16x16xf32>
    %211 = vector.shape_cast %208 : vector<4x16x16xf32> to vector<1x4x16x16xf32>
    tpu.vector_store %arg22[%c0_60, %c0_61, %c0_62, %c0_63], %211 {strides = array<i32>} : memref<1x4x16x16xf32, #tpu.memory_space<vmem>>, vector<1x4x16x16xf32>,
    %212 = arith.truncf %208 : vector<4x16x16xf32> to vector<4x16x16xbf16>
    %213 = arith.truncf %192 : vector<4x16x8xf32> to vector<4x16x8xbf16>
    "tpu.trace_start"() <{level = 10 : i32, message = "hnm,hmd->hnd"}> : () -> ()
    %cst_64 = arith.constant dense<0.000000e+00> : vector<4x16x8xf32>
    %214 = tpu.matmul %212, %213, %cst_64 {dimension_numbers = #tpu.dot_dimension_numbers<[2], [1], [1], [2], [0, 0, 0, 1, 1, 2], [0], [0]>} : vector<4x16x16xbf16>, vector<4x16x8xbf16>, vector<4x16x8xf32> -> vector<4x16x8xf32>
    "tpu.trace_stop"() : () -> ()
    %215 = vector.extract_strided_slice %214 {offsets = [0, 0, 0], sizes = [1, 16, 8], strides = [1, 1, 1]} : vector<4x16x8xf32> to vector<1x16x8xf32>
    %216 = vector.shape_cast %215 : vector<1x16x8xf32> to vector<16x8xf32>
    %217 = vector.extract_strided_slice %214 {offsets = [1, 0, 0], sizes = [1, 16, 8], strides = [1, 1, 1]} : vector<4x16x8xf32> to vector<1x16x8xf32>
    %218 = vector.shape_cast %217 : vector<1x16x8xf32> to vector<16x8xf32>
    %219 = vector.extract_strided_slice %214 {offsets = [2, 0, 0], sizes = [1, 16, 8], strides = [1, 1, 1]} : vector<4x16x8xf32> to vector<1x16x8xf32>
    %220 = vector.shape_cast %219 : vector<1x16x8xf32> to vector<16x8xf32>
    %221 = vector.extract_strided_slice %214 {offsets = [3, 0, 0], sizes = [1, 16, 8], strides = [1, 1, 1]} : vector<4x16x8xf32> to vector<1x16x8xf32>
    %222 = vector.shape_cast %221 : vector<1x16x8xf32> to vector<16x8xf32>
    %223 = tpu.concatenate %216, %218, %220, %222 in 1 : vector<16x8xf32>, vector<16x8xf32>, vector<16x8xf32>, vector<16x8xf32> -> vector<16x32xf32>
    %224 = arith.truncf %223 : vector<16x32xf32> to vector<16x32xbf16>
    %c0_65 = arith.constant 0 : index
    %c0_66 = arith.constant 0 : index
    %225 = vector.load %arg11[%c0_65, %c0_66] : memref<32x32xbf16, #tpu.memory_space<vmem>>, vector<32x32xbf16>
    %cst_67 = arith.constant dense<0.000000e+00> : vector<16x32xf32>
    %226 = tpu.matmul %224, %225, %cst_67 {dimension_numbers = #tpu.dot_dimension_numbers<[1], [0], [0], [1], [0, 0, 1, 1], [], []>} : vector<16x32xbf16>, vector<32x32xbf16>, vector<16x32xf32> -> vector<16x32xf32>
    %c0_68 = arith.constant 0 : index
    %c0_69 = arith.constant 0 : index
    %227 = vector.load %arg12[%c0_68, %c0_69] : memref<1x32xf32, #tpu.memory_space<vmem>>, vector<1x32xf32>
    %228 = vector.broadcast %227 : vector<1x32xf32> to vector<16x32xf32>
    %229 = arith.addf %226, %228 : vector<16x32xf32>
    %230 = arith.addf %1, %229 : vector<16x32xf32>
    %c0_70 = arith.constant 0 : index
    %c0_71 = arith.constant 0 : index
    %231 = vector.load %arg13[%c0_70, %c0_71] : memref<1x32xf32, #tpu.memory_space<vmem>>, vector<1x32xf32>
    %c0_72 = arith.constant 0 : index
    %c0_73 = arith.constant 0 : index
    %232 = vector.load %arg14[%c0_72, %c0_73] : memref<1x32xf32, #tpu.memory_space<vmem>>, vector<1x32xf32>
    %cst_74 = arith.constant dense<0.000000e+00> : vector<16xf32>
    %233 = vector.multi_reduction <add>, %230, %cst_74 [1] : vector<16x32xf32> to vector<16xf32>
    %234 = vector.shape_cast %233 : vector<16xf32> to vector<16x1xf32>
    %cst_75 = arith.constant 3.200000e+01 : f32
    %235 = vector.broadcast %cst_75 : f32 to vector<16x1xf32>
    %236 = arith.divf %234, %235 : vector<16x1xf32>
    %237 = vector.broadcast %236 : vector<16x1xf32> to vector<16x32xf32>
    %238 = arith.subf %230, %237 : vector<16x32xf32>
    %239 = vector.broadcast %236 : vector<16x1xf32> to vector<16x32xf32>
    %240 = arith.subf %230, %239 : vector<16x32xf32>
    %241 = arith.mulf %238, %240 : vector<16x32xf32>
    %cst_76 = arith.constant dense<0.000000e+00> : vector<16xf32>
    %242 = vector.multi_reduction <add>, %241, %cst_76 [1] : vector<16x32xf32> to vector<16xf32>
    %243 = vector.shape_cast %242 : vector<16xf32> to vector<16x1xf32>
    %cst_77 = arith.constant 3.200000e+01 : f32
    %244 = vector.broadcast %cst_77 : f32 to vector<16x1xf32>
    %245 = arith.divf %243, %244 : vector<16x1xf32>
    %246 = vector.broadcast %236 : vector<16x1xf32> to vector<16x32xf32>
    %247 = arith.subf %230, %246 : vector<16x32xf32>
    %cst_78 = arith.constant 9.99999974E-6 : f32
    %248 = vector.broadcast %cst_78 : f32 to vector<16x1xf32>
    %249 = arith.addf %245, %248 : vector<16x1xf32>
    %250 = math.rsqrt %249 : vector<16x1xf32>
    %251 = vector.broadcast %250 : vector<16x1xf32> to vector<16x32xf32>
    %252 = arith.mulf %247, %251 : vector<16x32xf32>
    %253 = vector.broadcast %231 : vector<1x32xf32> to vector<16x32xf32>
    %254 = arith.mulf %252, %253 : vector<16x32xf32>
    %255 = vector.broadcast %232 : vector<1x32xf32> to vector<16x32xf32>
    %256 = arith.addf %254, %255 : vector<16x32xf32>
    %257 = arith.truncf %256 : vector<16x32xf32> to vector<16x32xbf16>
    %c0_79 = arith.constant 0 : index
    %c0_80 = arith.constant 0 : index
    %258 = vector.load %arg15[%c0_79, %c0_80] : memref<32x64xbf16, #tpu.memory_space<vmem>>, vector<32x64xbf16>
    %cst_81 = arith.constant dense<0.000000e+00> : vector<16x64xf32>
    %259 = tpu.matmul %257, %258, %cst_81 {dimension_numbers = #tpu.dot_dimension_numbers<[1], [0], [0], [1], [0, 0, 1, 1], [], []>} : vector<16x32xbf16>, vector<32x64xbf16>, vector<16x64xf32> -> vector<16x64xf32>
    %c0_82 = arith.constant 0 : index
    %c0_83 = arith.constant 0 : index
    %260 = vector.load %arg16[%c0_82, %c0_83] : memref<1x64xf32, #tpu.memory_space<vmem>>, vector<1x64xf32>
    %261 = vector.broadcast %260 : vector<1x64xf32> to vector<16x64xf32>
    %262 = arith.addf %259, %261 : vector<16x64xf32>
    %cst_84 = arith.constant 0.000000e+00 : f32
    %263 = vector.broadcast %cst_84 : f32 to vector<16x64xf32>
    %264 = arith.maximumf %262, %263 : vector<16x64xf32>
    %265 = arith.truncf %264 : vector<16x64xf32> to vector<16x64xbf16>
    %c0_85 = arith.constant 0 : index
    %c0_86 = arith.constant 0 : index
    %266 = vector.load %arg17[%c0_85, %c0_86] : memref<64x32xbf16, #tpu.memory_space<vmem>>, vector<64x32xbf16>
    %cst_87 = arith.constant dense<0.000000e+00> : vector<16x32xf32>
    %267 = tpu.matmul %265, %266, %cst_87 {dimension_numbers = #tpu.dot_dimension_numbers<[1], [0], [0], [1], [0, 0, 1, 1], [], []>} : vector<16x64xbf16>, vector<64x32xbf16>, vector<16x32xf32> -> vector<16x32xf32>
    %c0_88 = arith.constant 0 : index
    %c0_89 = arith.constant 0 : index
    %268 = vector.load %arg18[%c0_88, %c0_89] : memref<1x32xf32, #tpu.memory_space<vmem>>, vector<1x32xf32>
    %269 = vector.broadcast %268 : vector<1x32xf32> to vector<16x32xf32>
    %270 = arith.addf %267, %269 : vector<16x32xf32>
    %271 = arith.addf %230, %270 : vector<16x32xf32>
    %c0_90 = arith.constant 0 : index
    %c0_91 = arith.constant 0 : index
    %c0_92 = arith.constant 0 : index
    %272 = vector.load %arg19[%c0_90, %c0_91, %c0_92] : memref<1x16x32xf32, #tpu.memory_space<vmem>>, vector<1x16x32xf32>
    %273 = vector.shape_cast %272 : vector<1x16x32xf32> to vector<16x32xf32>
    %274 = vector.shape_cast %271 : vector<16x32xf32> to vector<1x16x32xf32>
    tpu.vector_store %arg19[%c0_90, %c0_91, %c0_92], %274 {strides = array<i32>} : memref<1x16x32xf32, #tpu.memory_space<vmem>>, vector<1x16x32xf32>,
    %c0_93 = arith.constant 0 : index
    %c0_94 = arith.constant 0 : index
    %c0_95 = arith.constant 0 : index
    %275 = vector.load %arg20[%c0_93, %c0_94, %c0_95] : memref<1x16x16xf32, #tpu.memory_space<vmem>>, vector<1x16x16xf32>
    %276 = vector.shape_cast %275 : vector<1x16x16xf32> to vector<16x16xf32>
    %277 = vector.shape_cast %131 : vector<16x16xf32> to vector<1x16x16xf32>
    tpu.vector_store %arg20[%c0_93, %c0_94, %c0_95], %277 {strides = array<i32>} : memref<1x16x16xf32, #tpu.memory_space<vmem>>, vector<1x16x16xf32>,
    %c0_96 = arith.constant 0 : index
    %c0_97 = arith.constant 0 : index
    %c0_98 = arith.constant 0 : index
    %278 = vector.load %arg21[%c0_96, %c0_97, %c0_98] : memref<1x16x16xf32, #tpu.memory_space<vmem>>, vector<1x16x16xf32>
    %279 = vector.shape_cast %278 : vector<1x16x16xf32> to vector<16x16xf32>
    %280 = vector.shape_cast %98 : vector<16x16xf32> to vector<1x16x16xf32>
    tpu.vector_store %arg21[%c0_96, %c0_97, %c0_98], %280 {strides = array<i32>} : memref<1x16x16xf32, #tpu.memory_space<vmem>>, vector<1x16x16xf32>,
    return
  }
  func.func @transform_0(%arg0: i32) -> (i32, i32, i32) {
    %c0_i32 = arith.constant 0 : i32
    %c0_i32_0 = arith.constant 0 : i32
    %c0_i32_1 = arith.constant 0 : i32
    return %arg0, %c0_i32, %c0_i32_0 : i32, i32, i32
  }
  func.func @transform_1(%arg0: i32) -> (i32, i32, i32) {
    %c0_i32 = arith.constant 0 : i32
    %c0_i32_0 = arith.constant 0 : i32
    %c0_i32_1 = arith.constant 0 : i32
    return %arg0, %c0_i32, %c0_i32_0 : i32, i32, i32
  }
  func.func @transform_2(%arg0: i32) -> (i32, i32) {
    %c0_i32 = arith.constant 0 : i32
    %c0_i32_0 = arith.constant 0 : i32
    %c0_i32_1 = arith.constant 0 : i32
    return %c0_i32, %c0_i32_0 : i32, i32
  }
  func.func @transform_3(%arg0: i32) -> (i32, i32) {
    %c0_i32 = arith.constant 0 : i32
    %c0_i32_0 = arith.constant 0 : i32
    %c0_i32_1 = arith.constant 0 : i32
    return %c0_i32, %c0_i32_0 : i32, i32
  }
  func.func @transform_4(%arg0: i32) -> (i32, i32) {
    %c0_i32 = arith.constant 0 : i32
    %c0_i32_0 = arith.constant 0 : i32
    %c0_i32_1 = arith.constant 0 : i32
    return %c0_i32, %c0_i32_0 : i32, i32
  }
  func.func @transform_5(%arg0: i32) -> (i32, i32) {
    %c0_i32 = arith.constant 0 : i32
    %c0_i32_0 = arith.constant 0 : i32
    %c0_i32_1 = arith.constant 0 : i32
    return %c0_i32, %c0_i32_0 : i32, i32
  }
  func.func @transform_6(%arg0: i32) -> (i32, i32) {
    %c0_i32 = arith.constant 0 : i32
    %c0_i32_0 = arith.constant 0 : i32
    %c0_i32_1 = arith.constant 0 : i32
    return %c0_i32, %c0_i32_0 : i32, i32
  }
  func.func @transform_7(%arg0: i32) -> (i32, i32) {
    %c0_i32 = arith.constant 0 : i32
    %c0_i32_0 = arith.constant 0 : i32
    %c0_i32_1 = arith.constant 0 : i32
    return %c0_i32, %c0_i32_0 : i32, i32
  }
  func.func @transform_8(%arg0: i32) -> (i32, i32) {
    %c0_i32 = arith.constant 0 : i32
    %c0_i32_0 = arith.constant 0 : i32
    %c0_i32_1 = arith.constant 0 : i32
    return %c0_i32, %c0_i32_0 : i32, i32
  }
  func.func @transform_9(%arg0: i32) -> (i32, i32) {
    %c0_i32 = arith.constant 0 : i32
    %c0_i32_0 = arith.constant 0 : i32
    %c0_i32_1 = arith.constant 0 : i32
    return %c0_i32, %c0_i32_0 : i32, i32
  }
  func.func @transform_10(%arg0: i32) -> (i32, i32) {
    %c0_i32 = arith.constant 0 : i32
    %c0_i32_0 = arith.constant 0 : i32
    %c0_i32_1 = arith.constant 0 : i32
    return %c0_i32, %c0_i32_0 : i32, i32
  }
  func.func @transform_11(%arg0: i32) -> (i32, i32) {
    %c0_i32 = arith.constant 0 : i32
    %c0_i32_0 = arith.constant 0 : i32
    %c0_i32_1 = arith.constant 0 : i32
    return %c0_i32, %c0_i32_0 : i32, i32
  }
  func.func @transform_12(%arg0: i32) -> (i32, i32) {
    %c0_i32 = arith.constant 0 : i32
    %c0_i32_0 = arith.constant 0 : i32
    %c0_i32_1 = arith.constant 0 : i32
    return %c0_i32, %c0_i32_0 : i32, i32
  }
  func.func @transform_13(%arg0: i32) -> (i32, i32) {
    %c0_i32 = arith.constant 0 : i32
    %c0_i32_0 = arith.constant 0 : i32
    %c0_i32_1 = arith.constant 0 : i32
    return %c0_i32, %c0_i32_0 : i32, i32
  }
  func.func @transform_14(%arg0: i32) -> (i32, i32) {
    %c0_i32 = arith.constant 0 : i32
    %c0_i32_0 = arith.constant 0 : i32
    %c0_i32_1 = arith.constant 0 : i32
    return %c0_i32, %c0_i32_0 : i32, i32
  }
  func.func @transform_15(%arg0: i32) -> (i32, i32) {
    %c0_i32 = arith.constant 0 : i32
    %c0_i32_0 = arith.constant 0 : i32
    %c0_i32_1 = arith.constant 0 : i32
    return %c0_i32, %c0_i32_0 : i32, i32
  }
  func.func @transform_16(%arg0: i32) -> (i32, i32) {
    %c0_i32 = arith.constant 0 : i32
    %c0_i32_0 = arith.constant 0 : i32
    %c0_i32_1 = arith.constant 0 : i32
    return %c0_i32, %c0_i32_0 : i32, i32
  }
  func.func @transform_17(%arg0: i32) -> (i32, i32) {
    %c0_i32 = arith.constant 0 : i32
    %c0_i32_0 = arith.constant 0 : i32
    %c0_i32_1 = arith.constant 0 : i32
    return %c0_i32, %c0_i32_0 : i32, i32
  }
  func.func @transform_18(%arg0: i32) -> (i32, i32, i32) {
    %c0_i32 = arith.constant 0 : i32
    %c0_i32_0 = arith.constant 0 : i32
    %c0_i32_1 = arith.constant 0 : i32
    return %arg0, %c0_i32, %c0_i32_0 : i32, i32, i32
  }
  func.func @transform_19(%arg0: i32) -> (i32, i32, i32) {
    %c0_i32 = arith.constant 0 : i32
    %c0_i32_0 = arith.constant 0 : i32
    %c0_i32_1 = arith.constant 0 : i32
    return %arg0, %c0_i32, %c0_i32_0 : i32, i32, i32
  }
  func.func @transform_20(%arg0: i32) -> (i32, i32, i32) {
    %c0_i32 = arith.constant 0 : i32
    %c0_i32_0 = arith.constant 0 : i32
    %c0_i32_1 = arith.constant 0 : i32
    return %arg0, %c0_i32, %c0_i32_0 : i32, i32, i32
  }
  func.func @transform_21(%arg0: i32) -> (i32, i32, i32, i32) {
    %c0_i32 = arith.constant 0 : i32
    %c0_i32_0 = arith.constant 0 : i32
    %c0_i32_1 = arith.constant 0 : i32
    %c0_i32_2 = arith.constant 0 : i32
    return %arg0, %c0_i32, %c0_i32_0, %c0_i32_1 : i32, i32, i32, i32
  }
}

</mosaic_0001>

<llo_original>
// kernel: tpu_custom_call.1
$region0: #{tpu_custom_call.1}
  #allocation0 [shape = 'u32[]', space=smem, size = 0x4, offset = 0x4, fixed_abs, tag = 'smem constant byte address 0x4 - core index']
  #allocation1 [shape = 'u32[144,128]{1,0:T(1,128)}', space=vmem, size = 0x12000, scoped, tag = 'internal scratch']
  %s0 = inlined_call_operand.vmem [shape: f32[2,16,32], index: 0, kind: input, shape index: {}]
  %s1 = inlined_call_operand.hbm [shape: f32[2,16,16], index: 1, kind: input, shape index: {}]
  %s2 = inlined_call_operand.vmem [shape: f32[1,32], index: 2, kind: input, shape index: {}]
  %s3 = inlined_call_operand.vmem [shape: f32[1,32], index: 3, kind: input, shape index: {}]
  %s4 = inlined_call_operand.vmem [shape: bf16[32,64], index: 4, kind: input, shape index: {}]
  %s5 = inlined_call_operand.vmem [shape: f32[1,64], index: 5, kind: input, shape index: {}]
  %s6 = inlined_call_operand.vmem [shape: f32[1,32], index: 6, kind: input, shape index: {}]
  %s7 = inlined_call_operand.vmem [shape: f32[1,32], index: 7, kind: input, shape index: {}]
  %s8 = inlined_call_operand.hbm [shape: bf16[32,96], index: 8, kind: input, shape index: {}]
  %s9 = inlined_call_operand.vmem [shape: f32[1,96], index: 9, kind: input, shape index: {}]
  %s10 = inlined_call_operand.hbm [shape: bf16[32,32], index: 10, kind: input, shape index: {}]
  %s11 = inlined_call_operand.vmem [shape: f32[1,32], index: 11, kind: input, shape index: {}]
  %s12 = inlined_call_operand.vmem [shape: f32[1,32], index: 12, kind: input, shape index: {}]
  %s13 = inlined_call_operand.vmem [shape: f32[1,32], index: 13, kind: input, shape index: {}]
  %s14 = inlined_call_operand.hbm [shape: bf16[32,64], index: 14, kind: input, shape index: {}]
  %s15 = inlined_call_operand.vmem [shape: f32[1,64], index: 15, kind: input, shape index: {}]
  %s16 = inlined_call_operand.vmem [shape: bf16[64,32], index: 16, kind: input, shape index: {}]
  %s17 = inlined_call_operand.vmem [shape: f32[1,32], index: 17, kind: input, shape index: {}]
  %s18 = inlined_call_operand.hbm [shape: f32[2,16,32], index: 18, kind: output, shape index: {0}]
  %s19 = inlined_call_operand.hbm [shape: f32[2,16,16], index: 19, kind: output, shape index: {1}]
  %s20 = inlined_call_operand.hbm [shape: f32[2,16,16], index: 20, kind: output, shape index: {2}]
  %s21 = inlined_call_operand.hbm [shape: f32[2,4,16,16], index: 21, kind: output, shape index: {3}]
  %22 = xla_tuple %s18, %s19, %s20, %s21
  %s23 = sld [smem:[#allocation0]]
  $region145: #{tpu_custom_call.1} parent=0
    _
  %s25 = ssub.s32 1, %s23
  %s26 = scalar_select 0, %s25, %s23
  $region1: #{tpu_custom_call.1} parent=0
    #allocation2 [shape = 'u8[16384]{0}', space=vmem, size = 0x4000, scoped, tag = 'input window, operand 1']
    #allocation3 [shape = 's32[2]{0}', space=sflag, size = 0x8, scoped, tag = 'scoped memory for tpu_custom_call.1']
    #allocation4 [shape = 's32[2]{0}', space=sflag, size = 0x8, scoped, tag = 'scoped memory for tpu_custom_call.1']
    #allocation5 [shape = 'u8[8192]{0}', space=vmem, size = 0x2000, scoped, tag = 'input window, operand 8, single buffered']
    #allocation6 [shape = 's32[1]{0}', space=sflag, size = 0x4, scoped, tag = 'scoped memory for tpu_custom_call.1']
    #allocation7 [shape = 'u8[8192]{0}', space=vmem, size = 0x2000, scoped, tag = 'input window, operand 10, single buffered']
    #allocation8 [shape = 'u8[8192]{0}', space=vmem, size = 0x2000, scoped, tag = 'input window, operand 14, single buffered']
    #allocation9 [shape = 's32[1]{0}', space=sflag, size = 0x4, scoped, tag = 'scoped memory for tpu_custom_call.1']
    #allocation10 [shape = 'u8[16384]{0}', space=vmem, size = 0x4000, scoped, tag = 'output window, operand 0']
    #allocation11 [shape = 'u8[16384]{0}', space=vmem, size = 0x4000, scoped, tag = 'output window, operand 1']
    #allocation12 [shape = 's32[2]{0}', space=sflag, size = 0x8, scoped, tag = 'scoped memory for tpu_custom_call.1']
    #allocation13 [shape = 'u8[16384]{0}', space=vmem, size = 0x4000, scoped, tag = 'output window, operand 2']
    #allocation14 [shape = 'u8[65536]{0}', space=vmem, size = 0x10000, scoped, tag = 'output window, operand 3']
    #allocation15 [shape = 's32[2]{0}', space=sflag, size = 0x8, scoped, tag = 'scoped memory for tpu_custom_call.1']
    %27 = vsyncpa [#allocation3], 0
    %s28 = scalar_lea.sflag [#allocation3], 1
    %29 = vsyncpa %s28, 0
    %30 = vsyncpa [#allocation6], 0
    %31 = vsyncpa [#allocation9], 0
    %32 = vsyncpa [#allocation4], 0
    %s33 = scalar_lea.sflag [#allocation4], 1
    %34 = vsyncpa %s33, 0
    %35 = vsyncpa [#allocation12], 0
    %s36 = scalar_lea.sflag [#allocation12], 1
    %37 = vsyncpa %s36, 0
    %38 = vsyncpa [#allocation15], 0
    %s39 = scalar_lea.sflag [#allocation15], 1
    %40 = vsyncpa %s39, 0
    loop: start=0, step=1, limit=4
    $region2: #{tpu_custom_call.1} parent=1 // loop_pre_header
      _
    $region3: #{tpu_custom_call.1} parent=1 // loop_header
      %s42 = sphi 0, %s46
      %p43 = scmp.ge.s32.totalorder %s42, 4
      %s52 = sphi 0, %s54
      %s55 = sphi 0, %s52
      %s56 = sphi 0, %s55
      %s72 = sphi 0, %s56
      %s78 = sphi 0, %s80
      %s81 = sphi 0, %s78
      %s82 = sphi 0, %s81
      %s98 = sphi 0, %s82
      %s102 = sphi 0, %s102
      %s104 = sphi 0, %s102
      %s105 = sphi 0, %s104
      %s119 = sphi 0, %s105
      %s123 = sphi 0, %s123
      %s125 = sphi 0, %s123
      %s126 = sphi 0, %s125
      %s140 = sphi 0, %s126
      %s144 = sphi 0, %s144
      %s146 = sphi 0, %s144
      %s147 = sphi 0, %s146
      %s161 = sphi 0, %s147
      %s165 = sphi 0, %s165
      %s167 = sphi 0, %s165
      %s168 = sphi 0, %s167
      %s182 = sphi 0, %s168
      %s186 = sphi 0, %s186
      %s188 = sphi 0, %s186
      %s189 = sphi 0, %s188
      %s203 = sphi 0, %s189
      %s207 = sphi 0, %s207
      %s209 = sphi 0, %s207
      %s210 = sphi 0, %s209
      %s224 = sphi 0, %s210
      %s228 = sphi 0, %s228
      %s230 = sphi 0, %s228
      %s231 = sphi 0, %s230
      %s245 = sphi 0, %s231
      %s249 = sphi 0, %s249
      %s251 = sphi 0, %s249
      %s252 = sphi 0, %s251
      %s266 = sphi 0, %s252
      %s270 = sphi 0, %s270
      %s272 = sphi 0, %s270
      %s273 = sphi 0, %s272
      %s287 = sphi 0, %s273
      %s291 = sphi 0, %s291
      %s293 = sphi 0, %s291
      %s294 = sphi 0, %s293
      %s308 = sphi 0, %s294
      %s312 = sphi 0, %s312
      %s314 = sphi 0, %s312
      %s315 = sphi 0, %s314
      %s329 = sphi 0, %s315
      %s333 = sphi 0, %s333
      %s335 = sphi 0, %s333
      %s336 = sphi 0, %s335
      %s350 = sphi 0, %s336
      %s354 = sphi 0, %s354
      %s356 = sphi 0, %s354
      %s357 = sphi 0, %s356
      %s371 = sphi 0, %s357
      %s375 = sphi 0, %s375
      %s377 = sphi 0, %s375
      %s378 = sphi 0, %s377
      %s392 = sphi 0, %s378
      %s396 = sphi 0, %s396
      %s398 = sphi 0, %s396
      %s399 = sphi 0, %s398
      %s413 = sphi 0, %s399
      %s417 = sphi 0, %s417
      %s419 = sphi 0, %s417
      %s420 = sphi 0, %s419
      %s434 = sphi 0, %s420
      %s440 = sphi 0, %s442
      %s443 = sphi 0, %s440
      %s444 = sphi 0, %s443
      %s460 = sphi 0, %s444
      %s466 = sphi 0, %s468
      %s469 = sphi 0, %s466
      %s470 = sphi 0, %s469
      %s486 = sphi 0, %s470
      %s492 = sphi 0, %s494
      %s495 = sphi 0, %s492
      %s496 = sphi 0, %s495
      %s512 = sphi 0, %s496
      %s518 = sphi 0, %s520
      %s521 = sphi 0, %s518
      %s522 = sphi 0, %s521
      %s538 = sphi 0, %s522
    $region4: #{tpu_custom_call.1} parent=1 // loop_header_branch
      %45 = sbr.rel (%p43) target = $region8
    $region5: #{tpu_custom_call.1} parent=1 // loop_body
      %s47 = ssub.s32 %s42, 1
      %s48 = ssub.s32 %s42, 2
      %s49 = sadd.s32 %s42, 1
      %s50 = ssub.s32 %s42, %s49
      %p51 = scmp.eq.s32.totalorder %s50, 0
      %s53 = sadd.s32 %s52, 1
      %s54 = scalar_select %p51, %s52, %s53
      %p57 = pneg %p51
      %p58 = scmp.eq.s32.totalorder %s42, 1
      %p59 = por %p57, %p58
      %p60 = scmp.ne.s32.totalorder %s52, %s55
      %p61 = scmp.eq.s32.totalorder %s42, 0
      %p62 = por %p60, %p61
      %p63 = scmp.ne.s32.totalorder %s52, %s55
      %p64 = scmp.eq.s32.totalorder %s47, 1
      %p65 = por %p63, %p64
      %p66 = scmp.ne.s32.totalorder %s55, %s56
      %p67 = scmp.eq.s32.totalorder %s47, 0
      %p68 = por %p66, %p67
      %p69 = scmp.ne.s32.totalorder %s55, %s56
      %p70 = scmp.eq.s32.totalorder %s48, 1
      %p71 = por %p69, %p70
      %p73 = scmp.ne.s32.totalorder %s56, %s72
      %p74 = scmp.eq.s32.totalorder %s48, 0
      %p75 = por %p73, %p74
      %s76 = ssub.s32 %s42, %s49
      %p77 = scmp.eq.s32.totalorder %s76, 0
      %s79 = sadd.s32 %s78, 1
      %s80 = scalar_select %p77, %s78, %s79
      %p83 = pneg %p77
      %p84 = scmp.eq.s32.totalorder %s42, 1
      %p85 = por %p83, %p84
      %p86 = scmp.ne.s32.totalorder %s78, %s81
      %p87 = scmp.eq.s32.totalorder %s42, 0
      %p88 = por %p86, %p87
      %p89 = scmp.ne.s32.totalorder %s78, %s81
      %p90 = scmp.eq.s32.totalorder %s47, 1
      %p91 = por %p89, %p90
      %p92 = scmp.ne.s32.totalorder %s81, %s82
      %p93 = scmp.eq.s32.totalorder %s47, 0
      %p94 = por %p92, %p93
      %p95 = scmp.ne.s32.totalorder %s81, %s82
      %p96 = scmp.eq.s32.totalorder %s48, 1
      %p97 = por %p95, %p96
      %p99 = scmp.ne.s32.totalorder %s82, %s98
      %p100 = scmp.eq.s32.totalorder %s48, 0
      %p101 = por %p99, %p100
      %s103 = sadd.s32 %s102, 1
      %p106 = scmp.eq.s32.totalorder %s42, 1
      %p107 = scmp.ne.s32.totalorder %s102, %s104
      %p108 = scmp.eq.s32.totalorder %s42, 0
      %p109 = por %p107, %p108
      %p110 = scmp.ne.s32.totalorder %s102, %s104
      %p111 = scmp.eq.s32.totalorder %s47, 1
      %p112 = por %p110, %p111
      %p113 = scmp.ne.s32.totalorder %s104, %s105
      %p114 = scmp.eq.s32.totalorder %s47, 0
      %p115 = por %p113, %p114
      %p116 = scmp.ne.s32.totalorder %s104, %s105
      %p117 = scmp.eq.s32.totalorder %s48, 1
      %p118 = por %p116, %p117
      %p120 = scmp.ne.s32.totalorder %s105, %s119
      %p121 = scmp.eq.s32.totalorder %s48, 0
      %p122 = por %p120, %p121
      %s124 = sadd.s32 %s123, 1
      %p127 = scmp.eq.s32.totalorder %s42, 1
      %p128 = scmp.ne.s32.totalorder %s123, %s125
      %p129 = scmp.eq.s32.totalorder %s42, 0
      %p130 = por %p128, %p129
      %p131 = scmp.ne.s32.totalorder %s123, %s125
      %p132 = scmp.eq.s32.totalorder %s47, 1
      %p133 = por %p131, %p132
      %p134 = scmp.ne.s32.totalorder %s125, %s126
      %p135 = scmp.eq.s32.totalorder %s47, 0
      %p136 = por %p134, %p135
      %p137 = scmp.ne.s32.totalorder %s125, %s126
      %p138 = scmp.eq.s32.totalorder %s48, 1
      %p139 = por %p137, %p138
      %p141 = scmp.ne.s32.totalorder %s126, %s140
      %p142 = scmp.eq.s32.totalorder %s48, 0
      %p143 = por %p141, %p142
      %s145 = sadd.s32 %s144, 1
      %p148 = scmp.eq.s32.totalorder %s42, 1
      %p149 = scmp.ne.s32.totalorder %s144, %s146
      %p150 = scmp.eq.s32.totalorder %s42, 0
      %p151 = por %p149, %p150
      %p152 = scmp.ne.s32.totalorder %s144, %s146
      %p153 = scmp.eq.s32.totalorder %s47, 1
      %p154 = por %p152, %p153
      %p155 = scmp.ne.s32.totalorder %s146, %s147
      %p156 = scmp.eq.s32.totalorder %s47, 0
      %p157 = por %p155, %p156
      %p158 = scmp.ne.s32.totalorder %s146, %s147
      %p159 = scmp.eq.s32.totalorder %s48, 1
      %p160 = por %p158, %p159
      %p162 = scmp.ne.s32.totalorder %s147, %s161
      %p163 = scmp.eq.s32.totalorder %s48, 0
      %p164 = por %p162, %p163
      %s166 = sadd.s32 %s165, 1
      %p169 = scmp.eq.s32.totalorder %s42, 1
      %p170 = scmp.ne.s32.totalorder %s165, %s167
      %p171 = scmp.eq.s32.totalorder %s42, 0
      %p172 = por %p170, %p171
      %p173 = scmp.ne.s32.totalorder %s165, %s167
      %p174 = scmp.eq.s32.totalorder %s47, 1
      %p175 = por %p173, %p174
      %p176 = scmp.ne.s32.totalorder %s167, %s168
      %p177 = scmp.eq.s32.totalorder %s47, 0
      %p178 = por %p176, %p177
      %p179 = scmp.ne.s32.totalorder %s167, %s168
      %p180 = scmp.eq.s32.totalorder %s48, 1
      %p181 = por %p179, %p180
      %p183 = scmp.ne.s32.totalorder %s168, %s182
      %p184 = scmp.eq.s32.totalorder %s48, 0
      %p185 = por %p183, %p184
      %s187 = sadd.s32 %s186, 1
      %p190 = scmp.eq.s32.totalorder %s42, 1
      %p191 = scmp.ne.s32.totalorder %s186, %s188
      %p192 = scmp.eq.s32.totalorder %s42, 0
      %p193 = por %p191, %p192
      %p194 = scmp.ne.s32.totalorder %s186, %s188
      %p195 = scmp.eq.s32.totalorder %s47, 1
      %p196 = por %p194, %p195
      %p197 = scmp.ne.s32.totalorder %s188, %s189
      %p198 = scmp.eq.s32.totalorder %s47, 0
      %p199 = por %p197, %p198
      %p200 = scmp.ne.s32.totalorder %s188, %s189
      %p201 = scmp.eq.s32.totalorder %s48, 1
      %p202 = por %p200, %p201
      %p204 = scmp.ne.s32.totalorder %s189, %s203
      %p205 = scmp.eq.s32.totalorder %s48, 0
      %p206 = por %p204, %p205
      %s208 = sadd.s32 %s207, 1
      %p211 = scmp.eq.s32.totalorder %s42, 1
      %p212 = scmp.ne.s32.totalorder %s207, %s209
      %p213 = scmp.eq.s32.totalorder %s42, 0
      %p214 = por %p212, %p213
      %p215 = scmp.ne.s32.totalorder %s207, %s209
      %p216 = scmp.eq.s32.totalorder %s47, 1
      %p217 = por %p215, %p216
      %p218 = scmp.ne.s32.totalorder %s209, %s210
      %p219 = scmp.eq.s32.totalorder %s47, 0
      %p220 = por %p218, %p219
      %p221 = scmp.ne.s32.totalorder %s209, %s210
      %p222 = scmp.eq.s32.totalorder %s48, 1
      %p223 = por %p221, %p222
      %p225 = scmp.ne.s32.totalorder %s210, %s224
      %p226 = scmp.eq.s32.totalorder %s48, 0
      %p227 = por %p225, %p226
      %s229 = sadd.s32 %s228, 1
      %p232 = scmp.eq.s32.totalorder %s42, 1
      %p233 = scmp.ne.s32.totalorder %s228, %s230
      %p234 = scmp.eq.s32.totalorder %s42, 0
      %p235 = por %p233, %p234
      %p236 = scmp.ne.s32.totalorder %s228, %s230
      %p237 = scmp.eq.s32.totalorder %s47, 1
      %p238 = por %p236, %p237
      %p239 = scmp.ne.s32.totalorder %s230, %s231
      %p240 = scmp.eq.s32.totalorder %s47, 0
      %p241 = por %p239, %p240
      %p242 = scmp.ne.s32.totalorder %s230, %s231
      %p243 = scmp.eq.s32.totalorder %s48, 1
      %p244 = por %p242, %p243
      %p246 = scmp.ne.s32.totalorder %s231, %s245
      %p247 = scmp.eq.s32.totalorder %s48, 0
      %p248 = por %p246, %p247
      %s250 = sadd.s32 %s249, 1
      %p253 = scmp.eq.s32.totalorder %s42, 1
      %p254 = scmp.ne.s32.totalorder %s249, %s251
      %p255 = scmp.eq.s32.totalorder %s42, 0
      %p256 = por %p254, %p255
      %p257 = scmp.ne.s32.totalorder %s249, %s251
      %p258 = scmp.eq.s32.totalorder %s47, 1
      %p259 = por %p257, %p258
      %p260 = scmp.ne.s32.totalorder %s251, %s252
      %p261 = scmp.eq.s32.totalorder %s47, 0
      %p262 = por %p260, %p261
      %p263 = scmp.ne.s32.totalorder %s251, %s252
      %p264 = scmp.eq.s32.totalorder %s48, 1
      %p265 = por %p263, %p264
      %p267 = scmp.ne.s32.totalorder %s252, %s266
      %p268 = scmp.eq.s32.totalorder %s48, 0
      %p269 = por %p267, %p268
      %s271 = sadd.s32 %s270, 1
      %p274 = scmp.eq.s32.totalorder %s42, 1
      %p275 = scmp.ne.s32.totalorder %s270, %s272
      %p276 = scmp.eq.s32.totalorder %s42, 0
      %p277 = por %p275, %p276
      %p278 = scmp.ne.s32.totalorder %s270, %s272
      %p279 = scmp.eq.s32.totalorder %s47, 1
      %p280 = por %p278, %p279
      %p281 = scmp.ne.s32.totalorder %s272, %s273
      %p282 = scmp.eq.s32.totalorder %s47, 0
      %p283 = por %p281, %p282
      %p284 = scmp.ne.s32.totalorder %s272, %s273
      %p285 = scmp.eq.s32.totalorder %s48, 1
      %p286 = por %p284, %p285
      %p288 = scmp.ne.s32.totalorder %s273, %s287
      %p289 = scmp.eq.s32.totalorder %s48, 0
      %p290 = por %p288, %p289
      %s292 = sadd.s32 %s291, 1
      %p295 = scmp.eq.s32.totalorder %s42, 1
      %p296 = scmp.ne.s32.totalorder %s291, %s293
      %p297 = scmp.eq.s32.totalorder %s42, 0
      %p298 = por %p296, %p297
      %p299 = scmp.ne.s32.totalorder %s291, %s293
      %p300 = scmp.eq.s32.totalorder %s47, 1
      %p301 = por %p299, %p300
      %p302 = scmp.ne.s32.totalorder %s293, %s294
      %p303 = scmp.eq.s32.totalorder %s47, 0
      %p304 = por %p302, %p303
      %p305 = scmp.ne.s32.totalorder %s293, %s294
      %p306 = scmp.eq.s32.totalorder %s48, 1
      %p307 = por %p305, %p306
      %p309 = scmp.ne.s32.totalorder %s294, %s308
      %p310 = scmp.eq.s32.totalorder %s48, 0
      %p311 = por %p309, %p310
      %s313 = sadd.s32 %s312, 1
      %p316 = scmp.eq.s32.totalorder %s42, 1
      %p317 = scmp.ne.s32.totalorder %s312, %s314
      %p318 = scmp.eq.s32.totalorder %s42, 0
      %p319 = por %p317, %p318
      %p320 = scmp.ne.s32.totalorder %s312, %s314
      %p321 = scmp.eq.s32.totalorder %s47, 1
      %p322 = por %p320, %p321
      %p323 = scmp.ne.s32.totalorder %s314, %s315
      %p324 = scmp.eq.s32.totalorder %s47, 0
      %p325 = por %p323, %p324
      %p326 = scmp.ne.s32.totalorder %s314, %s315
      %p327 = scmp.eq.s32.totalorder %s48, 1
      %p328 = por %p326, %p327
      %p330 = scmp.ne.s32.totalorder %s315, %s329
      %p331 = scmp.eq.s32.totalorder %s48, 0
      %p332 = por %p330, %p331
      %s334 = sadd.s32 %s333, 1
      %p337 = scmp.eq.s32.totalorder %s42, 1
      %p338 = scmp.ne.s32.totalorder %s333, %s335
      %p339 = scmp.eq.s32.totalorder %s42, 0
      %p340 = por %p338, %p339
      %p341 = scmp.ne.s32.totalorder %s333, %s335
      %p342 = scmp.eq.s32.totalorder %s47, 1
      %p343 = por %p341, %p342
      %p344 = scmp.ne.s32.totalorder %s335, %s336
      %p345 = scmp.eq.s32.totalorder %s47, 0
      %p346 = por %p344, %p345
      %p347 = scmp.ne.s32.totalorder %s335, %s336
      %p348 = scmp.eq.s32.totalorder %s48, 1
      %p349 = por %p347, %p348
      %p351 = scmp.ne.s32.totalorder %s336, %s350
      %p352 = scmp.eq.s32.totalorder %s48, 0
      %p353 = por %p351, %p352
      %s355 = sadd.s32 %s354, 1
      %p358 = scmp.eq.s32.totalorder %s42, 1
      %p359 = scmp.ne.s32.totalorder %s354, %s356
      %p360 = scmp.eq.s32.totalorder %s42, 0
      %p361 = por %p359, %p360
      %p362 = scmp.ne.s32.totalorder %s354, %s356
      %p363 = scmp.eq.s32.totalorder %s47, 1
      %p364 = por %p362, %p363
      %p365 = scmp.ne.s32.totalorder %s356, %s357
      %p366 = scmp.eq.s32.totalorder %s47, 0
      %p367 = por %p365, %p366
      %p368 = scmp.ne.s32.totalorder %s356, %s357
      %p369 = scmp.eq.s32.totalorder %s48, 1
      %p370 = por %p368, %p369
      %p372 = scmp.ne.s32.totalorder %s357, %s371
      %p373 = scmp.eq.s32.totalorder %s48, 0
      %p374 = por %p372, %p373
      %s376 = sadd.s32 %s375, 1
      %p379 = scmp.eq.s32.totalorder %s42, 1
      %p380 = scmp.ne.s32.totalorder %s375, %s377
      %p381 = scmp.eq.s32.totalorder %s42, 0
      %p382 = por %p380, %p381
      %p383 = scmp.ne.s32.totalorder %s375, %s377
      %p384 = scmp.eq.s32.totalorder %s47, 1
      %p385 = por %p383, %p384
      %p386 = scmp.ne.s32.totalorder %s377, %s378
      %p387 = scmp.eq.s32.totalorder %s47, 0
      %p388 = por %p386, %p387
      %p389 = scmp.ne.s32.totalorder %s377, %s378
      %p390 = scmp.eq.s32.totalorder %s48, 1
      %p391 = por %p389, %p390
      %p393 = scmp.ne.s32.totalorder %s378, %s392
      %p394 = scmp.eq.s32.totalorder %s48, 0
      %p395 = por %p393, %p394
      %s397 = sadd.s32 %s396, 1
      %p400 = scmp.eq.s32.totalorder %s42, 1
      %p401 = scmp.ne.s32.totalorder %s396, %s398
      %p402 = scmp.eq.s32.totalorder %s42, 0
      %p403 = por %p401, %p402
      %p404 = scmp.ne.s32.totalorder %s396, %s398
      %p405 = scmp.eq.s32.totalorder %s47, 1
      %p406 = por %p404, %p405
      %p407 = scmp.ne.s32.totalorder %s398, %s399
      %p408 = scmp.eq.s32.totalorder %s47, 0
      %p409 = por %p407, %p408
      %p410 = scmp.ne.s32.totalorder %s398, %s399
      %p411 = scmp.eq.s32.totalorder %s48, 1
      %p412 = por %p410, %p411
      %p414 = scmp.ne.s32.totalorder %s399, %s413
      %p415 = scmp.eq.s32.totalorder %s48, 0
      %p416 = por %p414, %p415
      %s418 = sadd.s32 %s417, 1
      %p421 = scmp.eq.s32.totalorder %s42, 1
      %p422 = scmp.ne.s32.totalorder %s417, %s419
      %p423 = scmp.eq.s32.totalorder %s42, 0
      %p424 = por %p422, %p423
      %p425 = scmp.ne.s32.totalorder %s417, %s419
      %p426 = scmp.eq.s32.totalorder %s47, 1
      %p427 = por %p425, %p426
      %p428 = scmp.ne.s32.totalorder %s419, %s420
      %p429 = scmp.eq.s32.totalorder %s47, 0
      %p430 = por %p428, %p429
      %p431 = scmp.ne.s32.totalorder %s419, %s420
      %p432 = scmp.eq.s32.totalorder %s48, 1
      %p433 = por %p431, %p432
      %p435 = scmp.ne.s32.totalorder %s420, %s434
      %p436 = scmp.eq.s32.totalorder %s48, 0
      %p437 = por %p435, %p436
      %s438 = ssub.s32 %s42, %s49
      %p439 = scmp.eq.s32.totalorder %s438, 0
      %s441 = sadd.s32 %s440, 1
      %s442 = scalar_select %p439, %s440, %s441
      %p445 = pneg %p439
      %p446 = scmp.eq.s32.totalorder %s42, 1
      %p447 = por %p445, %p446
      %p448 = scmp.ne.s32.totalorder %s440, %s443
      %p449 = scmp.eq.s32.totalorder %s42, 0
      %p450 = por %p448, %p449
      %p451 = scmp.ne.s32.totalorder %s440, %s443
      %p452 = scmp.eq.s32.totalorder %s47, 1
      %p453 = por %p451, %p452
      %p454 = scmp.ne.s32.totalorder %s443, %s444
      %p455 = scmp.eq.s32.totalorder %s47, 0
      %p456 = por %p454, %p455
      %p457 = scmp.ne.s32.totalorder %s443, %s444
      %p458 = scmp.eq.s32.totalorder %s48, 1
      %p459 = por %p457, %p458
      %p461 = scmp.ne.s32.totalorder %s444, %s460
      %p462 = scmp.eq.s32.totalorder %s48, 0
      %p463 = por %p461, %p462
      %s464 = ssub.s32 %s42, %s49
      %p465 = scmp.eq.s32.totalorder %s464, 0
      %s467 = sadd.s32 %s466, 1
      %s468 = scalar_select %p465, %s466, %s467
      %p471 = pneg %p465
      %p472 = scmp.eq.s32.totalorder %s42, 1
      %p473 = por %p471, %p472
      %p474 = scmp.ne.s32.totalorder %s466, %s469
      %p475 = scmp.eq.s32.totalorder %s42, 0
      %p476 = por %p474, %p475
      %p477 = scmp.ne.s32.totalorder %s466, %s469
      %p478 = scmp.eq.s32.totalorder %s47, 1
      %p479 = por %p477, %p478
      %p480 = scmp.ne.s32.totalorder %s469, %s470
      %p481 = scmp.eq.s32.totalorder %s47, 0
      %p482 = por %p480, %p481
      %p483 = scmp.ne.s32.totalorder %s469, %s470
      %p484 = scmp.eq.s32.totalorder %s48, 1
      %p485 = por %p483, %p484
      %p487 = scmp.ne.s32.totalorder %s470, %s486
      %p488 = scmp.eq.s32.totalorder %s48, 0
      %p489 = por %p487, %p488
      %s490 = ssub.s32 %s42, %s49
      %p491 = scmp.eq.s32.totalorder %s490, 0
      %s493 = sadd.s32 %s492, 1
      %s494 = scalar_select %p491, %s492, %s493
      %p497 = pneg %p491
      %p498 = scmp.eq.s32.totalorder %s42, 1
      %p499 = por %p497, %p498
      %p500 = scmp.ne.s32.totalorder %s492, %s495
      %p501 = scmp.eq.s32.totalorder %s42, 0
      %p502 = por %p500, %p501
      %p503 = scmp.ne.s32.totalorder %s492, %s495
      %p504 = scmp.eq.s32.totalorder %s47, 1
      %p505 = por %p503, %p504
      %p506 = scmp.ne.s32.totalorder %s495, %s496
      %p507 = scmp.eq.s32.totalorder %s47, 0
      %p508 = por %p506, %p507
      %p509 = scmp.ne.s32.totalorder %s495, %s496
      %p510 = scmp.eq.s32.totalorder %s48, 1
      %p511 = por %p509, %p510
      %p513 = scmp.ne.s32.totalorder %s496, %s512
      %p514 = scmp.eq.s32.totalorder %s48, 0
      %p515 = por %p513, %p514
      %s516 = ssub.s32 %s42, %s49
      %p517 = scmp.eq.s32.totalorder %s516, 0
      %s519 = sadd.s32 %s518, 1
      %s520 = scalar_select %p517, %s518, %s519
      %p523 = pneg %p517
      %p524 = scmp.eq.s32.totalorder %s42, 1
      %p525 = por %p523, %p524
      %p526 = scmp.ne.s32.totalorder %s518, %s521
      %p527 = scmp.eq.s32.totalorder %s42, 0
      %p528 = por %p526, %p527
      %p529 = scmp.ne.s32.totalorder %s518, %s521
      %p530 = scmp.eq.s32.totalorder %s47, 1
      %p531 = por %p529, %p530
      %p532 = scmp.ne.s32.totalorder %s521, %s522
      %p533 = scmp.eq.s32.totalorder %s47, 0
      %p534 = por %p532, %p533
      %p535 = scmp.ne.s32.totalorder %s521, %s522
      %p536 = scmp.eq.s32.totalorder %s48, 1
      %p537 = por %p535, %p536
      %p539 = scmp.ne.s32.totalorder %s522, %s538
      %p540 = scmp.eq.s32.totalorder %s48, 0
      %p541 = por %p539, %p540
      %p542 = scmp.le.s32.totalorder 1, %s42
      %p543 = scmp.lt.s32.totalorder %s42, 3
      %p544 = pnand %p542, %p543
      %p545 = pneg %p544
      // Predicated region
      $region9: #{tpu_custom_call.1} parent=5 // pred_check
        _
      $region10: #{tpu_custom_call.1} parent=5 // pred_check_branch
        %547 = sbr.rel (%p544) target = $region12
      $region11: #{tpu_custom_call.1} parent=5 // pred_region
        %s548 = ssub.s32 %s42, 1
        // Predicated region
        $region13: #{tpu_custom_call.1} parent=11 // pred_check
          %p549 = pneg %p115
        $region14: #{tpu_custom_call.1} parent=11 // pred_check_branch
          %551 = sbr.rel (%p549) target = $region16
        $region15: #{tpu_custom_call.1} parent=11 // pred_region
          _
        $region16: #{tpu_custom_call.1} parent=11 // pred_fallthru
          _
        // Predicated region
        $region17: #{tpu_custom_call.1} parent=11 // pred_check
          %p552 = pneg %p136
        $region18: #{tpu_custom_call.1} parent=11 // pred_check_branch
          %554 = sbr.rel (%p552) target = $region20
        $region19: #{tpu_custom_call.1} parent=11 // pred_region
          _
        $region20: #{tpu_custom_call.1} parent=11 // pred_fallthru
          _
        // Predicated region
        $region21: #{tpu_custom_call.1} parent=11 // pred_check
          %p555 = pneg %p157
        $region22: #{tpu_custom_call.1} parent=11 // pred_check_branch
          %557 = sbr.rel (%p555) target = $region24
        $region23: #{tpu_custom_call.1} parent=11 // pred_region
          _
        $region24: #{tpu_custom_call.1} parent=11 // pred_fallthru
          _
        // Predicated region
        $region25: #{tpu_custom_call.1} parent=11 // pred_check
          %p558 = pneg %p178
        $region26: #{tpu_custom_call.1} parent=11 // pred_check_branch
          %560 = sbr.rel (%p558) target = $region28
        $region27: #{tpu_custom_call.1} parent=11 // pred_region
          _
        $region28: #{tpu_custom_call.1} parent=11 // pred_fallthru
          _
        // Predicated region
        $region29: #{tpu_custom_call.1} parent=11 // pred_check
          %p561 = pneg %p199
        $region30: #{tpu_custom_call.1} parent=11 // pred_check_branch
          %563 = sbr.rel (%p561) target = $region32
        $region31: #{tpu_custom_call.1} parent=11 // pred_region
          _
        $region32: #{tpu_custom_call.1} parent=11 // pred_fallthru
          _
        // Predicated region
        $region33: #{tpu_custom_call.1} parent=11 // pred_check
          %p564 = pneg %p220
        $region34: #{tpu_custom_call.1} parent=11 // pred_check_branch
          %566 = sbr.rel (%p564) target = $region36
        $region35: #{tpu_custom_call.1} parent=11 // pred_region
          _
        $region36: #{tpu_custom_call.1} parent=11 // pred_fallthru
          _
        // Predicated region
        $region37: #{tpu_custom_call.1} parent=11 // pred_check
          %p567 = pneg %p241
        $region38: #{tpu_custom_call.1} parent=11 // pred_check_branch
          %569 = sbr.rel (%p567) target = $region40
        $region39: #{tpu_custom_call.1} parent=11 // pred_region
          %s571 = ssub.s32 256, 256
          %572 = vsyncadd [#allocation6], %s571
          %s573 = sshll.u32 [#allocation5], 4
          %s574 = int_to_ptr.vmem [resolvable:$true] %s573
          %579 = dma.hbm_to_vmem [thread:$0]  %s8, 256, %s574, [#allocation6], 64, 64, 4
        $region40: #{tpu_custom_call.1} parent=11 // pred_fallthru
          _
        // Predicated region
        $region41: #{tpu_custom_call.1} parent=11 // pred_check
          %p580 = pneg %p262
        $region42: #{tpu_custom_call.1} parent=11 // pred_check_branch
          %582 = sbr.rel (%p580) target = $region44
        $region43: #{tpu_custom_call.1} parent=11 // pred_region
          _
        $region44: #{tpu_custom_call.1} parent=11 // pred_fallthru
          _
        // Predicated region
        $region45: #{tpu_custom_call.1} parent=11 // pred_check
          %p583 = pneg %p283
        $region46: #{tpu_custom_call.1} parent=11 // pred_check_branch
          %585 = sbr.rel (%p583) target = $region48
        $region47: #{tpu_custom_call.1} parent=11 // pred_region
          %s587 = ssub.s32 256, 256
          %588 = vsyncadd [#allocation6], %s587
          %s589 = sshll.u32 [#allocation7], 4
          %s590 = int_to_ptr.vmem [resolvable:$true] %s589
          %595 = dma.hbm_to_vmem [thread:$0]  %s10, 256, %s590, [#allocation6], 64, 64, 4
        $region48: #{tpu_custom_call.1} parent=11 // pred_fallthru
          _
        // Predicated region
        $region49: #{tpu_custom_call.1} parent=11 // pred_check
          %p596 = pneg %p304
        $region50: #{tpu_custom_call.1} parent=11 // pred_check_branch
          %598 = sbr.rel (%p596) target = $region52
        $region51: #{tpu_custom_call.1} parent=11 // pred_region
          _
        $region52: #{tpu_custom_call.1} parent=11 // pred_fallthru
          _
        // Predicated region
        $region53: #{tpu_custom_call.1} parent=11 // pred_check
          %p599 = pneg %p325
        $region54: #{tpu_custom_call.1} parent=11 // pred_check_branch
          %601 = sbr.rel (%p599) target = $region56
        $region55: #{tpu_custom_call.1} parent=11 // pred_region
          _
        $region56: #{tpu_custom_call.1} parent=11 // pred_fallthru
          _
        // Predicated region
        $region57: #{tpu_custom_call.1} parent=11 // pred_check
          %p602 = pneg %p346
        $region58: #{tpu_custom_call.1} parent=11 // pred_check_branch
          %604 = sbr.rel (%p602) target = $region60
        $region59: #{tpu_custom_call.1} parent=11 // pred_region
          _
        $region60: #{tpu_custom_call.1} parent=11 // pred_fallthru
          _
        // Predicated region
        $region61: #{tpu_custom_call.1} parent=11 // pred_check
          %p605 = pneg %p367
        $region62: #{tpu_custom_call.1} parent=11 // pred_check_branch
          %607 = sbr.rel (%p605) target = $region64
        $region63: #{tpu_custom_call.1} parent=11 // pred_region
          %s609 = ssub.s32 256, 256
          %610 = vsyncadd [#allocation9], %s609
          %s611 = sshll.u32 [#allocation8], 4
          %s612 = int_to_ptr.vmem [resolvable:$true] %s611
          %617 = dma.hbm_to_vmem [thread:$0]  %s14, 256, %s612, [#allocation9], 64, 64, 4
        $region64: #{tpu_custom_call.1} parent=11 // pred_fallthru
          _
        // Predicated region
        $region65: #{tpu_custom_call.1} parent=11 // pred_check
          %p618 = pneg %p388
        $region66: #{tpu_custom_call.1} parent=11 // pred_check_branch
          %620 = sbr.rel (%p618) target = $region68
        $region67: #{tpu_custom_call.1} parent=11 // pred_region
          _
        $region68: #{tpu_custom_call.1} parent=11 // pred_fallthru
          _
        // Predicated region
        $region69: #{tpu_custom_call.1} parent=11 // pred_check
          %p621 = pneg %p409
        $region70: #{tpu_custom_call.1} parent=11 // pred_check_branch
          %623 = sbr.rel (%p621) target = $region72
        $region71: #{tpu_custom_call.1} parent=11 // pred_region
          _
        $region72: #{tpu_custom_call.1} parent=11 // pred_fallthru
          _
        // Predicated region
        $region73: #{tpu_custom_call.1} parent=11 // pred_check
          %p624 = pneg %p430
        $region74: #{tpu_custom_call.1} parent=11 // pred_check_branch
          %626 = sbr.rel (%p624) target = $region76
        $region75: #{tpu_custom_call.1} parent=11 // pred_region
          _
        $region76: #{tpu_custom_call.1} parent=11 // pred_fallthru
          _
      $region12: #{tpu_custom_call.1} parent=5 // pred_fallthru
        _
      %p627 = scmp.lt.s32.totalorder %s42, 2
      // Predicated region
      $region77: #{tpu_custom_call.1} parent=5 // pred_check
        %p628 = pneg %p627
      $region78: #{tpu_custom_call.1} parent=5 // pred_check_branch
        %630 = sbr.rel (%p628) target = $region80
      $region79: #{tpu_custom_call.1} parent=5 // pred_region
        // Predicated region
        $region81: #{tpu_custom_call.1} parent=79 // pred_check
          %p631 = pneg %p62
        $region82: #{tpu_custom_call.1} parent=79 // pred_check_branch
          %633 = sbr.rel (%p631) target = $region84
        $region83: #{tpu_custom_call.1} parent=79 // pred_region
          %p634 = scmp.lt.s32.totalorder %s42, 1
          %s635 = scalar_select %p634, %s42, 1
          %s636 = smul.addr %s635, 2
          %s637 = smul.addr %s636, 8
          %s638 = scalar_lea.vmem %s0, %s637
        $region84: #{tpu_custom_call.1} parent=79 // pred_fallthru
          _
        // Predicated region
        $region85: #{tpu_custom_call.1} parent=79 // pred_check
          %p639 = pneg %p88
        $region86: #{tpu_custom_call.1} parent=79 // pred_check_branch
          %641 = sbr.rel (%p639) target = $region88
        $region87: #{tpu_custom_call.1} parent=79 // pred_region
          %s642 = sand.u32 %s78, 1
          %s643 = scalar_lea.sflag [#allocation3], %s642
          %s644 = sand.u32 %s78, 1
          %s645 = smul.addr %s644, 16
          %s646 = scalar_lea.vmem [#allocation2], %s645
          %s648 = ssub.s32 256, 256
          %649 = vsyncadd %s643, %s648
          %s650 = smul.addr %s42, 2
          %s651 = smul.addr %s650, 128
          %s652 = scalar_lea.hbm %s1, %s651
          %s653 = sshll.u32 %s646, 4
          %s654 = int_to_ptr.vmem [resolvable:$true] %s653
          %659 = dma.hbm_to_vmem [thread:$0]  %s652, 256, %s654, %s643, 128, 128, 8
        $region88: #{tpu_custom_call.1} parent=79 // pred_fallthru
          _
      $region80: #{tpu_custom_call.1} parent=5 // pred_fallthru
        _
      %p660 = scmp.le.s32.totalorder 1, %s42
      %p661 = scmp.lt.s32.totalorder %s42, 3
      %p662 = pnand %p660, %p661
      %p663 = pneg %p662
      // Predicated region
      $region89: #{tpu_custom_call.1} parent=5 // pred_check
        _
      $region90: #{tpu_custom_call.1} parent=5 // pred_check_branch
        %665 = sbr.rel (%p662) target = $region92
      $region91: #{tpu_custom_call.1} parent=5 // pred_region
        %s666 = ssub.s32 %s42, 1
        %s667 = sand.u32 %s81, 1
        %s668 = scalar_lea.sflag [#allocation3], %s667
        %s669 = sand.u32 %s81, 1
        %s670 = smul.addr %s669, 16
        %s671 = scalar_lea.vmem [#allocation2], %s670
        // Predicated region
        $region93: #{tpu_custom_call.1} parent=91 // pred_check
          %p672 = pneg %p94
        $region94: #{tpu_custom_call.1} parent=91 // pred_check_branch
          %674 = sbr.rel (%p672) target = $region96
        $region95: #{tpu_custom_call.1} parent=91 // pred_region
          %675 = dma.done %s668, 256
        $region96: #{tpu_custom_call.1} parent=91 // pred_fallthru
          _
        // Predicated region
        $region97: #{tpu_custom_call.1} parent=91 // pred_check
          %p676 = pneg %p241
        $region98: #{tpu_custom_call.1} parent=91 // pred_check_branch
          %678 = sbr.rel (%p676) target = $region100
        $region99: #{tpu_custom_call.1} parent=91 // pred_region
          %679 = dma.done [#allocation6], 256
        $region100: #{tpu_custom_call.1} parent=91 // pred_fallthru
          _
        // Predicated region
        $region101: #{tpu_custom_call.1} parent=91 // pred_check
          %p680 = pneg %p283
        $region102: #{tpu_custom_call.1} parent=91 // pred_check_branch
          %682 = sbr.rel (%p680) target = $region104
        $region103: #{tpu_custom_call.1} parent=91 // pred_region
          %683 = dma.done [#allocation6], 256
        $region104: #{tpu_custom_call.1} parent=91 // pred_fallthru
          _
        // Predicated region
        $region105: #{tpu_custom_call.1} parent=91 // pred_check
          %p684 = pneg %p367
        $region106: #{tpu_custom_call.1} parent=91 // pred_check_branch
          %686 = sbr.rel (%p684) target = $region108
        $region107: #{tpu_custom_call.1} parent=91 // pred_region
          %687 = dma.done [#allocation9], 256
        $region108: #{tpu_custom_call.1} parent=91 // pred_fallthru
          _
        %p688 = scmp.lt.s32.totalorder %s47, 1
        %s689 = scalar_select %p688, %s47, 1
        %s690 = smul.addr %s689, 2
        %s691 = smul.addr %s690, 8
        %s692 = scalar_lea.vmem %s0, %s691
        %p693 = pneg %p68
        %p694 = pneg %p65
        %s695 = sand.u32 %s81, 1
        %s696 = scalar_lea.sflag [#allocation3], %s695
        %s697 = sand.u32 %s81, 1
        %s698 = smul.addr %s697, 16
        %s699 = scalar_lea.vmem [#allocation2], %s698
        %p700 = pneg %p94
        %p701 = pneg %p91
        %p702 = pneg %p115
        %p703 = pneg %p112
        %p704 = pneg %p136
        %p705 = pneg %p133
        %p706 = pneg %p157
        %p707 = pneg %p154
        %p708 = pneg %p178
        %p709 = pneg %p175
        %p710 = pneg %p199
        %p711 = pneg %p196
        %p712 = pneg %p220
        %p713 = pneg %p217
        %p714 = pneg %p241
        %p715 = pneg %p238
        %p716 = pneg %p262
        %p717 = pneg %p259
        %p718 = pneg %p283
        %p719 = pneg %p280
        %p720 = pneg %p304
        %p721 = pneg %p301
        %p722 = pneg %p325
        %p723 = pneg %p322
        %p724 = pneg %p346
        %p725 = pneg %p343
        %p726 = pneg %p367
        %p727 = pneg %p364
        %p728 = pneg %p388
        %p729 = pneg %p385
        %p730 = pneg %p409
        %p731 = pneg %p406
        %p732 = pneg %p430
        %p733 = pneg %p427
        %p734 = pneg %p456
        %p735 = pneg %p453
        %s736 = sand.u32 %s443, 1
        %s737 = scalar_lea.sflag [#allocation4], %s736
        %s738 = sand.u32 %s443, 1
        %s739 = smul.addr %s738, 16
        %s740 = scalar_lea.vmem [#allocation10], %s739
        %p741 = pneg %p482
        %p742 = pneg %p479
        %s743 = sand.u32 %s47, 1
        %s744 = scalar_lea.sflag [#allocation12], %s743
        %s745 = sand.u32 %s469, 1
        %s746 = smul.addr %s745, 16
        %s747 = scalar_lea.vmem [#allocation11], %s746
        %p748 = pneg %p508
        %p749 = pneg %p505
        %s750 = sand.u32 %s47, 1
        %s751 = scalar_lea.sflag [#allocation12], %s750
        %s752 = sand.u32 %s495, 1
        %s753 = smul.addr %s752, 16
        %s754 = scalar_lea.vmem [#allocation13], %s753
        %p755 = pneg %p534
        %p756 = pneg %p531
        %s757 = sand.u32 %s521, 1
        %s758 = scalar_lea.sflag [#allocation15], %s757
        %s759 = sand.u32 %s521, 1
        %s760 = smul.addr %s759, 64
        %s761 = scalar_lea.vmem [#allocation14], %s760
        %p762 = scmp.lt.s32.totalorder %s47, 1
        %s763 = scalar_select %p762, %s47, 1
        %s764 = smul.addr %s763, 2
        %s765 = smul.addr %s764, 8
        %s766 = scalar_lea.vmem %s0, %s765
        %v768 = vld [vmem:[%s766] sm:$0xff]
        %v769 = vld [vmem:[%s766 + $0x8] sm:$0xff]
        %v770 = vld [vmem:[%s671] sm:$0xff]
        %v771 = vld [vmem:[%s671 + $0x8] sm:$0xff]
        %v772 = vlaneseq
        %v773 = vshrl.u32 %v772, 7
        %v774 = vadd.s32 %v773, 8
        %v775 = vlaneseq
        %v776 = vand.u32 %v775, 127
        %v777 = vadd.s32 %v773, 1
        %v778 = vadd.s32 %v774, 1
        %vm779 = vcmp.eq.s32.totalorder %v776, %v777
        %vm780 = vcmp.eq.s32.totalorder %v776, %v778
        %v781 = vsub.s32 %v773, 1
        %v782 = vsub.s32 %v774, 1
        %vm783 = vcmp.eq.s32.totalorder %v776, %v781
        %vm784 = vcmp.eq.s32.totalorder %v776, %v782
        %vm785 = vcmp.eq.s32.totalorder %v776, %v773
        %vm786 = vcmp.eq.s32.totalorder %v776, %v774
        %v787 = vld [vmem:[%s2] sm:$0x1]
        %v788 = vld [vmem:[%s3] sm:$0x1]
        %vm789 = vcmask 261120
        %v790 = vsel %vm789, %v768, 0.0
        %791 = vadd.xlane.f32.xlu0 %v790
        %v792 = vpop.xlane.xlu0 %791
        %v793 = vsel %vm789, %v769, 0.0
        %794 = vadd.xlane.f32.xlu0 %v793
        %v795 = vpop.xlane.xlu0 %794
        %v796 = vrcp.pop 32.0
        %v797 = vmul.f32 %v792, %v796
        %v798 = vmul.f32 %v795, %v796
        %v799 = vsub.f32 %v768, %v797
        %v800 = vsub.f32 %v769, %v798
        %v801 = vmul.f32 %v799, %v799
        %v802 = vmul.f32 %v800, %v800
        %v803 = vsel %vm789, %v801, 0.0
        %804 = vadd.xlane.f32.xlu0 %v803
        %v805 = vpop.xlane.xlu0 %804
        %v806 = vsel %vm789, %v802, 0.0
        %807 = vadd.xlane.f32.xlu0 %v806
        %v808 = vpop.xlane.xlu0 %807
        %v809 = vmul.f32 %v805, %v796
        %v810 = vmul.f32 %v808, %v796
        %v811 = vadd.f32 %v809, 1e-05
        %v812 = vadd.f32 %v810, 1e-05
        %v813 = vrsqrt.pop %v811
        %v814 = vrsqrt.pop %v812
        %v815 = vmul.f32 %v799, %v813
        %v816 = vmul.f32 %v800, %v814
        %v818 = vlaneseq
        %v819 = vshrl.u32 %v818, 7
        %v820 = vsub.s32 0, %v819
        %v821 = vrot.slane %v787, %v820
        %v823 = vmul.f32 %v815, %v821
        %v824 = vmul.f32 %v816, %v821
        %v826 = vlaneseq
        %v827 = vshrl.u32 %v826, 7
        %v828 = vsub.s32 0, %v827
        %v829 = vrot.slane %v788, %v828
        %v831 = vadd.f32 %v823, %v829
        %v832 = vadd.f32 %v824, %v829
        %v833 = vpack.c.bf16 %v832, %v831
        %v834 = vld [vmem:[%s4] sm:$0xf]
        %v835 = vld [vmem:[%s4 + $0x4] sm:$0xf]
        %v836 = vld [vmem:[%s4 + $0x8] sm:$0xf]
        %v837 = vld [vmem:[%s4 + $0xc] sm:$0xf]
        %v838 = vld [vmem:[%s5] sm:$0x1]
        %v840 = vlaneseq
        %v841 = vshrl.u32 %v840, 7
        %v842 = vsub.s32 0, %v841
        %v843 = vrot.slane %v838, %v842
        %v849 = vunpack.c.l.b16 %v834
        %v850 = vunpack.c.l.b16 %v835
        %v851 = vunpack.c.l.b16 %v836
        %v852 = vunpack.c.l.b16 %v837
        %v853 = vpack.c.b16 %v850, %v849
        %v854 = vpack.c.b16 %v852, %v851
        %v858 = vsel %vm789, %v833, 0
        %860 = vmatprep.subr.bf16.mxu0 0
        %861 = vmatpush1.bf16.msra.mxu0 0
        %862 = vmatprep.subr.bf16.mxu0 0
        %863 = vmatpush1.bf16.msra.mxu0 0
        %864 = vmatprep.subr.bf16.mxu0 0
        %865 = vmatpush1.bf16.msra.mxu0 0
        %866 = vmatprep.subr.bf16.mxu0 0
        %867 = vmatpush1.bf16.msra.mxu0 0
        %868 = vmatprep.subr.bf16.mxu0 0
        %869 = vmatpush1.bf16.msra.mxu0 0
        %870 = vmatprep.subr.bf16.mxu0 0
        %871 = vmatpush1.bf16.msra.mxu0 0
        %872 = vmatprep.subr.bf16.mxu0 0
        %873 = vmatpush1.bf16.msra.mxu0 %v854
        %874 = vmatprep.subr.bf16.mxu0 0
        %875 = vmatpush1.bf16.msra.mxu0 %v853
        %876 = vmatprep.subr.bf16.mxu0 0
        %877 = vmatpush2.bf16.msra.mxu0 0
        %878 = vmatprep.subr.bf16.mxu0 0
        %879 = vmatpush2.bf16.msra.mxu0 0
        %880 = vmatprep.subr.bf16.mxu0 0
        %881 = vmatpush2.bf16.msra.mxu0 0
        %882 = vmatprep.subr.bf16.mxu0 0
        %883 = vmatpush2.bf16.msra.mxu0 0
        %884 = vmatprep.subr.bf16.mxu0 0
        %885 = vmatpush2.bf16.msra.mxu0 0
        %886 = vmatprep.subr.bf16.mxu0 0
        %887 = vmatpush2.bf16.msra.mxu0 0
        %888 = vmatprep.subr.bf16.mxu0 0
        %889 = vmatpush2.bf16.msra.mxu0 0
        %890 = vmatprep.subr.bf16.mxu0 0
        %891 = vmatpush2.bf16.msra.mxu0 0
        %892 = vmatprep.mubr.bf16.mxu0 0
        %893 = vmatmul.mubr.bf16.gmra.mxu0 %v858
        %v894 = vpop.f32.mrf.mxu0
        %v895 = vadd.f32 %v843, %v894
        %v896 = vpop.f32.mrf.mxu0
        %v897 = vpop.f32.mrf.mxu0
        %v898 = vadd.f32 %v843, %v897
        %v899 = vpop.f32.mrf.mxu0
        %900 = vdwg.mxu0
        %903 = vrot.lane.b32.xlu0 %v895, 96
        %v904 = vpop.permute.xlu0 %903
        %905 = vrot.lane.b32.xlu0 %v898, 96
        %v906 = vpop.permute.xlu0 %905
        %v909 = vrot.slane %v904, 1
        %v910 = vrot.slane %v906, 1
        %vm911 = vcmp.lt.s32.totalorder %v773, 7
        %v912 = vsel %vm911, %v909, %v910
        %v913 = vsel %vm911, %v910, %v909
        %v914 = vrot.slane %v904, 7
        %v915 = vrot.slane %v906, 7
        %vm916 = vcmp.lt.s32.totalorder %v773, 1
        %v917 = vsel %vm916, %v914, %v915
        %v918 = vsel %vm916, %v915, %v914
        %v919 = vmul.f32 %v895, %v912
        %v920 = vmul.f32 %v898, %v913
        %v921 = vsel %vm789, %v919, 0.0
        %922 = vadd.xlane.f32.xlu0 %v921
        %v923 = vpop.xlane.xlu0 %922
        %v924 = vsel %vm789, %v920, 0.0
        %925 = vadd.xlane.f32.xlu0 %v924
        %v926 = vpop.xlane.xlu0 %925
        %v927 = vmul.f32 %v923, 0.03125
        %v928 = vmul.f32 %v926, 0.03125
        %v929 = vmul.f32 %v895, %v918
        %v930 = vmul.f32 %v898, %v917
        %v931 = vsel %vm789, %v929, 0.0
        %932 = vadd.xlane.f32.xlu0 %v931
        %v933 = vpop.xlane.xlu0 %932
        %v934 = vsel %vm789, %v930, 0.0
        %935 = vadd.xlane.f32.xlu0 %v934
        %v936 = vpop.xlane.xlu0 %935
        %v937 = vmul.f32 %v933, 0.03125
        %v938 = vmul.f32 %v936, 0.03125
        %vm939 = vcmp.eq.s32.totalorder %v773, 15
        %vm940 = vcmp.eq.s32.totalorder %v774, 15
        %v941 = vsel %vm939, -1e+09, %v927
        %v942 = vsel %vm940, -1e+09, %v928
        %vm943 = vcmp.eq.s32.totalorder %v773, 0
        %vm944 = vcmp.eq.s32.totalorder %v774, 0
        %v945 = vsel %vm943, -1e+09, %v937
        %v946 = vsel %vm944, -1e+09, %v938
        %v947 = vmax.f32 %v941, %v945
        %v948 = vmax.f32 %v942, %v946
        %v949 = vsub.f32 %v941, %v947
        %v950 = vsub.f32 %v942, %v948
        %v951 = vmul.f32 %v949, 1.442695
        %v952 = vpow.pop %v951
        %v953 = vmul.f32 %v950, 1.442695
        %v954 = vpow.pop %v953
        %v955 = vsub.f32 %v945, %v947
        %v956 = vsub.f32 %v946, %v948
        %v957 = vmul.f32 %v955, 1.442695
        %v958 = vpow.pop %v957
        %v959 = vmul.f32 %v956, 1.442695
        %v960 = vpow.pop %v959
        %v961 = vadd.f32 %v952, %v958
        %v962 = vadd.f32 %v954, %v960
        %v963 = vrcp.pop %v961
        %v964 = vmul.f32 1.0, %v963
        %v965 = vrcp.pop %v962
        %v966 = vmul.f32 1.0, %v965
        %v967 = vmul.f32 %v952, %v964
        %v968 = vmul.f32 %v954, %v966
        %v969 = vmul.f32 %v958, %v964
        %v970 = vmul.f32 %v960, %v966
        %v971 = vsel %vm779, 1, 0
        %v972 = vsel %vm780, 1, 0
        %v973 = vcvt.s32.f32 %v971
        %v974 = vcvt.s32.f32 %v972
        %v975 = vsel %vm783, 1, 0
        %v976 = vsel %vm784, 1, 0
        %v977 = vcvt.s32.f32 %v975
        %v978 = vcvt.s32.f32 %v976
        %vm979 = vcmask 130048
        %v981 = vsel %vm979, %v973, 0
        %v984 = vsel %vm979, %v974, 0
        %986 = vmatprep.subr.mxu0 0.0
        %987 = vmatpush1.msra.mxu0 0.0
        %988 = vmatprep.subr.mxu0 0.0
        %989 = vmatpush1.msra.mxu0 0.0
        %990 = vmatprep.subr.mxu0 0.0
        %991 = vmatpush1.msra.mxu0 0.0
        %992 = vmatprep.subr.mxu0 0.0
        %993 = vmatpush1.msra.mxu0 0.0
        %994 = vmatprep.subr.mxu0 0.0
        %995 = vmatpush1.msra.mxu0 0.0
        %996 = vmatprep.subr.mxu0 0.0
        %997 = vmatpush1.msra.mxu0 0.0
        %998 = vmatprep.subr.mxu0 0.0
        %999 = vmatpush1.msra.mxu0 0.0
        %1000 = vmatprep.subr.mxu0 0.0
        %1001 = vmatpush1.msra.mxu0 0.0
        %1002 = vmatprep.subr.mxu0 0.0
        %1003 = vmatpush1.msra.mxu0 0.0
        %1004 = vmatprep.subr.mxu0 0.0
        %1005 = vmatpush1.msra.mxu0 0.0
        %1006 = vmatprep.subr.mxu0 0.0
        %1007 = vmatpush1.msra.mxu0 0.0
        %1008 = vmatprep.subr.mxu0 0.0
        %1009 = vmatpush1.msra.mxu0 0.0
        %1010 = vmatprep.subr.mxu0 0.0
        %1011 = vmatpush1.msra.mxu0 0.0
        %1012 = vmatprep.subr.mxu0 0.0
        %1013 = vmatpush1.msra.mxu0 0.0
        %1014 = vmatprep.subr.mxu0 0.0
        %1015 = vmatpush1.msra.mxu0 %v970
        %1016 = vmatprep.subr.mxu0 0.0
        %1017 = vmatpush1.msra.mxu0 %v969
        %1018 = vmatprep.subr.mxu0 0.0
        %1019 = vmatpush2.msra.mxu0 0.0
        %1020 = vmatprep.subr.mxu0 0.0
        %1021 = vmatpush2.msra.mxu0 0.0
        %1022 = vmatprep.subr.mxu0 0.0
        %1023 = vmatpush2.msra.mxu0 0.0
        %1024 = vmatprep.subr.mxu0 0.0
        %1025 = vmatpush2.msra.mxu0 0.0
        %1026 = vmatprep.subr.mxu0 0.0
        %1027 = vmatpush2.msra.mxu0 0.0
        %1028 = vmatprep.subr.mxu0 0.0
        %1029 = vmatpush2.msra.mxu0 0.0
        %1030 = vmatprep.subr.mxu0 0.0
        %1031 = vmatpush2.msra.mxu0 0.0
        %1032 = vmatprep.subr.mxu0 0.0
        %1033 = vmatpush2.msra.mxu0 0.0
        %1034 = vmatprep.subr.mxu0 0.0
        %1035 = vmatpush2.msra.mxu0 0.0
        %1036 = vmatprep.subr.mxu0 0.0
        %1037 = vmatpush2.msra.mxu0 0.0
        %1038 = vmatprep.subr.mxu0 0.0
        %1039 = vmatpush2.msra.mxu0 0.0
        %1040 = vmatprep.subr.mxu0 0.0
        %1041 = vmatpush2.msra.mxu0 0.0
        %1042 = vmatprep.subr.mxu0 0.0
        %1043 = vmatpush2.msra.mxu0 0.0
        %1044 = vmatprep.subr.mxu0 0.0
        %1045 = vmatpush2.msra.mxu0 0.0
        %1046 = vmatprep.subr.mxu0 0.0
        %1047 = vmatpush2.msra.mxu0 0.0
        %1048 = vmatprep.subr.mxu0 0.0
        %1049 = vmatpush2.msra.mxu0 0.0
        %1050 = vmatprep.mubr.f32.mxu0 0.0
        %1051 = vmatmul.mubr.f32.gmra.mxu0 %v981
        %v1052 = vpop.f32.mrf.mxu0
        %v1053 = vadd.f32 0.0, %v1052
        %v1054 = vpop.f32.mrf.mxu0
        %1055 = vmatprep.mubr.f32.mxu0 0.0
        %1056 = vmatmul.mubr.f32.gmra.mxu0 %v984
        %v1057 = vpop.f32.mrf.mxu0
        %v1058 = vadd.f32 0.0, %v1057
        %v1059 = vpop.f32.mrf.mxu0
        %1060 = vdwg.mxu0
        %v1061 = vmul.f32 %v967, %v1053
        %v1062 = vmul.f32 %v968, %v1058
        %v1063 = vadd.f32 %v1061, 1e-09
        %v1064 = vadd.f32 %v1062, 1e-09
        %v1065 = vrsqrt.pop %v1063
        %v1066 = vmul.f32 %v1063, %v1065
        %vm1067 = vcmp.eq.f32.partialorder %v1063, inf
        %v1068 = vsel %vm1067, %v1063, %v1066
        %vm1069 = vcmp.eq.f32.partialorder %v1063, 0.0
        %v1070 = vand.u32 %v1063, 2147483648
        %v1071 = vsel %vm1069, %v1070, %v1068
        %v1072 = vrsqrt.pop %v1064
        %v1073 = vmul.f32 %v1064, %v1072
        %vm1074 = vcmp.eq.f32.partialorder %v1064, inf
        %v1075 = vsel %vm1074, %v1064, %v1073
        %vm1076 = vcmp.eq.f32.partialorder %v1064, 0.0
        %v1077 = vand.u32 %v1064, 2147483648
        %v1078 = vsel %vm1076, %v1077, %v1075
        %v1080 = vsel %vm979, %v977, 0
        %v1083 = vsel %vm979, %v978, 0
        %1085 = vmatprep.subr.mxu0 0.0
        %1086 = vmatpush1.msra.mxu0 0.0
        %1087 = vmatprep.subr.mxu0 0.0
        %1088 = vmatpush1.msra.mxu0 0.0
        %1089 = vmatprep.subr.mxu0 0.0
        %1090 = vmatpush1.msra.mxu0 0.0
        %1091 = vmatprep.subr.mxu0 0.0
        %1092 = vmatpush1.msra.mxu0 0.0
        %1093 = vmatprep.subr.mxu0 0.0
        %1094 = vmatpush1.msra.mxu0 0.0
        %1095 = vmatprep.subr.mxu0 0.0
        %1096 = vmatpush1.msra.mxu0 0.0
        %1097 = vmatprep.subr.mxu0 0.0
        %1098 = vmatpush1.msra.mxu0 0.0
        %1099 = vmatprep.subr.mxu0 0.0
        %1100 = vmatpush1.msra.mxu0 0.0
        %1101 = vmatprep.subr.mxu0 0.0
        %1102 = vmatpush1.msra.mxu0 0.0
        %1103 = vmatprep.subr.mxu0 0.0
        %1104 = vmatpush1.msra.mxu0 0.0
        %1105 = vmatprep.subr.mxu0 0.0
        %1106 = vmatpush1.msra.mxu0 0.0
        %1107 = vmatprep.subr.mxu0 0.0
        %1108 = vmatpush1.msra.mxu0 0.0
        %1109 = vmatprep.subr.mxu0 0.0
        %1110 = vmatpush1.msra.mxu0 0.0
        %1111 = vmatprep.subr.mxu0 0.0
        %1112 = vmatpush1.msra.mxu0 0.0
        %1113 = vmatprep.subr.mxu0 0.0
        %1114 = vmatpush1.msra.mxu0 %v1078
        %1115 = vmatprep.subr.mxu0 0.0
        %1116 = vmatpush1.msra.mxu0 %v1071
        %1117 = vmatprep.subr.mxu0 0.0
        %1118 = vmatpush2.msra.mxu0 0.0
        %1119 = vmatprep.subr.mxu0 0.0
        %1120 = vmatpush2.msra.mxu0 0.0
        %1121 = vmatprep.subr.mxu0 0.0
        %1122 = vmatpush2.msra.mxu0 0.0
        %1123 = vmatprep.subr.mxu0 0.0
        %1124 = vmatpush2.msra.mxu0 0.0
        %1125 = vmatprep.subr.mxu0 0.0
        %1126 = vmatpush2.msra.mxu0 0.0
        %1127 = vmatprep.subr.mxu0 0.0
        %1128 = vmatpush2.msra.mxu0 0.0
        %1129 = vmatprep.subr.mxu0 0.0
        %1130 = vmatpush2.msra.mxu0 0.0
        %1131 = vmatprep.subr.mxu0 0.0
        %1132 = vmatpush2.msra.mxu0 0.0
        %1133 = vmatprep.subr.mxu0 0.0
        %1134 = vmatpush2.msra.mxu0 0.0
        %1135 = vmatprep.subr.mxu0 0.0
        %1136 = vmatpush2.msra.mxu0 0.0
        %1137 = vmatprep.subr.mxu0 0.0
        %1138 = vmatpush2.msra.mxu0 0.0
        %1139 = vmatprep.subr.mxu0 0.0
        %1140 = vmatpush2.msra.mxu0 0.0
        %1141 = vmatprep.subr.mxu0 0.0
        %1142 = vmatpush2.msra.mxu0 0.0
        %1143 = vmatprep.subr.mxu0 0.0
        %1144 = vmatpush2.msra.mxu0 0.0
        %1145 = vmatprep.subr.mxu0 0.0
        %1146 = vmatpush2.msra.mxu0 0.0
        %1147 = vmatprep.subr.mxu0 0.0
        %1148 = vmatpush2.msra.mxu0 0.0
        %1149 = vmatprep.mubr.f32.mxu0 0.0
        %1150 = vmatmul.mubr.f32.gmra.mxu0 %v1080
        %v1151 = vpop.f32.mrf.mxu0
        %v1152 = vadd.f32 0.0, %v1151
        %v1153 = vpop.f32.mrf.mxu0
        %1154 = vmatprep.mubr.f32.mxu0 0.0
        %1155 = vmatmul.mubr.f32.gmra.mxu0 %v1083
        %v1156 = vpop.f32.mrf.mxu0
        %v1157 = vadd.f32 0.0, %v1156
        %v1158 = vpop.f32.mrf.mxu0
        %1159 = vdwg.mxu0
        %1161 = vset.pattern.permute.xlu0 0
        %1162 = vperm.xlu0 %1161, %v1152
        %v1163 = vpop.permute.xlu0 %1162
        %1166 = vset.pattern.permute.xlu0 0
        %1167 = vperm.xlu0 %1166, %v1157
        %v1168 = vpop.permute.xlu0 %1167
        %v1170 = vsel %vm783, %v1163, 3.1622778e-05
        %v1171 = vsel %vm784, %v1168, 3.1622778e-05
        %1173 = vset.pattern.permute.xlu0 0
        %1174 = vperm.xlu0 %1173, %v1071
        %v1175 = vpop.permute.xlu0 %1174
        %1178 = vset.pattern.permute.xlu0 0
        %1179 = vperm.xlu0 %1178, %v1078
        %v1180 = vpop.permute.xlu0 %1179
        %v1182 = vsel %vm779, %v1175, %v1170
        %v1183 = vsel %vm780, %v1180, %v1171
        %v1184 = vsub.f32 1.0, %v770
        %v1185 = vsub.f32 1.0, %v771
        %v1186 = vmul.f32 %v1184, %v1182
        %v1187 = vmul.f32 %v1185, %v1183
        %v1188 = vadd.f32 %v770, %v1186
        %v1189 = vadd.f32 %v771, %v1187
        %v1190 = vsel %vm779, %v770, 0.0
        %v1191 = vsel %vm780, %v771, 0.0
        %v1192 = vsel %vm979, %v1190, 0.0
        %1193 = vadd.xlane.f32.xlu0 %v1192
        %v1194 = vpop.xlane.xlu0 %1193
        %v1195 = vsel %vm979, %v1191, 0.0
        %1196 = vadd.xlane.f32.xlu0 %v1195
        %v1197 = vpop.xlane.xlu0 %1196
        %v1198 = vsub.f32 1.0, %v1194
        %v1199 = vsub.f32 1.0, %v1197
        %v1200 = vmul.f32 %v1198, %v1071
        %v1201 = vmul.f32 %v1199, %v1078
        %v1202 = vadd.f32 %v1194, %v1200
        %v1203 = vadd.f32 %v1197, %v1201
        %v1204 = vadd.f32 %v1202, 1e-09
        %v1205 = vadd.f32 %v1203, 1e-09
        %v1206 = vlog2.pop %v1204
        %v1207 = vmul.f32 %v1206, 0.6931472
        %v1208 = vlog2.pop %v1205
        %v1209 = vmul.f32 %v1208, 0.6931472
        %vm1210 = vcmp.lt.s32.totalorder %v776, %v773
        %vm1211 = vcmp.lt.s32.totalorder %v776, %v774
        %v1212 = vsel %vm1210, 1, 0
        %v1213 = vsel %vm1211, 1, 0
        %v1214 = vcvt.s32.f32 %v1212
        %v1215 = vcvt.s32.f32 %v1213
        %v1217 = vsel %vm979, %v1214, 0
        %v1220 = vsel %vm979, %v1215, 0
        %1222 = vmatprep.subr.mxu0 0.0
        %1223 = vmatpush1.msra.mxu0 0.0
        %1224 = vmatprep.subr.mxu0 0.0
        %1225 = vmatpush1.msra.mxu0 0.0
        %1226 = vmatprep.subr.mxu0 0.0
        %1227 = vmatpush1.msra.mxu0 0.0
        %1228 = vmatprep.subr.mxu0 0.0
        %1229 = vmatpush1.msra.mxu0 0.0
        %1230 = vmatprep.subr.mxu0 0.0
        %1231 = vmatpush1.msra.mxu0 0.0
        %1232 = vmatprep.subr.mxu0 0.0
        %1233 = vmatpush1.msra.mxu0 0.0
        %1234 = vmatprep.subr.mxu0 0.0
        %1235 = vmatpush1.msra.mxu0 0.0
        %1236 = vmatprep.subr.mxu0 0.0
        %1237 = vmatpush1.msra.mxu0 0.0
        %1238 = vmatprep.subr.mxu0 0.0
        %1239 = vmatpush1.msra.mxu0 0.0
        %1240 = vmatprep.subr.mxu0 0.0
        %1241 = vmatpush1.msra.mxu0 0.0
        %1242 = vmatprep.subr.mxu0 0.0
        %1243 = vmatpush1.msra.mxu0 0.0
        %1244 = vmatprep.subr.mxu0 0.0
        %1245 = vmatpush1.msra.mxu0 0.0
        %1246 = vmatprep.subr.mxu0 0.0
        %1247 = vmatpush1.msra.mxu0 0.0
        %1248 = vmatprep.subr.mxu0 0.0
        %1249 = vmatpush1.msra.mxu0 0.0
        %1250 = vmatprep.subr.mxu0 0.0
        %1251 = vmatpush1.msra.mxu0 %v1209
        %1252 = vmatprep.subr.mxu0 0.0
        %1253 = vmatpush1.msra.mxu0 %v1207
        %1254 = vmatprep.subr.mxu0 0.0
        %1255 = vmatpush2.msra.mxu0 0.0
        %1256 = vmatprep.subr.mxu0 0.0
        %1257 = vmatpush2.msra.mxu0 0.0
        %1258 = vmatprep.subr.mxu0 0.0
        %1259 = vmatpush2.msra.mxu0 0.0
        %1260 = vmatprep.subr.mxu0 0.0
        %1261 = vmatpush2.msra.mxu0 0.0
        %1262 = vmatprep.subr.mxu0 0.0
        %1263 = vmatpush2.msra.mxu0 0.0
        %1264 = vmatprep.subr.mxu0 0.0
        %1265 = vmatpush2.msra.mxu0 0.0
        %1266 = vmatprep.subr.mxu0 0.0
        %1267 = vmatpush2.msra.mxu0 0.0
        %1268 = vmatprep.subr.mxu0 0.0
        %1269 = vmatpush2.msra.mxu0 0.0
        %1270 = vmatprep.subr.mxu0 0.0
        %1271 = vmatpush2.msra.mxu0 0.0
        %1272 = vmatprep.subr.mxu0 0.0
        %1273 = vmatpush2.msra.mxu0 0.0
        %1274 = vmatprep.subr.mxu0 0.0
        %1275 = vmatpush2.msra.mxu0 0.0
        %1276 = vmatprep.subr.mxu0 0.0
        %1277 = vmatpush2.msra.mxu0 0.0
        %1278 = vmatprep.subr.mxu0 0.0
        %1279 = vmatpush2.msra.mxu0 0.0
        %1280 = vmatprep.subr.mxu0 0.0
        %1281 = vmatpush2.msra.mxu0 0.0
        %1282 = vmatprep.subr.mxu0 0.0
        %1283 = vmatpush2.msra.mxu0 0.0
        %1284 = vmatprep.subr.mxu0 0.0
        %1285 = vmatpush2.msra.mxu0 0.0
        %1286 = vmatprep.mubr.f32.mxu0 0.0
        %1287 = vmatmul.mubr.f32.gmra.mxu0 %v1217
        %v1288 = vpop.f32.mrf.mxu0
        %v1289 = vadd.f32 0.0, %v1288
        %v1290 = vpop.f32.mrf.mxu0
        %1291 = vmatprep.mubr.f32.mxu0 0.0
        %1292 = vmatmul.mubr.f32.gmra.mxu0 %v1220
        %v1293 = vpop.f32.mrf.mxu0
        %v1294 = vadd.f32 0.0, %v1293
        %v1295 = vpop.f32.mrf.mxu0
        %1296 = vdwg.mxu0
        %vm1297 = vcmp.lt.s32.totalorder %v773, %v776
        %vm1298 = vcmp.lt.s32.totalorder %v774, %v776
        %1300 = vset.pattern.permute.xlu0 0
        %1301 = vperm.xlu0 %1300, %v1207
        %v1302 = vpop.permute.xlu0 %1301
        %1305 = vset.pattern.permute.xlu0 0
        %1306 = vperm.xlu0 %1305, %v1209
        %v1307 = vpop.permute.xlu0 %1306
        %v1309 = vsel %vm1297, %v1302, 0.0
        %v1310 = vsel %vm1298, %v1307, 0.0
        %v1311 = vsel %vm979, %v1309, 0.0
        %v1312 = vsel %vm979, %v1310, 0.0
        %v1313 = vadd.f32 %v1311, %v1312
        %v1314 = vrot.slane %v1313, 4
        %v1315 = vadd.f32 %v1313, %v1314
        %v1316 = vrot.slane %v1315, 2
        %v1317 = vadd.f32 %v1315, %v1316
        %v1318 = vrot.slane %v1317, 1
        %v1319 = vadd.f32 %v1317, %v1318
        %1321 = vset.pattern.permute.xlu0 0
        %1322 = vperm.xlu0 %1321, %v1289
        %v1323 = vpop.permute.xlu0 %1322
        %1326 = vset.pattern.permute.xlu0 0
        %1327 = vperm.xlu0 %1326, %v1294
        %v1328 = vpop.permute.xlu0 %1327
        %v1330 = vsub.f32 %v1319, %v1323
        %v1331 = vsub.f32 %v1319, %v1328
        %vm1332 = vcmp.ge.s32.totalorder %v776, %v773
        %vm1333 = vcmp.ge.s32.totalorder %v776, %v774
        %v1334 = vsub.f32 0.0, %v1330
        %v1335 = vsub.f32 0.0, %v1331
        %v1336 = vsel %vm1332, %v1330, %v1334
        %v1337 = vsel %vm1333, %v1331, %v1335
        %v1338 = vmul.f32 %v1336, 1.442695
        %v1339 = vpow.pop %v1338
        %v1340 = vmul.f32 %v1337, 1.442695
        %v1341 = vpow.pop %v1340
        %v1342 = vadd.f32 %v1339, 1e-09
        %v1343 = vadd.f32 %v1341, 1e-09
        %v1344 = vsel %vm785, %v1188, %v1342
        %v1345 = vsel %vm786, %v1189, %v1343
        %v1346 = vld [vmem:[%s6] sm:$0x1]
        %v1347 = vld [vmem:[%s7] sm:$0x1]
        %v1349 = vlaneseq
        %v1350 = vshrl.u32 %v1349, 7
        %v1351 = vsub.s32 0, %v1350
        %v1352 = vrot.slane %v1346, %v1351
        %v1354 = vmul.f32 %v815, %v1352
        %v1355 = vmul.f32 %v816, %v1352
        %v1357 = vlaneseq
        %v1358 = vshrl.u32 %v1357, 7
        %v1359 = vsub.s32 0, %v1358
        %v1360 = vrot.slane %v1347, %v1359
        %v1362 = vadd.f32 %v1354, %v1360
        %v1363 = vadd.f32 %v1355, %v1360
        %v1364 = vpack.c.bf16 %v1363, %v1362
        %v1365 = vld [vmem:[#allocation5] sm:$0xf]
        %v1366 = vld [vmem:[#allocation5 + $0x4] sm:$0xf]
        %v1367 = vld [vmem:[#allocation5 + $0x8] sm:$0xf]
        %v1368 = vld [vmem:[#allocation5 + $0xc] sm:$0xf]
        %v1369 = vld [vmem:[%s9] sm:$0x1]
        %v1371 = vlaneseq
        %v1372 = vshrl.u32 %v1371, 7
        %v1373 = vsub.s32 0, %v1372
        %v1374 = vrot.slane %v1369, %v1373
        %v1380 = vunpack.c.l.b16 %v1365
        %v1381 = vunpack.c.l.b16 %v1366
        %v1382 = vunpack.c.l.b16 %v1367
        %v1383 = vunpack.c.l.b16 %v1368
        %v1384 = vpack.c.b16 %v1381, %v1380
        %v1385 = vpack.c.b16 %v1383, %v1382
        %v1389 = vsel %vm789, %v1364, 0
        %1391 = vmatprep.subr.bf16.mxu0 0
        %1392 = vmatpush1.bf16.msra.mxu0 0
        %1393 = vmatprep.subr.bf16.mxu0 0
        %1394 = vmatpush1.bf16.msra.mxu0 0
        %1395 = vmatprep.subr.bf16.mxu0 0
        %1396 = vmatpush1.bf16.msra.mxu0 0
        %1397 = vmatprep.subr.bf16.mxu0 0
        %1398 = vmatpush1.bf16.msra.mxu0 0
        %1399 = vmatprep.subr.bf16.mxu0 0
        %1400 = vmatpush1.bf16.msra.mxu0 0
        %1401 = vmatprep.subr.bf16.mxu0 0
        %1402 = vmatpush1.bf16.msra.mxu0 0
        %1403 = vmatprep.subr.bf16.mxu0 0
        %1404 = vmatpush1.bf16.msra.mxu0 %v1385
        %1405 = vmatprep.subr.bf16.mxu0 0
        %1406 = vmatpush1.bf16.msra.mxu0 %v1384
        %1407 = vmatprep.subr.bf16.mxu0 0
        %1408 = vmatpush2.bf16.msra.mxu0 0
        %1409 = vmatprep.subr.bf16.mxu0 0
        %1410 = vmatpush2.bf16.msra.mxu0 0
        %1411 = vmatprep.subr.bf16.mxu0 0
        %1412 = vmatpush2.bf16.msra.mxu0 0
        %1413 = vmatprep.subr.bf16.mxu0 0
        %1414 = vmatpush2.bf16.msra.mxu0 0
        %1415 = vmatprep.subr.bf16.mxu0 0
        %1416 = vmatpush2.bf16.msra.mxu0 0
        %1417 = vmatprep.subr.bf16.mxu0 0
        %1418 = vmatpush2.bf16.msra.mxu0 0
        %1419 = vmatprep.subr.bf16.mxu0 0
        %1420 = vmatpush2.bf16.msra.mxu0 0
        %1421 = vmatprep.subr.bf16.mxu0 0
        %1422 = vmatpush2.bf16.msra.mxu0 0
        %1423 = vmatprep.mubr.bf16.mxu0 0
        %1424 = vmatmul.mubr.bf16.gmra.mxu0 %v1389
        %v1425 = vpop.f32.mrf.mxu0
        %v1426 = vadd.f32 %v1374, %v1425
        %v1427 = vpop.f32.mrf.mxu0
        %v1428 = vpop.f32.mrf.mxu0
        %v1429 = vadd.f32 %v1374, %v1428
        %v1430 = vpop.f32.mrf.mxu0
        %1431 = vdwg.mxu0
        %1434 = vrot.lane.b32.xlu0 %v1426, 120
        %v1435 = vpop.permute.xlu0 %1434
        %1436 = vrot.lane.b32.xlu0 %v1429, 120
        %v1437 = vpop.permute.xlu0 %1436
        %1440 = vrot.lane.b32.xlu0 %v1426, 112
        %v1441 = vpop.permute.xlu0 %1440
        %1442 = vrot.lane.b32.xlu0 %v1429, 112
        %v1443 = vpop.permute.xlu0 %1442
        %1446 = vrot.lane.b32.xlu0 %v1426, 104
        %v1447 = vpop.permute.xlu0 %1446
        %1448 = vrot.lane.b32.xlu0 %v1429, 104
        %v1449 = vpop.permute.xlu0 %1448
        %v1452 = vmul.f32 %v1426, 0.35355338
        %v1453 = vmul.f32 %v1429, 0.35355338
        %v1454 = vmul.f32 %v1435, 0.35355338
        %v1455 = vmul.f32 %v1437, 0.35355338
        %v1456 = vmul.f32 %v1441, 0.35355338
        %v1457 = vmul.f32 %v1443, 0.35355338
        %v1458 = vmul.f32 %v1447, 0.35355338
        %v1459 = vmul.f32 %v1449, 0.35355338
        %v1460 = vpack.c.bf16 %v1453, %v1452
        %v1461 = vpack.c.bf16 %v1455, %v1454
        %v1462 = vpack.c.bf16 %v1457, %v1456
        %v1463 = vpack.c.bf16 %v1459, %v1458
        %v1464 = vpack.c.bf16 %v1429, %v1426
        %v1465 = vpack.c.bf16 %v1437, %v1435
        %v1466 = vpack.c.bf16 %v1443, %v1441
        %v1467 = vpack.c.bf16 %v1449, %v1447
        %1469 = vrot.lane.b32.xlu0 %v1464, 96
        %v1470 = vpop.permute.xlu0 %1469
        %vm1471 = vcmask 64512
        %v1473 = vsel %vm1471, %v1460, 0
        %v1476 = vsel %vm1471, %v1470, 0
        %1478 = vmatprep.subr.bf16.mxu0 0
        %1479 = vmatpush1.bf16.xpose.msra.mxu0 0
        %1480 = vmatprep.subr.bf16.mxu0 0
        %1481 = vmatpush1.bf16.xpose.msra.mxu0 0
        %1482 = vmatprep.subr.bf16.mxu0 0
        %1483 = vmatpush1.bf16.xpose.msra.mxu0 0
        %1484 = vmatprep.subr.bf16.mxu0 0
        %1485 = vmatpush1.bf16.xpose.msra.mxu0 0
        %1486 = vmatprep.subr.bf16.mxu0 0
        %1487 = vmatpush1.bf16.xpose.msra.mxu0 0
        %1488 = vmatprep.subr.bf16.mxu0 0
        %1489 = vmatpush1.bf16.xpose.msra.mxu0 0
        %1490 = vmatprep.subr.bf16.mxu0 0
        %1491 = vmatpush1.bf16.xpose.msra.mxu0 0
        %1492 = vmatprep.subr.bf16.mxu0 0
        %1493 = vmatpush1.bf16.xpose.msra.mxu0 %v1476
        %1494 = vmatprep.subr.bf16.mxu0 0
        %1495 = vmatpush2.bf16.xpose.msra.mxu0 0
        %1496 = vmatprep.subr.bf16.mxu0 0
        %1497 = vmatpush2.bf16.xpose.msra.mxu0 0
        %1498 = vmatprep.subr.bf16.mxu0 0
        %1499 = vmatpush2.bf16.xpose.msra.mxu0 0
        %1500 = vmatprep.subr.bf16.mxu0 0
        %1501 = vmatpush2.bf16.xpose.msra.mxu0 0
        %1502 = vmatprep.subr.bf16.mxu0 0
        %1503 = vmatpush2.bf16.xpose.msra.mxu0 0
        %1504 = vmatprep.subr.bf16.mxu0 0
        %1505 = vmatpush2.bf16.xpose.msra.mxu0 0
        %1506 = vmatprep.subr.bf16.mxu0 0
        %1507 = vmatpush2.bf16.xpose.msra.mxu0 0
        %1508 = vmatprep.subr.bf16.mxu0 0
        %1509 = vmatpush2.bf16.xpose.msra.mxu0 0
        %1510 = vmatprep.mubr.bf16.mxu0 0
        %1511 = vmatmul.mubr.bf16.gmra.mxu0 %v1473
        %v1512 = vpop.f32.mrf.mxu0
        %v1513 = vadd.f32 0.0, %v1512
        %v1514 = vpop.f32.mrf.mxu0
        %v1515 = vpop.f32.mrf.mxu0
        %v1516 = vadd.f32 0.0, %v1515
        %v1517 = vpop.f32.mrf.mxu0
        %1518 = vdwg.mxu0
        %1520 = vrot.lane.b32.xlu0 %v1465, 96
        %v1521 = vpop.permute.xlu0 %1520
        %v1523 = vsel %vm1471, %v1461, 0
        %v1526 = vsel %vm1471, %v1521, 0
        %1528 = vmatprep.subr.bf16.mxu0 0
        %1529 = vmatpush1.bf16.xpose.msra.mxu0 0
        %1530 = vmatprep.subr.bf16.mxu0 0
        %1531 = vmatpush1.bf16.xpose.msra.mxu0 0
        %1532 = vmatprep.subr.bf16.mxu0 0
        %1533 = vmatpush1.bf16.xpose.msra.mxu0 0
        %1534 = vmatprep.subr.bf16.mxu0 0
        %1535 = vmatpush1.bf16.xpose.msra.mxu0 0
        %1536 = vmatprep.subr.bf16.mxu0 0
        %1537 = vmatpush1.bf16.xpose.msra.mxu0 0
        %1538 = vmatprep.subr.bf16.mxu0 0
        %1539 = vmatpush1.bf16.xpose.msra.mxu0 0
        %1540 = vmatprep.subr.bf16.mxu0 0
        %1541 = vmatpush1.bf16.xpose.msra.mxu0 0
        %1542 = vmatprep.subr.bf16.mxu0 0
        %1543 = vmatpush1.bf16.xpose.msra.mxu0 %v1526
        %1544 = vmatprep.subr.bf16.mxu0 0
        %1545 = vmatpush2.bf16.xpose.msra.mxu0 0
        %1546 = vmatprep.subr.bf16.mxu0 0
        %1547 = vmatpush2.bf16.xpose.msra.mxu0 0
        %1548 = vmatprep.subr.bf16.mxu0 0
        %1549 = vmatpush2.bf16.xpose.msra.mxu0 0
        %1550 = vmatprep.subr.bf16.mxu0 0
        %1551 = vmatpush2.bf16.xpose.msra.mxu0 0
        %1552 = vmatprep.subr.bf16.mxu0 0
        %1553 = vmatpush2.bf16.xpose.msra.mxu0 0
        %1554 = vmatprep.subr.bf16.mxu0 0
        %1555 = vmatpush2.bf16.xpose.msra.mxu0 0
        %1556 = vmatprep.subr.bf16.mxu0 0
        %1557 = vmatpush2.bf16.xpose.msra.mxu0 0
        %1558 = vmatprep.subr.bf16.mxu0 0
        %1559 = vmatpush2.bf16.xpose.msra.mxu0 0
        %1560 = vmatprep.mubr.bf16.mxu0 0
        %1561 = vmatmul.mubr.bf16.gmra.mxu0 %v1523
        %v1562 = vpop.f32.mrf.mxu0
        %v1563 = vadd.f32 0.0, %v1562
        %v1564 = vpop.f32.mrf.mxu0
        %v1565 = vpop.f32.mrf.mxu0
        %v1566 = vadd.f32 0.0, %v1565
        %v1567 = vpop.f32.mrf.mxu0
        %1568 = vdwg.mxu0
        %1570 = vrot.lane.b32.xlu0 %v1466, 96
        %v1571 = vpop.permute.xlu0 %1570
        %v1573 = vsel %vm1471, %v1462, 0
        %v1576 = vsel %vm1471, %v1571, 0
        %1578 = vmatprep.subr.bf16.mxu0 0
        %1579 = vmatpush1.bf16.xpose.msra.mxu0 0
        %1580 = vmatprep.subr.bf16.mxu0 0
        %1581 = vmatpush1.bf16.xpose.msra.mxu0 0
        %1582 = vmatprep.subr.bf16.mxu0 0
        %1583 = vmatpush1.bf16.xpose.msra.mxu0 0
        %1584 = vmatprep.subr.bf16.mxu0 0
        %1585 = vmatpush1.bf16.xpose.msra.mxu0 0
        %1586 = vmatprep.subr.bf16.mxu0 0
        %1587 = vmatpush1.bf16.xpose.msra.mxu0 0
        %1588 = vmatprep.subr.bf16.mxu0 0
        %1589 = vmatpush1.bf16.xpose.msra.mxu0 0
        %1590 = vmatprep.subr.bf16.mxu0 0
        %1591 = vmatpush1.bf16.xpose.msra.mxu0 0
        %1592 = vmatprep.subr.bf16.mxu0 0
        %1593 = vmatpush1.bf16.xpose.msra.mxu0 %v1576
        %1594 = vmatprep.subr.bf16.mxu0 0
        %1595 = vmatpush2.bf16.xpose.msra.mxu0 0
        %1596 = vmatprep.subr.bf16.mxu0 0
        %1597 = vmatpush2.bf16.xpose.msra.mxu0 0
        %1598 = vmatprep.subr.bf16.mxu0 0
        %1599 = vmatpush2.bf16.xpose.msra.mxu0 0
        %1600 = vmatprep.subr.bf16.mxu0 0
        %1601 = vmatpush2.bf16.xpose.msra.mxu0 0
        %1602 = vmatprep.subr.bf16.mxu0 0
        %1603 = vmatpush2.bf16.xpose.msra.mxu0 0
        %1604 = vmatprep.subr.bf16.mxu0 0
        %1605 = vmatpush2.bf16.xpose.msra.mxu0 0
        %1606 = vmatprep.subr.bf16.mxu0 0
        %1607 = vmatpush2.bf16.xpose.msra.mxu0 0
        %1608 = vmatprep.subr.bf16.mxu0 0
        %1609 = vmatpush2.bf16.xpose.msra.mxu0 0
        %1610 = vmatprep.mubr.bf16.mxu0 0
        %1611 = vmatmul.mubr.bf16.gmra.mxu0 %v1573
        %v1612 = vpop.f32.mrf.mxu0
        %v1613 = vadd.f32 0.0, %v1612
        %v1614 = vpop.f32.mrf.mxu0
        %v1615 = vpop.f32.mrf.mxu0
        %v1616 = vadd.f32 0.0, %v1615
        %v1617 = vpop.f32.mrf.mxu0
        %1618 = vdwg.mxu0
        %1620 = vrot.lane.b32.xlu0 %v1467, 96
        %v1621 = vpop.permute.xlu0 %1620
        %v1623 = vsel %vm1471, %v1463, 0
        %v1626 = vsel %vm1471, %v1621, 0
        %1628 = vmatprep.subr.bf16.mxu0 0
        %1629 = vmatpush1.bf16.xpose.msra.mxu0 0
        %1630 = vmatprep.subr.bf16.mxu0 0
        %1631 = vmatpush1.bf16.xpose.msra.mxu0 0
        %1632 = vmatprep.subr.bf16.mxu0 0
        %1633 = vmatpush1.bf16.xpose.msra.mxu0 0
        %1634 = vmatprep.subr.bf16.mxu0 0
        %1635 = vmatpush1.bf16.xpose.msra.mxu0 0
        %1636 = vmatprep.subr.bf16.mxu0 0
        %1637 = vmatpush1.bf16.xpose.msra.mxu0 0
        %1638 = vmatprep.subr.bf16.mxu0 0
        %1639 = vmatpush1.bf16.xpose.msra.mxu0 0
        %1640 = vmatprep.subr.bf16.mxu0 0
        %1641 = vmatpush1.bf16.xpose.msra.mxu0 0
        %1642 = vmatprep.subr.bf16.mxu0 0
        %1643 = vmatpush1.bf16.xpose.msra.mxu0 %v1626
        %1644 = vmatprep.subr.bf16.mxu0 0
        %1645 = vmatpush2.bf16.xpose.msra.mxu0 0
        %1646 = vmatprep.subr.bf16.mxu0 0
        %1647 = vmatpush2.bf16.xpose.msra.mxu0 0
        %1648 = vmatprep.subr.bf16.mxu0 0
        %1649 = vmatpush2.bf16.xpose.msra.mxu0 0
        %1650 = vmatprep.subr.bf16.mxu0 0
        %1651 = vmatpush2.bf16.xpose.msra.mxu0 0
        %1652 = vmatprep.subr.bf16.mxu0 0
        %1653 = vmatpush2.bf16.xpose.msra.mxu0 0
        %1654 = vmatprep.subr.bf16.mxu0 0
        %1655 = vmatpush2.bf16.xpose.msra.mxu0 0
        %1656 = vmatprep.subr.bf16.mxu0 0
        %1657 = vmatpush2.bf16.xpose.msra.mxu0 0
        %1658 = vmatprep.subr.bf16.mxu0 0
        %1659 = vmatpush2.bf16.xpose.msra.mxu0 0
        %1660 = vmatprep.mubr.bf16.mxu0 0
        %1661 = vmatmul.mubr.bf16.gmra.mxu0 %v1623
        %v1662 = vpop.f32.mrf.mxu0
        %v1663 = vadd.f32 0.0, %v1662
        %v1664 = vpop.f32.mrf.mxu0
        %v1665 = vpop.f32.mrf.mxu0
        %v1666 = vadd.f32 0.0, %v1665
        %v1667 = vpop.f32.mrf.mxu0
        %1668 = vdwg.mxu0
        %v1669 = vsel %vm979, %v1513, -inf
        %1670 = vmax.xlane.f32.xlu0 %v1669
        %v1671 = vpop.xlane.xlu0 %1670
        %v1672 = vsel %vm979, %v1516, -inf
        %1673 = vmax.xlane.f32.xlu0 %v1672
        %v1674 = vpop.xlane.xlu0 %1673
        %v1675 = vsel %vm979, %v1563, -inf
        %1676 = vmax.xlane.f32.xlu0 %v1675
        %v1677 = vpop.xlane.xlu0 %1676
        %v1678 = vsel %vm979, %v1566, -inf
        %1679 = vmax.xlane.f32.xlu0 %v1678
        %v1680 = vpop.xlane.xlu0 %1679
        %v1681 = vsel %vm979, %v1613, -inf
        %1682 = vmax.xlane.f32.xlu0 %v1681
        %v1683 = vpop.xlane.xlu0 %1682
        %v1684 = vsel %vm979, %v1616, -inf
        %1685 = vmax.xlane.f32.xlu0 %v1684
        %v1686 = vpop.xlane.xlu0 %1685
        %v1687 = vsel %vm979, %v1663, -inf
        %1688 = vmax.xlane.f32.xlu0 %v1687
        %v1689 = vpop.xlane.xlu0 %1688
        %v1690 = vsel %vm979, %v1666, -inf
        %1691 = vmax.xlane.f32.xlu0 %v1690
        %v1692 = vpop.xlane.xlu0 %1691
        %v1693 = vsub.f32 %v1513, %v1671
        %v1694 = vsub.f32 %v1516, %v1674
        %v1695 = vsub.f32 %v1563, %v1677
        %v1696 = vsub.f32 %v1566, %v1680
        %v1697 = vsub.f32 %v1613, %v1683
        %v1698 = vsub.f32 %v1616, %v1686
        %v1699 = vsub.f32 %v1663, %v1689
        %v1700 = vsub.f32 %v1666, %v1692
        %v1701 = vmul.f32 %v1693, 1.442695
        %v1702 = vpow.pop %v1701
        %v1703 = vmul.f32 %v1694, 1.442695
        %v1704 = vpow.pop %v1703
        %v1705 = vmul.f32 %v1695, 1.442695
        %v1706 = vpow.pop %v1705
        %v1707 = vmul.f32 %v1696, 1.442695
        %v1708 = vpow.pop %v1707
        %v1709 = vmul.f32 %v1697, 1.442695
        %v1710 = vpow.pop %v1709
        %v1711 = vmul.f32 %v1698, 1.442695
        %v1712 = vpow.pop %v1711
        %v1713 = vmul.f32 %v1699, 1.442695
        %v1714 = vpow.pop %v1713
        %v1715 = vmul.f32 %v1700, 1.442695
        %v1716 = vpow.pop %v1715
        %v1717 = vsel %vm979, %v1702, 0.0
        %1718 = vadd.xlane.f32.xlu0 %v1717
        %v1719 = vpop.xlane.xlu0 %1718
        %v1720 = vsel %vm979, %v1704, 0.0
        %1721 = vadd.xlane.f32.xlu0 %v1720
        %v1722 = vpop.xlane.xlu0 %1721
        %v1723 = vsel %vm979, %v1706, 0.0
        %1724 = vadd.xlane.f32.xlu0 %v1723
        %v1725 = vpop.xlane.xlu0 %1724
        %v1726 = vsel %vm979, %v1708, 0.0
        %1727 = vadd.xlane.f32.xlu0 %v1726
        %v1728 = vpop.xlane.xlu0 %1727
        %v1729 = vsel %vm979, %v1710, 0.0
        %1730 = vadd.xlane.f32.xlu0 %v1729
        %v1731 = vpop.xlane.xlu0 %1730
        %v1732 = vsel %vm979, %v1712, 0.0
        %1733 = vadd.xlane.f32.xlu0 %v1732
        %v1734 = vpop.xlane.xlu0 %1733
        %v1735 = vsel %vm979, %v1714, 0.0
        %1736 = vadd.xlane.f32.xlu0 %v1735
        %v1737 = vpop.xlane.xlu0 %1736
        %v1738 = vsel %vm979, %v1716, 0.0
        %1739 = vadd.xlane.f32.xlu0 %v1738
        %v1740 = vpop.xlane.xlu0 %1739
        %v1741 = vrcp.pop %v1719
        %v1742 = vrcp.pop %v1722
        %v1743 = vrcp.pop %v1725
        %v1744 = vrcp.pop %v1728
        %v1745 = vrcp.pop %v1731
        %v1746 = vrcp.pop %v1734
        %v1747 = vrcp.pop %v1737
        %v1748 = vrcp.pop %v1740
        %v1749 = vmul.f32 %v1702, %v1741
        %v1750 = vmul.f32 %v1704, %v1742
        %v1751 = vmul.f32 %v1706, %v1743
        %v1752 = vmul.f32 %v1708, %v1744
        %v1753 = vmul.f32 %v1710, %v1745
        %v1754 = vmul.f32 %v1712, %v1746
        %v1755 = vmul.f32 %v1714, %v1747
        %v1756 = vmul.f32 %v1716, %v1748
        %v1757 = vmul.f32 %v1749, %v1344
        %v1758 = vmul.f32 %v1750, %v1345
        %v1759 = vmul.f32 %v1751, %v1344
        %v1760 = vmul.f32 %v1752, %v1345
        %v1761 = vmul.f32 %v1753, %v1344
        %v1762 = vmul.f32 %v1754, %v1345
        %v1763 = vmul.f32 %v1755, %v1344
        %v1764 = vmul.f32 %v1756, %v1345
        %1765 = vst.msk [vmem:[%s761] sm:$0xff] %vm979, %v1757
        %1766 = vst.msk [vmem:[%s761 + $0x8] sm:$0xff] %vm979, %v1758
        %1767 = vst.msk [vmem:[%s761 + $0x10] sm:$0xff] %vm979, %v1759
        %1768 = vst.msk [vmem:[%s761 + $0x18] sm:$0xff] %vm979, %v1760
        %1769 = vst.msk [vmem:[%s761 + $0x20] sm:$0xff] %vm979, %v1761
        %1770 = vst.msk [vmem:[%s761 + $0x28] sm:$0xff] %vm979, %v1762
        %1771 = vst.msk [vmem:[%s761 + $0x30] sm:$0xff] %vm979, %v1763
        %1772 = vst.msk [vmem:[%s761 + $0x38] sm:$0xff] %vm979, %v1764
        %v1773 = vpack.c.bf16 %v1758, %v1757
        %v1774 = vpack.c.bf16 %v1760, %v1759
        %v1775 = vpack.c.bf16 %v1762, %v1761
        %v1776 = vpack.c.bf16 %v1764, %v1763
        %1777 = vrot.lane.b32.xlu0 %v1464, 64
        %v1778 = vpop.permute.xlu0 %1777
        %v1781 = vsel %vm979, %v1773, 0
        %1783 = vmatprep.subr.bf16.mxu0 0
        %1784 = vmatpush1.bf16.msra.mxu0 0
        %1785 = vmatprep.subr.bf16.mxu0 0
        %1786 = vmatpush1.bf16.msra.mxu0 0
        %1787 = vmatprep.subr.bf16.mxu0 0
        %1788 = vmatpush1.bf16.msra.mxu0 0
        %1789 = vmatprep.subr.bf16.mxu0 0
        %1790 = vmatpush1.bf16.msra.mxu0 0
        %1791 = vmatprep.subr.bf16.mxu0 0
        %1792 = vmatpush1.bf16.msra.mxu0 0
        %1793 = vmatprep.subr.bf16.mxu0 0
        %1794 = vmatpush1.bf16.msra.mxu0 0
        %1795 = vmatprep.subr.bf16.mxu0 0
        %1796 = vmatpush1.bf16.msra.mxu0 0
        %1797 = vmatprep.subr.bf16.mxu0 0
        %1798 = vmatpush1.bf16.msra.mxu0 %v1778
        %1799 = vmatprep.subr.bf16.mxu0 0
        %1800 = vmatpush2.bf16.msra.mxu0 0
        %1801 = vmatprep.subr.bf16.mxu0 0
        %1802 = vmatpush2.bf16.msra.mxu0 0
        %1803 = vmatprep.subr.bf16.mxu0 0
        %1804 = vmatpush2.bf16.msra.mxu0 0
        %1805 = vmatprep.subr.bf16.mxu0 0
        %1806 = vmatpush2.bf16.msra.mxu0 0
        %1807 = vmatprep.subr.bf16.mxu0 0
        %1808 = vmatpush2.bf16.msra.mxu0 0
        %1809 = vmatprep.subr.bf16.mxu0 0
        %1810 = vmatpush2.bf16.msra.mxu0 0
        %1811 = vmatprep.subr.bf16.mxu0 0
        %1812 = vmatpush2.bf16.msra.mxu0 0
        %1813 = vmatprep.subr.bf16.mxu0 0
        %1814 = vmatpush2.bf16.msra.mxu0 0
        %1815 = vmatprep.mubr.bf16.mxu0 0
        %1816 = vmatmul.mubr.bf16.gmra.mxu0 %v1781
        %v1817 = vpop.f32.mrf.mxu0
        %v1818 = vadd.f32 0.0, %v1817
        %v1819 = vpop.f32.mrf.mxu0
        %v1820 = vpop.f32.mrf.mxu0
        %v1821 = vadd.f32 0.0, %v1820
        %v1822 = vpop.f32.mrf.mxu0
        %1823 = vdwg.mxu0
        %1824 = vrot.lane.b32.xlu0 %v1465, 64
        %v1825 = vpop.permute.xlu0 %1824
        %v1828 = vsel %vm979, %v1774, 0
        %1830 = vmatprep.subr.bf16.mxu0 0
        %1831 = vmatpush1.bf16.msra.mxu0 0
        %1832 = vmatprep.subr.bf16.mxu0 0
        %1833 = vmatpush1.bf16.msra.mxu0 0
        %1834 = vmatprep.subr.bf16.mxu0 0
        %1835 = vmatpush1.bf16.msra.mxu0 0
        %1836 = vmatprep.subr.bf16.mxu0 0
        %1837 = vmatpush1.bf16.msra.mxu0 0
        %1838 = vmatprep.subr.bf16.mxu0 0
        %1839 = vmatpush1.bf16.msra.mxu0 0
        %1840 = vmatprep.subr.bf16.mxu0 0
        %1841 = vmatpush1.bf16.msra.mxu0 0
        %1842 = vmatprep.subr.bf16.mxu0 0
        %1843 = vmatpush1.bf16.msra.mxu0 0
        %1844 = vmatprep.subr.bf16.mxu0 0
        %1845 = vmatpush1.bf16.msra.mxu0 %v1825
        %1846 = vmatprep.subr.bf16.mxu0 0
        %1847 = vmatpush2.bf16.msra.mxu0 0
        %1848 = vmatprep.subr.bf16.mxu0 0
        %1849 = vmatpush2.bf16.msra.mxu0 0
        %1850 = vmatprep.subr.bf16.mxu0 0
        %1851 = vmatpush2.bf16.msra.mxu0 0
        %1852 = vmatprep.subr.bf16.mxu0 0
        %1853 = vmatpush2.bf16.msra.mxu0 0
        %1854 = vmatprep.subr.bf16.mxu0 0
        %1855 = vmatpush2.bf16.msra.mxu0 0
        %1856 = vmatprep.subr.bf16.mxu0 0
        %1857 = vmatpush2.bf16.msra.mxu0 0
        %1858 = vmatprep.subr.bf16.mxu0 0
        %1859 = vmatpush2.bf16.msra.mxu0 0
        %1860 = vmatprep.subr.bf16.mxu0 0
        %1861 = vmatpush2.bf16.msra.mxu0 0
        %1862 = vmatprep.mubr.bf16.mxu0 0
        %1863 = vmatmul.mubr.bf16.gmra.mxu0 %v1828
        %v1864 = vpop.f32.mrf.mxu0
        %v1865 = vadd.f32 0.0, %v1864
        %v1866 = vpop.f32.mrf.mxu0
        %v1867 = vpop.f32.mrf.mxu0
        %v1868 = vadd.f32 0.0, %v1867
        %v1869 = vpop.f32.mrf.mxu0
        %1870 = vdwg.mxu0
        %1871 = vrot.lane.b32.xlu0 %v1466, 64
        %v1872 = vpop.permute.xlu0 %1871
        %v1875 = vsel %vm979, %v1775, 0
        %1877 = vmatprep.subr.bf16.mxu0 0
        %1878 = vmatpush1.bf16.msra.mxu0 0
        %1879 = vmatprep.subr.bf16.mxu0 0
        %1880 = vmatpush1.bf16.msra.mxu0 0
        %1881 = vmatprep.subr.bf16.mxu0 0
        %1882 = vmatpush1.bf16.msra.mxu0 0
        %1883 = vmatprep.subr.bf16.mxu0 0
        %1884 = vmatpush1.bf16.msra.mxu0 0
        %1885 = vmatprep.subr.bf16.mxu0 0
        %1886 = vmatpush1.bf16.msra.mxu0 0
        %1887 = vmatprep.subr.bf16.mxu0 0
        %1888 = vmatpush1.bf16.msra.mxu0 0
        %1889 = vmatprep.subr.bf16.mxu0 0
        %1890 = vmatpush1.bf16.msra.mxu0 0
        %1891 = vmatprep.subr.bf16.mxu0 0
        %1892 = vmatpush1.bf16.msra.mxu0 %v1872
        %1893 = vmatprep.subr.bf16.mxu0 0
        %1894 = vmatpush2.bf16.msra.mxu0 0
        %1895 = vmatprep.subr.bf16.mxu0 0
        %1896 = vmatpush2.bf16.msra.mxu0 0
        %1897 = vmatprep.subr.bf16.mxu0 0
        %1898 = vmatpush2.bf16.msra.mxu0 0
        %1899 = vmatprep.subr.bf16.mxu0 0
        %1900 = vmatpush2.bf16.msra.mxu0 0
        %1901 = vmatprep.subr.bf16.mxu0 0
        %1902 = vmatpush2.bf16.msra.mxu0 0
        %1903 = vmatprep.subr.bf16.mxu0 0
        %1904 = vmatpush2.bf16.msra.mxu0 0
        %1905 = vmatprep.subr.bf16.mxu0 0
        %1906 = vmatpush2.bf16.msra.mxu0 0
        %1907 = vmatprep.subr.bf16.mxu0 0
        %1908 = vmatpush2.bf16.msra.mxu0 0
        %1909 = vmatprep.mubr.bf16.mxu0 0
        %1910 = vmatmul.mubr.bf16.gmra.mxu0 %v1875
        %v1911 = vpop.f32.mrf.mxu0
        %v1912 = vadd.f32 0.0, %v1911
        %v1913 = vpop.f32.mrf.mxu0
        %v1914 = vpop.f32.mrf.mxu0
        %v1915 = vadd.f32 0.0, %v1914
        %v1916 = vpop.f32.mrf.mxu0
        %1917 = vdwg.mxu0
        %1918 = vrot.lane.b32.xlu0 %v1467, 64
        %v1919 = vpop.permute.xlu0 %1918
        %v1922 = vsel %vm979, %v1776, 0
        %1924 = vmatprep.subr.bf16.mxu0 0
        %1925 = vmatpush1.bf16.msra.mxu0 0
        %1926 = vmatprep.subr.bf16.mxu0 0
        %1927 = vmatpush1.bf16.msra.mxu0 0
        %1928 = vmatprep.subr.bf16.mxu0 0
        %1929 = vmatpush1.bf16.msra.mxu0 0
        %1930 = vmatprep.subr.bf16.mxu0 0
        %1931 = vmatpush1.bf16.msra.mxu0 0
        %1932 = vmatprep.subr.bf16.mxu0 0
        %1933 = vmatpush1.bf16.msra.mxu0 0
        %1934 = vmatprep.subr.bf16.mxu0 0
        %1935 = vmatpush1.bf16.msra.mxu0 0
        %1936 = vmatprep.subr.bf16.mxu0 0
        %1937 = vmatpush1.bf16.msra.mxu0 0
        %1938 = vmatprep.subr.bf16.mxu0 0
        %1939 = vmatpush1.bf16.msra.mxu0 %v1919
        %1940 = vmatprep.subr.bf16.mxu0 0
        %1941 = vmatpush2.bf16.msra.mxu0 0
        %1942 = vmatprep.subr.bf16.mxu0 0
        %1943 = vmatpush2.bf16.msra.mxu0 0
        %1944 = vmatprep.subr.bf16.mxu0 0
        %1945 = vmatpush2.bf16.msra.mxu0 0
        %1946 = vmatprep.subr.bf16.mxu0 0
        %1947 = vmatpush2.bf16.msra.mxu0 0
        %1948 = vmatprep.subr.bf16.mxu0 0
        %1949 = vmatpush2.bf16.msra.mxu0 0
        %1950 = vmatprep.subr.bf16.mxu0 0
        %1951 = vmatpush2.bf16.msra.mxu0 0
        %1952 = vmatprep.subr.bf16.mxu0 0
        %1953 = vmatpush2.bf16.msra.mxu0 0
        %1954 = vmatprep.subr.bf16.mxu0 0
        %1955 = vmatpush2.bf16.msra.mxu0 0
        %1956 = vmatprep.mubr.bf16.mxu0 0
        %1957 = vmatmul.mubr.bf16.gmra.mxu0 %v1922
        %v1958 = vpop.f32.mrf.mxu0
        %v1959 = vadd.f32 0.0, %v1958
        %v1960 = vpop.f32.mrf.mxu0
        %v1961 = vpop.f32.mrf.mxu0
        %v1962 = vadd.f32 0.0, %v1961
        %v1963 = vpop.f32.mrf.mxu0
        %1964 = vdwg.mxu0
        %1967 = vrot.lane.b32.xlu0 %v1865, 8
        %v1968 = vpop.permute.xlu0 %1967
        %1969 = vrot.lane.b32.xlu0 %v1868, 8
        %v1970 = vpop.permute.xlu0 %1969
        %1975 = vrot.lane.b32.xlu0 %v1912, 16
        %v1976 = vpop.permute.xlu0 %1975
        %1977 = vrot.lane.b32.xlu0 %v1915, 16
        %v1978 = vpop.permute.xlu0 %1977
        %1983 = vrot.lane.b32.xlu0 %v1959, 24
        %v1984 = vpop.permute.xlu0 %1983
        %1985 = vrot.lane.b32.xlu0 %v1962, 24
        %v1986 = vpop.permute.xlu0 %1985
        %v1989 = vsel %vm1471, %v1818, %v1968
        %v1990 = vsel %vm1471, %v1821, %v1970
        %v1991 = vsel %vm979, %v1989, %v1976
        %v1992 = vsel %vm979, %v1990, %v1978
        %vm1993 = vcmask 195584
        %v1994 = vsel %vm1993, %v1991, %v1984
        %v1995 = vsel %vm1993, %v1992, %v1986
        %v1996 = vpack.c.bf16 %v1995, %v1994
        %v1997 = vld [vmem:[#allocation7] sm:$0xf]
        %v1998 = vld [vmem:[#allocation7 + $0x4] sm:$0xf]
        %v1999 = vld [vmem:[#allocation7 + $0x8] sm:$0xf]
        %v2000 = vld [vmem:[#allocation7 + $0xc] sm:$0xf]
        %v2001 = vld [vmem:[%s11] sm:$0x1]
        %v2003 = vlaneseq
        %v2004 = vshrl.u32 %v2003, 7
        %v2005 = vsub.s32 0, %v2004
        %v2006 = vrot.slane %v2001, %v2005
        %v2012 = vunpack.c.l.b16 %v1997
        %v2013 = vunpack.c.l.b16 %v1998
        %v2014 = vunpack.c.l.b16 %v1999
        %v2015 = vunpack.c.l.b16 %v2000
        %v2016 = vpack.c.b16 %v2013, %v2012
        %v2017 = vpack.c.b16 %v2015, %v2014
        %v2021 = vsel %vm789, %v1996, 0
        %2023 = vmatprep.subr.bf16.mxu0 0
        %2024 = vmatpush1.bf16.msra.mxu0 0
        %2025 = vmatprep.subr.bf16.mxu0 0
        %2026 = vmatpush1.bf16.msra.mxu0 0
        %2027 = vmatprep.subr.bf16.mxu0 0
        %2028 = vmatpush1.bf16.msra.mxu0 0
        %2029 = vmatprep.subr.bf16.mxu0 0
        %2030 = vmatpush1.bf16.msra.mxu0 0
        %2031 = vmatprep.subr.bf16.mxu0 0
        %2032 = vmatpush1.bf16.msra.mxu0 0
        %2033 = vmatprep.subr.bf16.mxu0 0
        %2034 = vmatpush1.bf16.msra.mxu0 0
        %2035 = vmatprep.subr.bf16.mxu0 0
        %2036 = vmatpush1.bf16.msra.mxu0 %v2017
        %2037 = vmatprep.subr.bf16.mxu0 0
        %2038 = vmatpush1.bf16.msra.mxu0 %v2016
        %2039 = vmatprep.subr.bf16.mxu0 0
        %2040 = vmatpush2.bf16.msra.mxu0 0
        %2041 = vmatprep.subr.bf16.mxu0 0
        %2042 = vmatpush2.bf16.msra.mxu0 0
        %2043 = vmatprep.subr.bf16.mxu0 0
        %2044 = vmatpush2.bf16.msra.mxu0 0
        %2045 = vmatprep.subr.bf16.mxu0 0
        %2046 = vmatpush2.bf16.msra.mxu0 0
        %2047 = vmatprep.subr.bf16.mxu0 0
        %2048 = vmatpush2.bf16.msra.mxu0 0
        %2049 = vmatprep.subr.bf16.mxu0 0
        %2050 = vmatpush2.bf16.msra.mxu0 0
        %2051 = vmatprep.subr.bf16.mxu0 0
        %2052 = vmatpush2.bf16.msra.mxu0 0
        %2053 = vmatprep.subr.bf16.mxu0 0
        %2054 = vmatpush2.bf16.msra.mxu0 0
        %2055 = vmatprep.mubr.bf16.mxu0 0
        %2056 = vmatmul.mubr.bf16.gmra.mxu0 %v2021
        %v2057 = vpop.f32.mrf.mxu0
        %v2058 = vadd.f32 %v2006, %v2057
        %v2059 = vpop.f32.mrf.mxu0
        %v2060 = vpop.f32.mrf.mxu0
        %v2061 = vadd.f32 %v2006, %v2060
        %v2062 = vpop.f32.mrf.mxu0
        %2063 = vdwg.mxu0
        %v2064 = vadd.f32 %v768, %v2058
        %v2065 = vadd.f32 %v769, %v2061
        %v2066 = vld [vmem:[%s12] sm:$0x1]
        %v2067 = vld [vmem:[%s13] sm:$0x1]
        %v2068 = vsel %vm789, %v2064, 0.0
        %2069 = vadd.xlane.f32.xlu0 %v2068
        %v2070 = vpop.xlane.xlu0 %2069
        %v2071 = vsel %vm789, %v2065, 0.0
        %2072 = vadd.xlane.f32.xlu0 %v2071
        %v2073 = vpop.xlane.xlu0 %2072
        %v2074 = vmul.f32 %v2070, %v796
        %v2075 = vmul.f32 %v2073, %v796
        %v2076 = vsub.f32 %v2064, %v2074
        %v2077 = vsub.f32 %v2065, %v2075
        %v2078 = vmul.f32 %v2076, %v2076
        %v2079 = vmul.f32 %v2077, %v2077
        %v2080 = vsel %vm789, %v2078, 0.0
        %2081 = vadd.xlane.f32.xlu0 %v2080
        %v2082 = vpop.xlane.xlu0 %2081
        %v2083 = vsel %vm789, %v2079, 0.0
        %2084 = vadd.xlane.f32.xlu0 %v2083
        %v2085 = vpop.xlane.xlu0 %2084
        %v2086 = vmul.f32 %v2082, %v796
        %v2087 = vmul.f32 %v2085, %v796
        %v2088 = vadd.f32 %v2086, 1e-05
        %v2089 = vadd.f32 %v2087, 1e-05
        %v2090 = vrsqrt.pop %v2088
        %v2091 = vrsqrt.pop %v2089
        %v2092 = vmul.f32 %v2076, %v2090
        %v2093 = vmul.f32 %v2077, %v2091
        %v2095 = vlaneseq
        %v2096 = vshrl.u32 %v2095, 7
        %v2097 = vsub.s32 0, %v2096
        %v2098 = vrot.slane %v2066, %v2097
        %v2100 = vmul.f32 %v2092, %v2098
        %v2101 = vmul.f32 %v2093, %v2098
        %v2103 = vlaneseq
        %v2104 = vshrl.u32 %v2103, 7
        %v2105 = vsub.s32 0, %v2104
        %v2106 = vrot.slane %v2067, %v2105
        %v2108 = vadd.f32 %v2100, %v2106
        %v2109 = vadd.f32 %v2101, %v2106
        %v2110 = vpack.c.bf16 %v2109, %v2108
        %v2111 = vld [vmem:[#allocation8] sm:$0xf]
        %v2112 = vld [vmem:[#allocation8 + $0x4] sm:$0xf]
        %v2113 = vld [vmem:[#allocation8 + $0x8] sm:$0xf]
        %v2114 = vld [vmem:[#allocation8 + $0xc] sm:$0xf]
        %v2115 = vld [vmem:[%s15] sm:$0x1]
        %v2117 = vlaneseq
        %v2118 = vshrl.u32 %v2117, 7
        %v2119 = vsub.s32 0, %v2118
        %v2120 = vrot.slane %v2115, %v2119
        %v2126 = vunpack.c.l.b16 %v2111
        %v2127 = vunpack.c.l.b16 %v2112
        %v2128 = vunpack.c.l.b16 %v2113
        %v2129 = vunpack.c.l.b16 %v2114
        %v2130 = vpack.c.b16 %v2127, %v2126
        %v2131 = vpack.c.b16 %v2129, %v2128
        %v2135 = vsel %vm789, %v2110, 0
        %2137 = vmatprep.subr.bf16.mxu0 0
        %2138 = vmatpush1.bf16.msra.mxu0 0
        %2139 = vmatprep.subr.bf16.mxu0 0
        %2140 = vmatpush1.bf16.msra.mxu0 0
        %2141 = vmatprep.subr.bf16.mxu0 0
        %2142 = vmatpush1.bf16.msra.mxu0 0
        %2143 = vmatprep.subr.bf16.mxu0 0
        %2144 = vmatpush1.bf16.msra.mxu0 0
        %2145 = vmatprep.subr.bf16.mxu0 0
        %2146 = vmatpush1.bf16.msra.mxu0 0
        %2147 = vmatprep.subr.bf16.mxu0 0
        %2148 = vmatpush1.bf16.msra.mxu0 0
        %2149 = vmatprep.subr.bf16.mxu0 0
        %2150 = vmatpush1.bf16.msra.mxu0 %v2131
        %2151 = vmatprep.subr.bf16.mxu0 0
        %2152 = vmatpush1.bf16.msra.mxu0 %v2130
        %2153 = vmatprep.subr.bf16.mxu0 0
        %2154 = vmatpush2.bf16.msra.mxu0 0
        %2155 = vmatprep.subr.bf16.mxu0 0
        %2156 = vmatpush2.bf16.msra.mxu0 0
        %2157 = vmatprep.subr.bf16.mxu0 0
        %2158 = vmatpush2.bf16.msra.mxu0 0
        %2159 = vmatprep.subr.bf16.mxu0 0
        %2160 = vmatpush2.bf16.msra.mxu0 0
        %2161 = vmatprep.subr.bf16.mxu0 0
        %2162 = vmatpush2.bf16.msra.mxu0 0
        %2163 = vmatprep.subr.bf16.mxu0 0
        %2164 = vmatpush2.bf16.msra.mxu0 0
        %2165 = vmatprep.subr.bf16.mxu0 0
        %2166 = vmatpush2.bf16.msra.mxu0 0
        %2167 = vmatprep.subr.bf16.mxu0 0
        %2168 = vmatpush2.bf16.msra.mxu0 0
        %2169 = vmatprep.mubr.bf16.mxu0 0
        %2170 = vmatmul.mubr.bf16.gmra.mxu0 %v2135
        %v2171 = vpop.f32.mrf.mxu0
        %v2172 = vadd.f32 %v2120, %v2171
        %v2173 = vpop.f32.mrf.mxu0
        %v2174 = vpop.f32.mrf.mxu0
        %v2175 = vadd.f32 %v2120, %v2174
        %v2176 = vpop.f32.mrf.mxu0
        %2177 = vdwg.mxu0
        %v2178 = vmax.f32 %v2172, 0.0
        %v2179 = vmax.f32 %v2175, 0.0
        %v2180 = vpack.c.bf16 %v2179, %v2178
        %v2181 = vld [vmem:[%s16] sm:$0xf]
        %v2182 = vld [vmem:[%s16 + $0x4] sm:$0xf]
        %v2183 = vld [vmem:[%s16 + $0x8] sm:$0xf]
        %v2184 = vld [vmem:[%s16 + $0xc] sm:$0xf]
        %v2185 = vld [vmem:[%s16 + $0x10] sm:$0xf]
        %v2186 = vld [vmem:[%s16 + $0x14] sm:$0xf]
        %v2187 = vld [vmem:[%s16 + $0x18] sm:$0xf]
        %v2188 = vld [vmem:[%s16 + $0x1c] sm:$0xf]
        %v2189 = vld [vmem:[%s17] sm:$0x1]
        %v2191 = vlaneseq
        %v2192 = vshrl.u32 %v2191, 7
        %v2193 = vsub.s32 0, %v2192
        %v2194 = vrot.slane %v2189, %v2193
        %v2204 = vunpack.c.l.b16 %v2181
        %v2205 = vunpack.c.l.b16 %v2182
        %v2206 = vunpack.c.l.b16 %v2183
        %v2207 = vunpack.c.l.b16 %v2184
        %v2208 = vunpack.c.l.b16 %v2185
        %v2209 = vunpack.c.l.b16 %v2186
        %v2210 = vunpack.c.l.b16 %v2187
        %v2211 = vunpack.c.l.b16 %v2188
        %v2212 = vpack.c.b16 %v2205, %v2204
        %v2213 = vpack.c.b16 %v2207, %v2206
        %v2214 = vpack.c.b16 %v2209, %v2208
        %v2215 = vpack.c.b16 %v2211, %v2210
        %vm2220 = vcmask 523264
        %v2222 = vsel %vm2220, %v2180, 0
        %2224 = vmatprep.subr.bf16.mxu0 0
        %2225 = vmatpush1.bf16.msra.mxu0 0
        %2226 = vmatprep.subr.bf16.mxu0 0
        %2227 = vmatpush1.bf16.msra.mxu0 0
        %2228 = vmatprep.subr.bf16.mxu0 0
        %2229 = vmatpush1.bf16.msra.mxu0 0
        %2230 = vmatprep.subr.bf16.mxu0 0
        %2231 = vmatpush1.bf16.msra.mxu0 0
        %2232 = vmatprep.subr.bf16.mxu0 0
        %2233 = vmatpush1.bf16.msra.mxu0 %v2215
        %2234 = vmatprep.subr.bf16.mxu0 0
        %2235 = vmatpush1.bf16.msra.mxu0 %v2214
        %2236 = vmatprep.subr.bf16.mxu0 0
        %2237 = vmatpush1.bf16.msra.mxu0 %v2213
        %2238 = vmatprep.subr.bf16.mxu0 0
        %2239 = vmatpush1.bf16.msra.mxu0 %v2212
        %2240 = vmatprep.subr.bf16.mxu0 0
        %2241 = vmatpush2.bf16.msra.mxu0 0
        %2242 = vmatprep.subr.bf16.mxu0 0
        %2243 = vmatpush2.bf16.msra.mxu0 0
        %2244 = vmatprep.subr.bf16.mxu0 0
        %2245 = vmatpush2.bf16.msra.mxu0 0
        %2246 = vmatprep.subr.bf16.mxu0 0
        %2247 = vmatpush2.bf16.msra.mxu0 0
        %2248 = vmatprep.subr.bf16.mxu0 0
        %2249 = vmatpush2.bf16.msra.mxu0 0
        %2250 = vmatprep.subr.bf16.mxu0 0
        %2251 = vmatpush2.bf16.msra.mxu0 0
        %2252 = vmatprep.subr.bf16.mxu0 0
        %2253 = vmatpush2.bf16.msra.mxu0 0
        %2254 = vmatprep.subr.bf16.mxu0 0
        %2255 = vmatpush2.bf16.msra.mxu0 0
        %2256 = vmatprep.mubr.bf16.mxu0 0
        %2257 = vmatmul.mubr.bf16.gmra.mxu0 %v2222
        %v2258 = vpop.f32.mrf.mxu0
        %v2259 = vadd.f32 %v2194, %v2258
        %v2260 = vpop.f32.mrf.mxu0
        %v2261 = vpop.f32.mrf.mxu0
        %v2262 = vadd.f32 %v2194, %v2261
        %v2263 = vpop.f32.mrf.mxu0
        %2264 = vdwg.mxu0
        %v2265 = vadd.f32 %v2064, %v2259
        %v2266 = vadd.f32 %v2065, %v2262
        %2267 = vst.msk [vmem:[%s740] sm:$0xff] %vm789, %v2265
        %2268 = vst.msk [vmem:[%s740 + $0x8] sm:$0xff] %vm789, %v2266
        %2269 = vst.msk [vmem:[%s747] sm:$0xff] %vm979, %v1344
        %2270 = vst.msk [vmem:[%s747 + $0x8] sm:$0xff] %vm979, %v1345
        %2271 = vst.msk [vmem:[%s754] sm:$0xff] %vm979, %v1188
        %2272 = vst.msk [vmem:[%s754 + $0x8] sm:$0xff] %vm979, %v1189
        %s2273 = sand.u32 %s443, 1
        %s2274 = scalar_lea.sflag [#allocation4], %s2273
        %s2275 = sand.u32 %s443, 1
        %s2276 = smul.addr %s2275, 16
        %s2277 = scalar_lea.vmem [#allocation10], %s2276
        %s2278 = sand.u32 %s47, 1
        %s2279 = scalar_lea.sflag [#allocation12], %s2278
        %s2280 = sand.u32 %s469, 1
        %s2281 = smul.addr %s2280, 16
        %s2282 = scalar_lea.vmem [#allocation11], %s2281
        %s2283 = sand.u32 %s47, 1
        %s2284 = scalar_lea.sflag [#allocation12], %s2283
        %s2285 = sand.u32 %s495, 1
        %s2286 = smul.addr %s2285, 16
        %s2287 = scalar_lea.vmem [#allocation13], %s2286
        %s2288 = sand.u32 %s521, 1
        %s2289 = scalar_lea.sflag [#allocation15], %s2288
        %s2290 = sand.u32 %s521, 1
        %s2291 = smul.addr %s2290, 64
        %s2292 = scalar_lea.vmem [#allocation14], %s2291
        // Predicated region
        $region109: #{tpu_custom_call.1} parent=91 // pred_check
          %p2293 = pneg %p453
        $region110: #{tpu_custom_call.1} parent=91 // pred_check_branch
          %2295 = sbr.rel (%p2293) target = $region112
        $region111: #{tpu_custom_call.1} parent=91 // pred_region
          %s2297 = ssub.s32 256, 256
          %2298 = vsyncadd %s2274, %s2297
          %s2299 = smul.addr %s47, 2
          %s2300 = smul.addr %s2299, 128
          %s2301 = scalar_lea.hbm %s18, %s2300
          %s2302 = sshll.u32 %s2277, 4
          %s2303 = int_to_ptr.vmem [resolvable:$true] %s2302
          %2308 = dma.vmem_to_hbm [thread:$0]  %s2303, 256, %s2301, %s2274, 128, 128, 8
        $region112: #{tpu_custom_call.1} parent=91 // pred_fallthru
          _
        // Predicated region
        $region113: #{tpu_custom_call.1} parent=91 // pred_check
          %p2309 = pneg %p479
        $region114: #{tpu_custom_call.1} parent=91 // pred_check_branch
          %2311 = sbr.rel (%p2309) target = $region116
        $region115: #{tpu_custom_call.1} parent=91 // pred_region
          %s2313 = ssub.s32 256, 256
          %2314 = vsyncadd %s2279, %s2313
          %s2315 = smul.addr %s47, 2
          %s2316 = smul.addr %s2315, 128
          %s2317 = scalar_lea.hbm %s19, %s2316
          %s2318 = sshll.u32 %s2282, 4
          %s2319 = int_to_ptr.vmem [resolvable:$true] %s2318
          %2324 = dma.vmem_to_hbm [thread:$0]  %s2319, 256, %s2317, %s2279, 128, 128, 8
        $region116: #{tpu_custom_call.1} parent=91 // pred_fallthru
          _
        // Predicated region
        $region117: #{tpu_custom_call.1} parent=91 // pred_check
          %p2325 = pneg %p505
        $region118: #{tpu_custom_call.1} parent=91 // pred_check_branch
          %2327 = sbr.rel (%p2325) target = $region120
        $region119: #{tpu_custom_call.1} parent=91 // pred_region
          %s2329 = ssub.s32 256, 256
          %2330 = vsyncadd %s2284, %s2329
          %s2331 = smul.addr %s47, 2
          %s2332 = smul.addr %s2331, 128
          %s2333 = scalar_lea.hbm %s20, %s2332
          %s2334 = sshll.u32 %s2287, 4
          %s2335 = int_to_ptr.vmem [resolvable:$true] %s2334
          %2340 = dma.vmem_to_hbm [thread:$0]  %s2335, 256, %s2333, %s2284, 128, 128, 8
        $region120: #{tpu_custom_call.1} parent=91 // pred_fallthru
          _
        // Predicated region
        $region121: #{tpu_custom_call.1} parent=91 // pred_check
          %p2341 = pneg %p531
        $region122: #{tpu_custom_call.1} parent=91 // pred_check_branch
          %2343 = sbr.rel (%p2341) target = $region124
        $region123: #{tpu_custom_call.1} parent=91 // pred_region
          %s2345 = ssub.s32 1024, 1024
          %2346 = vsyncadd %s2289, %s2345
          %s2347 = smul.addr %s47, 8
          %s2348 = smul.addr %s2347, 128
          %s2349 = scalar_lea.hbm %s21, %s2348
          %s2350 = sshll.u32 %s2292, 4
          %s2351 = int_to_ptr.vmem [resolvable:$true] %s2350
          %2356 = dma.vmem_to_hbm [thread:$0]  %s2351, 1024, %s2349, %s2289, 128, 128, 8
        $region124: #{tpu_custom_call.1} parent=91 // pred_fallthru
          _
      $region92: #{tpu_custom_call.1} parent=5 // pred_fallthru
        _
      %p2357 = scmp.le.s32.totalorder 2, %s42
      // Predicated region
      $region125: #{tpu_custom_call.1} parent=5 // pred_check
        %p2358 = pneg %p2357
      $region126: #{tpu_custom_call.1} parent=5 // pred_check_branch
        %2360 = sbr.rel (%p2358) target = $region128
      $region127: #{tpu_custom_call.1} parent=5 // pred_region
        %s2361 = ssub.s32 %s42, 2
        // Predicated region
        $region129: #{tpu_custom_call.1} parent=127 // pred_check
          %p2362 = pneg %p459
        $region130: #{tpu_custom_call.1} parent=127 // pred_check_branch
          %2364 = sbr.rel (%p2362) target = $region132
        $region131: #{tpu_custom_call.1} parent=127 // pred_region
          %s2365 = sand.u32 %s444, 1
          %s2366 = scalar_lea.sflag [#allocation4], %s2365
          %s2367 = sand.u32 %s444, 1
          %s2368 = smul.addr %s2367, 16
          %s2369 = scalar_lea.vmem [#allocation10], %s2368
          %2370 = dma.done %s2366, 256
        $region132: #{tpu_custom_call.1} parent=127 // pred_fallthru
          _
        // Predicated region
        $region133: #{tpu_custom_call.1} parent=127 // pred_check
          %p2371 = pneg %p485
        $region134: #{tpu_custom_call.1} parent=127 // pred_check_branch
          %2373 = sbr.rel (%p2371) target = $region136
        $region135: #{tpu_custom_call.1} parent=127 // pred_region
          %s2374 = sand.u32 %s48, 1
          %s2375 = scalar_lea.sflag [#allocation12], %s2374
          %s2376 = sand.u32 %s470, 1
          %s2377 = smul.addr %s2376, 16
          %s2378 = scalar_lea.vmem [#allocation11], %s2377
          %2379 = dma.done %s2375, 256
        $region136: #{tpu_custom_call.1} parent=127 // pred_fallthru
          _
        // Predicated region
        $region137: #{tpu_custom_call.1} parent=127 // pred_check
          %p2380 = pneg %p511
        $region138: #{tpu_custom_call.1} parent=127 // pred_check_branch
          %2382 = sbr.rel (%p2380) target = $region140
        $region139: #{tpu_custom_call.1} parent=127 // pred_region
          %s2383 = sand.u32 %s48, 1
          %s2384 = scalar_lea.sflag [#allocation12], %s2383
          %s2385 = sand.u32 %s496, 1
          %s2386 = smul.addr %s2385, 16
          %s2387 = scalar_lea.vmem [#allocation13], %s2386
          %2388 = dma.done %s2384, 256
        $region140: #{tpu_custom_call.1} parent=127 // pred_fallthru
          _
        // Predicated region
        $region141: #{tpu_custom_call.1} parent=127 // pred_check
          %p2389 = pneg %p537
        $region142: #{tpu_custom_call.1} parent=127 // pred_check_branch
          %2391 = sbr.rel (%p2389) target = $region144
        $region143: #{tpu_custom_call.1} parent=127 // pred_region
          %s2392 = sand.u32 %s522, 1
          %s2393 = scalar_lea.sflag [#allocation15], %s2392
          %s2394 = sand.u32 %s522, 1
          %s2395 = smul.addr %s2394, 64
          %s2396 = scalar_lea.vmem [#allocation14], %s2395
          %2397 = dma.done %s2393, 1024
        $region144: #{tpu_custom_call.1} parent=127 // pred_fallthru
          _
      $region128: #{tpu_custom_call.1} parent=5 // pred_fallthru
        _
    $region6: #{tpu_custom_call.1} parent=1 // loop_footer
      %s46 = sadd.s32 1, %s42
    $region7: #{tpu_custom_call.1} parent=1 // loop_footer_branch
      %41 = sbr.rel target = $region3
    $region8: #{tpu_custom_call.1} parent=1 // loop_exit
      _
    %2398 = vsyncpa [#allocation3], 1
    %s2399 = scalar_lea.sflag [#allocation3], 1
    %2400 = vsyncpa %s2399, 1
    %2401 = vsyncpa [#allocation6], 1
    %2402 = vsyncpa [#allocation9], 1
    %2403 = vsyncpa [#allocation4], 1
    %s2404 = scalar_lea.sflag [#allocation4], 1
    %2405 = vsyncpa %s2404, 1
    %2406 = vsyncpa [#allocation12], 1
    %s2407 = scalar_lea.sflag [#allocation12], 1
    %2408 = vsyncpa %s2407, 1
    %2409 = vsyncpa [#allocation15], 1
    %s2410 = scalar_lea.sflag [#allocation15], 1
    %2411 = vsyncpa %s2410, 1

// kernel: tpu_custom_call.1
$region0: #{tpu_custom_call.1}
  #allocation0 [shape = 'u32[]', space=smem, size = 0x4, offset = 0x4, fixed_abs, tag = 'smem constant byte address 0x4 - core index']
  #allocation1 [shape = 'u32[144,128]{1,0:T(1,128)}', space=vmem, size = 0x12000, scoped, tag = 'internal scratch']
  %s0 = inlined_call_operand.vmem [shape: f32[2,16,32], index: 0, kind: input, shape index: {}]
  %s1 = inlined_call_operand.hbm [shape: f32[2,16,16], index: 1, kind: input, shape index: {}]
  %s2 = inlined_call_operand.vmem [shape: f32[1,32], index: 2, kind: input, shape index: {}]
  %s3 = inlined_call_operand.vmem [shape: f32[1,32], index: 3, kind: input, shape index: {}]
  %s4 = inlined_call_operand.vmem [shape: bf16[32,64], index: 4, kind: input, shape index: {}]
  %s5 = inlined_call_operand.vmem [shape: f32[1,64], index: 5, kind: input, shape index: {}]
  %s6 = inlined_call_operand.vmem [shape: f32[1,32], index: 6, kind: input, shape index: {}]
  %s7 = inlined_call_operand.vmem [shape: f32[1,32], index: 7, kind: input, shape index: {}]
  %s8 = inlined_call_operand.hbm [shape: bf16[32,96], index: 8, kind: input, shape index: {}]
  %s9 = inlined_call_operand.vmem [shape: f32[1,96], index: 9, kind: input, shape index: {}]
  %s10 = inlined_call_operand.hbm [shape: bf16[32,32], index: 10, kind: input, shape index: {}]
  %s11 = inlined_call_operand.vmem [shape: f32[1,32], index: 11, kind: input, shape index: {}]
  %s12 = inlined_call_operand.vmem [shape: f32[1,32], index: 12, kind: input, shape index: {}]
  %s13 = inlined_call_operand.vmem [shape: f32[1,32], index: 13, kind: input, shape index: {}]
  %s14 = inlined_call_operand.hbm [shape: bf16[32,64], index: 14, kind: input, shape index: {}]
  %s15 = inlined_call_operand.vmem [shape: f32[1,64], index: 15, kind: input, shape index: {}]
  %s16 = inlined_call_operand.vmem [shape: bf16[64,32], index: 16, kind: input, shape index: {}]
  %s17 = inlined_call_operand.vmem [shape: f32[1,32], index: 17, kind: input, shape index: {}]
  %s18 = inlined_call_operand.hbm [shape: f32[2,16,32], index: 18, kind: output, shape index: {0}]
  %s19 = inlined_call_operand.hbm [shape: f32[2,16,16], index: 19, kind: output, shape index: {1}]
  %s20 = inlined_call_operand.hbm [shape: f32[2,16,16], index: 20, kind: output, shape index: {2}]
  %s21 = inlined_call_operand.hbm [shape: f32[2,4,16,16], index: 21, kind: output, shape index: {3}]
  %22 = xla_tuple %s18, %s19, %s20, %s21
  %s23 = sld [smem:[#allocation0]]
  $region145: #{tpu_custom_call.1} parent=0
    _
  %s25 = ssub.s32 1, %s23
  %s26 = scalar_select 0, %s25, %s23
  $region1: #{tpu_custom_call.1} parent=0
    #allocation2 [shape = 'u8[16384]{0}', space=vmem, size = 0x4000, scoped, tag = 'input window, operand 1']
    #allocation3 [shape = 's32[2]{0}', space=sflag, size = 0x8, scoped, tag = 'scoped memory for tpu_custom_call.1']
    #allocation4 [shape = 's32[2]{0}', space=sflag, size = 0x8, scoped, tag = 'scoped memory for tpu_custom_call.1']
    #allocation5 [shape = 'u8[8192]{0}', space=vmem, size = 0x2000, scoped, tag = 'input window, operand 8, single buffered']
    #allocation6 [shape = 's32[1]{0}', space=sflag, size = 0x4, scoped, tag = 'scoped memory for tpu_custom_call.1']
    #allocation7 [shape = 'u8[8192]{0}', space=vmem, size = 0x2000, scoped, tag = 'input window, operand 10, single buffered']
    #allocation8 [shape = 'u8[8192]{0}', space=vmem, size = 0x2000, scoped, tag = 'input window, operand 14, single buffered']
    #allocation9 [shape = 's32[1]{0}', space=sflag, size = 0x4, scoped, tag = 'scoped memory for tpu_custom_call.1']
    #allocation10 [shape = 'u8[16384]{0}', space=vmem, size = 0x4000, scoped, tag = 'output window, operand 0']
    #allocation11 [shape = 'u8[16384]{0}', space=vmem, size = 0x4000, scoped, tag = 'output window, operand 1']
    #allocation12 [shape = 's32[2]{0}', space=sflag, size = 0x8, scoped, tag = 'scoped memory for tpu_custom_call.1']
    #allocation13 [shape = 'u8[16384]{0}', space=vmem, size = 0x4000, scoped, tag = 'output window, operand 2']
    #allocation14 [shape = 'u8[65536]{0}', space=vmem, size = 0x10000, scoped, tag = 'output window, operand 3']
    #allocation15 [shape = 's32[2]{0}', space=sflag, size = 0x8, scoped, tag = 'scoped memory for tpu_custom_call.1']
    %27 = vsyncpa [#allocation3], 0
    %s28 = scalar_lea.sflag [#allocation3], 1
    %29 = vsyncpa %s28, 0
    %30 = vsyncpa [#allocation6], 0
    %31 = vsyncpa [#allocation9], 0
    %32 = vsyncpa [#allocation4], 0
    %s33 = scalar_lea.sflag [#allocation4], 1
    %34 = vsyncpa %s33, 0
    %35 = vsyncpa [#allocation12], 0
    %s36 = scalar_lea.sflag [#allocation12], 1
    %37 = vsyncpa %s36, 0
    %38 = vsyncpa [#allocation15], 0
    %s39 = scalar_lea.sflag [#allocation15], 1
    %40 = vsyncpa %s39, 0
    loop: start=0, step=1, limit=4
    $region2: #{tpu_custom_call.1} parent=1 // loop_pre_header
      _
    $region3: #{tpu_custom_call.1} parent=1 // loop_header
      %s42 = sphi 0, %s46
      %p43 = scmp.ge.s32.totalorder %s42, 4
      %s52 = sphi 0, %s54
      %s55 = sphi 0, %s52
      %s56 = sphi 0, %s55
      %s72 = sphi 0, %s56
      %s78 = sphi 0, %s80
      %s81 = sphi 0, %s78
      %s82 = sphi 0, %s81
      %s98 = sphi 0, %s82
      %s102 = sphi 0, %s102
      %s104 = sphi 0, %s102
      %s105 = sphi 0, %s104
      %s119 = sphi 0, %s105
      %s123 = sphi 0, %s123
      %s125 = sphi 0, %s123
      %s126 = sphi 0, %s125
      %s140 = sphi 0, %s126
      %s144 = sphi 0, %s144
      %s146 = sphi 0, %s144
      %s147 = sphi 0, %s146
      %s161 = sphi 0, %s147
      %s165 = sphi 0, %s165
      %s167 = sphi 0, %s165
      %s168 = sphi 0, %s167
      %s182 = sphi 0, %s168
      %s186 = sphi 0, %s186
      %s188 = sphi 0, %s186
      %s189 = sphi 0, %s188
      %s203 = sphi 0, %s189
      %s207 = sphi 0, %s207
      %s209 = sphi 0, %s207
      %s210 = sphi 0, %s209
      %s224 = sphi 0, %s210
      %s228 = sphi 0, %s228
      %s230 = sphi 0, %s228
      %s231 = sphi 0, %s230
      %s245 = sphi 0, %s231
      %s249 = sphi 0, %s249
      %s251 = sphi 0, %s249
      %s252 = sphi 0, %s251
      %s266 = sphi 0, %s252
      %s270 = sphi 0, %s270
      %s272 = sphi 0, %s270
      %s273 = sphi 0, %s272
      %s287 = sphi 0, %s273
      %s291 = sphi 0, %s291
      %s293 = sphi 0, %s291
      %s294 = sphi 0, %s293
      %s308 = sphi 0, %s294
      %s312 = sphi 0, %s312
      %s314 = sphi 0, %s312
      %s315 = sphi 0, %s314
      %s329 = sphi 0, %s315
      %s333 = sphi 0, %s333
      %s335 = sphi 0, %s333
      %s336 = sphi 0, %s335
      %s350 = sphi 0, %s336
      %s354 = sphi 0, %s354
      %s356 = sphi 0, %s354
      %s357 = sphi 0, %s356
      %s371 = sphi 0, %s357
      %s375 = sphi 0, %s375
      %s377 = sphi 0, %s375
      %s378 = sphi 0, %s377
      %s392 = sphi 0, %s378
      %s396 = sphi 0, %s396
      %s398 = sphi 0, %s396
      %s399 = sphi 0, %s398
      %s413 = sphi 0, %s399
      %s417 = sphi 0, %s417
      %s419 = sphi 0, %s417
      %s420 = sphi 0, %s419
      %s434 = sphi 0, %s420
      %s440 = sphi 0, %s442
      %s443 = sphi 0, %s440
      %s444 = sphi 0, %s443
      %s460 = sphi 0, %s444
      %s466 = sphi 0, %s468
      %s469 = sphi 0, %s466
      %s470 = sphi 0, %s469
      %s486 = sphi 0, %s470
      %s492 = sphi 0, %s494
      %s495 = sphi 0, %s492
      %s496 = sphi 0, %s495
      %s512 = sphi 0, %s496
      %s518 = sphi 0, %s520
      %s521 = sphi 0, %s518
      %s522 = sphi 0, %s521
      %s538 = sphi 0, %s522
    $region4: #{tpu_custom_call.1} parent=1 // loop_header_branch
      %45 = sbr.rel (%p43) target = $region8
    $region5: #{tpu_custom_call.1} parent=1 // loop_body
      %s47 = ssub.s32 %s42, 1
      %s48 = ssub.s32 %s42, 2
      %s49 = sadd.s32 %s42, 1
      %s50 = ssub.s32 %s42, %s49
      %p51 = scmp.eq.s32.totalorder %s50, 0
      %s53 = sadd.s32 %s52, 1
      %s54 = scalar_select %p51, %s52, %s53
      %p57 = pneg %p51
      %p58 = scmp.eq.s32.totalorder %s42, 1
      %p59 = por %p57, %p58
      %p60 = scmp.ne.s32.totalorder %s52, %s55
      %p61 = scmp.eq.s32.totalorder %s42, 0
      %p62 = por %p60, %p61
      %p63 = scmp.ne.s32.totalorder %s52, %s55
      %p64 = scmp.eq.s32.totalorder %s47, 1
      %p65 = por %p63, %p64
      %p66 = scmp.ne.s32.totalorder %s55, %s56
      %p67 = scmp.eq.s32.totalorder %s47, 0
      %p68 = por %p66, %p67
      %p69 = scmp.ne.s32.totalorder %s55, %s56
      %p70 = scmp.eq.s32.totalorder %s48, 1
      %p71 = por %p69, %p70
      %p73 = scmp.ne.s32.totalorder %s56, %s72
      %p74 = scmp.eq.s32.totalorder %s48, 0
      %p75 = por %p73, %p74
      %s76 = ssub.s32 %s42, %s49
      %p77 = scmp.eq.s32.totalorder %s76, 0
      %s79 = sadd.s32 %s78, 1
      %s80 = scalar_select %p77, %s78, %s79
      %p83 = pneg %p77
      %p84 = scmp.eq.s32.totalorder %s42, 1
      %p85 = por %p83, %p84
      %p86 = scmp.ne.s32.totalorder %s78, %s81
      %p87 = scmp.eq.s32.totalorder %s42, 0
      %p88 = por %p86, %p87
      %p89 = scmp.ne.s32.totalorder %s78, %s81
      %p90 = scmp.eq.s32.totalorder %s47, 1
      %p91 = por %p89, %p90
      %p92 = scmp.ne.s32.totalorder %s81, %s82
      %p93 = scmp.eq.s32.totalorder %s47, 0
      %p94 = por %p92, %p93
      %p95 = scmp.ne.s32.totalorder %s81, %s82
      %p96 = scmp.eq.s32.totalorder %s48, 1
      %p97 = por %p95, %p96
      %p99 = scmp.ne.s32.totalorder %s82, %s98
      %p100 = scmp.eq.s32.totalorder %s48, 0
      %p101 = por %p99, %p100
      %s103 = sadd.s32 %s102, 1
      %p106 = scmp.eq.s32.totalorder %s42, 1
      %p107 = scmp.ne.s32.totalorder %s102, %s104
      %p108 = scmp.eq.s32.totalorder %s42, 0
      %p109 = por %p107, %p108
      %p110 = scmp.ne.s32.totalorder %s102, %s104
      %p111 = scmp.eq.s32.totalorder %s47, 1
      %p112 = por %p110, %p111
      %p113 = scmp.ne.s32.totalorder %s104, %s105
      %p114 = scmp.eq.s32.totalorder %s47, 0
      %p115 = por %p113, %p114
      %p116 = scmp.ne.s32.totalorder %s104, %s105
      %p117 = scmp.eq.s32.totalorder %s48, 1
      %p118 = por %p116, %p117
      %p120 = scmp.ne.s32.totalorder %s105, %s119
      %p121 = scmp.eq.s32.totalorder %s48, 0
      %p122 = por %p120, %p121
      %s124 = sadd.s32 %s123, 1
      %p127 = scmp.eq.s32.totalorder %s42, 1
      %p128 = scmp.ne.s32.totalorder %s123, %s125
      %p129 = scmp.eq.s32.totalorder %s42, 0
      %p130 = por %p128, %p129
      %p131 = scmp.ne.s32.totalorder %s123, %s125
      %p132 = scmp.eq.s32.totalorder %s47, 1
      %p133 = por %p131, %p132
      %p134 = scmp.ne.s32.totalorder %s125, %s126
      %p135 = scmp.eq.s32.totalorder %s47, 0
      %p136 = por %p134, %p135
      %p137 = scmp.ne.s32.totalorder %s125, %s126
      %p138 = scmp.eq.s32.totalorder %s48, 1
      %p139 = por %p137, %p138
      %p141 = scmp.ne.s32.totalorder %s126, %s140
      %p142 = scmp.eq.s32.totalorder %s48, 0
      %p143 = por %p141, %p142
      %s145 = sadd.s32 %s144, 1
      %p148 = scmp.eq.s32.totalorder %s42, 1
      %p149 = scmp.ne.s32.totalorder %s144, %s146
      %p150 = scmp.eq.s32.totalorder %s42, 0
      %p151 = por %p149, %p150
      %p152 = scmp.ne.s32.totalorder %s144, %s146
      %p153 = scmp.eq.s32.totalorder %s47, 1
      %p154 = por %p152, %p153
      %p155 = scmp.ne.s32.totalorder %s146, %s147
      %p156 = scmp.eq.s32.totalorder %s47, 0
      %p157 = por %p155, %p156
      %p158 = scmp.ne.s32.totalorder %s146, %s147
      %p159 = scmp.eq.s32.totalorder %s48, 1
      %p160 = por %p158, %p159
      %p162 = scmp.ne.s32.totalorder %s147, %s161
      %p163 = scmp.eq.s32.totalorder %s48, 0
      %p164 = por %p162, %p163
      %s166 = sadd.s32 %s165, 1
      %p169 = scmp.eq.s32.totalorder %s42, 1
      %p170 = scmp.ne.s32.totalorder %s165, %s167
      %p171 = scmp.eq.s32.totalorder %s42, 0
      %p172 = por %p170, %p171
      %p173 = scmp.ne.s32.totalorder %s165, %s167
      %p174 = scmp.eq.s32.totalorder %s47, 1
      %p175 = por %p173, %p174
      %p176 = scmp.ne.s32.totalorder %s167, %s168
      %p177 = scmp.eq.s32.totalorder %s47, 0
      %p178 = por %p176, %p177
      %p179 = scmp.ne.s32.totalorder %s167, %s168
      %p180 = scmp.eq.s32.totalorder %s48, 1
      %p181 = por %p179, %p180
      %p183 = scmp.ne.s32.totalorder %s168, %s182
      %p184 = scmp.eq.s32.totalorder %s48, 0
      %p185 = por %p183, %p184
      %s187 = sadd.s32 %s186, 1
      %p190 = scmp.eq.s32.totalorder %s42, 1
      %p191 = scmp.ne.s32.totalorder %s186, %s188
      %p192 = scmp.eq.s32.totalorder %s42, 0
      %p193 = por %p191, %p192
      %p194 = scmp.ne.s32.totalorder %s186, %s188
      %p195 = scmp.eq.s32.totalorder %s47, 1
      %p196 = por %p194, %p195
      %p197 = scmp.ne.s32.totalorder %s188, %s189
      %p198 = scmp.eq.s32.totalorder %s47, 0
      %p199 = por %p197, %p198
      %p200 = scmp.ne.s32.totalorder %s188, %s189
      %p201 = scmp.eq.s32.totalorder %s48, 1
      %p202 = por %p200, %p201
      %p204 = scmp.ne.s32.totalorder %s189, %s203
      %p205 = scmp.eq.s32.totalorder %s48, 0
      %p206 = por %p204, %p205
      %s208 = sadd.s32 %s207, 1
      %p211 = scmp.eq.s32.totalorder %s42, 1
      %p212 = scmp.ne.s32.totalorder %s207, %s209
      %p213 = scmp.eq.s32.totalorder %s42, 0
      %p214 = por %p212, %p213
      %p215 = scmp.ne.s32.totalorder %s207, %s209
      %p216 = scmp.eq.s32.totalorder %s47, 1
      %p217 = por %p215, %p216
      %p218 = scmp.ne.s32.totalorder %s209, %s210
      %p219 = scmp.eq.s32.totalorder %s47, 0
      %p220 = por %p218, %p219
      %p221 = scmp.ne.s32.totalorder %s209, %s210
      %p222 = scmp.eq.s32.totalorder %s48, 1
      %p223 = por %p221, %p222
      %p225 = scmp.ne.s32.totalorder %s210, %s224
      %p226 = scmp.eq.s32.totalorder %s48, 0
      %p227 = por %p225, %p226
      %s229 = sadd.s32 %s228, 1
      %p232 = scmp.eq.s32.totalorder %s42, 1
      %p233 = scmp.ne.s32.totalorder %s228, %s230
      %p234 = scmp.eq.s32.totalorder %s42, 0
      %p235 = por %p233, %p234
      %p236 = scmp.ne.s32.totalorder %s228, %s230
      %p237 = scmp.eq.s32.totalorder %s47, 1
      %p238 = por %p236, %p237
      %p239 = scmp.ne.s32.totalorder %s230, %s231
      %p240 = scmp.eq.s32.totalorder %s47, 0
      %p241 = por %p239, %p240
      %p242 = scmp.ne.s32.totalorder %s230, %s231
      %p243 = scmp.eq.s32.totalorder %s48, 1
      %p244 = por %p242, %p243
      %p246 = scmp.ne.s32.totalorder %s231, %s245
      %p247 = scmp.eq.s32.totalorder %s48, 0
      %p248 = por %p246, %p247
      %s250 = sadd.s32 %s249, 1
      %p253 = scmp.eq.s32.totalorder %s42, 1
      %p254 = scmp.ne.s32.totalorder %s249, %s251
      %p255 = scmp.eq.s32.totalorder %s42, 0
      %p256 = por %p254, %p255
      %p257 = scmp.ne.s32.totalorder %s249, %s251
      %p258 = scmp.eq.s32.totalorder %s47, 1
      %p259 = por %p257, %p258
      %p260 = scmp.ne.s32.totalorder %s251, %s252
      %p261 = scmp.eq.s32.totalorder %s47, 0
      %p262 = por %p260, %p261
      %p263 = scmp.ne.s32.totalorder %s251, %s252
      %p264 = scmp.eq.s32.totalorder %s48, 1
      %p265 = por %p263, %p264
      %p267 = scmp.ne.s32.totalorder %s252, %s266
      %p268 = scmp.eq.s32.totalorder %s48, 0
      %p269 = por %p267, %p268
      %s271 = sadd.s32 %s270, 1
      %p274 = scmp.eq.s32.totalorder %s42, 1
      %p275 = scmp.ne.s32.totalorder %s270, %s272
      %p276 = scmp.eq.s32.totalorder %s42, 0
      %p277 = por %p275, %p276
      %p278 = scmp.ne.s32.totalorder %s270, %s272
      %p279 = scmp.eq.s32.totalorder %s47, 1
      %p280 = por %p278, %p279
      %p281 = scmp.ne.s32.totalorder %s272, %s273
      %p282 = scmp.eq.s32.totalorder %s47, 0
      %p283 = por %p281, %p282
      %p284 = scmp.ne.s32.totalorder %s272, %s273
      %p285 = scmp.eq.s32.totalorder %s48, 1
      %p286 = por %p284, %p285
      %p288 = scmp.ne.s32.totalorder %s273, %s287
      %p289 = scmp.eq.s32.totalorder %s48, 0
      %p290 = por %p288, %p289
      %s292 = sadd.s32 %s291, 1
      %p295 = scmp.eq.s32.totalorder %s42, 1
      %p296 = scmp.ne.s32.totalorder %s291, %s293
      %p297 = scmp.eq.s32.totalorder %s42, 0
      %p298 = por %p296, %p297
      %p299 = scmp.ne.s32.totalorder %s291, %s293
      %p300 = scmp.eq.s32.totalorder %s47, 1
      %p301 = por %p299, %p300
      %p302 = scmp.ne.s32.totalorder %s293, %s294
      %p303 = scmp.eq.s32.totalorder %s47, 0
      %p304 = por %p302, %p303
      %p305 = scmp.ne.s32.totalorder %s293, %s294
      %p306 = scmp.eq.s32.totalorder %s48, 1
      %p307 = por %p305, %p306
      %p309 = scmp.ne.s32.totalorder %s294, %s308
      %p310 = scmp.eq.s32.totalorder %s48, 0
      %p311 = por %p309, %p310
      %s313 = sadd.s32 %s312, 1
      %p316 = scmp.eq.s32.totalorder %s42, 1
      %p317 = scmp.ne.s32.totalorder %s312, %s314
      %p318 = scmp.eq.s32.totalorder %s42, 0
      %p319 = por %p317, %p318
      %p320 = scmp.ne.s32.totalorder %s312, %s314
      %p321 = scmp.eq.s32.totalorder %s47, 1
      %p322 = por %p320, %p321
      %p323 = scmp.ne.s32.totalorder %s314, %s315
      %p324 = scmp.eq.s32.totalorder %s47, 0
      %p325 = por %p323, %p324
      %p326 = scmp.ne.s32.totalorder %s314, %s315
      %p327 = scmp.eq.s32.totalorder %s48, 1
      %p328 = por %p326, %p327
      %p330 = scmp.ne.s32.totalorder %s315, %s329
      %p331 = scmp.eq.s32.totalorder %s48, 0
      %p332 = por %p330, %p331
      %s334 = sadd.s32 %s333, 1
      %p337 = scmp.eq.s32.totalorder %s42, 1
      %p338 = scmp.ne.s32.totalorder %s333, %s335
      %p339 = scmp.eq.s32.totalorder %s42, 0
      %p340 = por %p338, %p339
      %p341 = scmp.ne.s32.totalorder %s333, %s335
      %p342 = scmp.eq.s32.totalorder %s47, 1
      %p343 = por %p341, %p342
      %p344 = scmp.ne.s32.totalorder %s335, %s336
      %p345 = scmp.eq.s32.totalorder %s47, 0
      %p346 = por %p344, %p345
      %p347 = scmp.ne.s32.totalorder %s335, %s336
      %p348 = scmp.eq.s32.totalorder %s48, 1
      %p349 = por %p347, %p348
      %p351 = scmp.ne.s32.totalorder %s336, %s350
      %p352 = scmp.eq.s32.totalorder %s48, 0
      %p353 = por %p351, %p352
      %s355 = sadd.s32 %s354, 1
      %p358 = scmp.eq.s32.totalorder %s42, 1
      %p359 = scmp.ne.s32.totalorder %s354, %s356
      %p360 = scmp.eq.s32.totalorder %s42, 0
      %p361 = por %p359, %p360
      %p362 = scmp.ne.s32.totalorder %s354, %s356
      %p363 = scmp.eq.s32.totalorder %s47, 1
      %p364 = por %p362, %p363
      %p365 = scmp.ne.s32.totalorder %s356, %s357
      %p366 = scmp.eq.s32.totalorder %s47, 0
      %p367 = por %p365, %p366
      %p368 = scmp.ne.s32.totalorder %s356, %s357
      %p369 = scmp.eq.s32.totalorder %s48, 1
      %p370 = por %p368, %p369
      %p372 = scmp.ne.s32.totalorder %s357, %s371
      %p373 = scmp.eq.s32.totalorder %s48, 0
      %p374 = por %p372, %p373
      %s376 = sadd.s32 %s375, 1
      %p379 = scmp.eq.s32.totalorder %s42, 1
      %p380 = scmp.ne.s32.totalorder %s375, %s377
      %p381 = scmp.eq.s32.totalorder %s42, 0
      %p382 = por %p380, %p381
      %p383 = scmp.ne.s32.totalorder %s375, %s377
      %p384 = scmp.eq.s32.totalorder %s47, 1
      %p385 = por %p383, %p384
      %p386 = scmp.ne.s32.totalorder %s377, %s378
      %p387 = scmp.eq.s32.totalorder %s47, 0
      %p388 = por %p386, %p387
      %p389 = scmp.ne.s32.totalorder %s377, %s378
      %p390 = scmp.eq.s32.totalorder %s48, 1
      %p391 = por %p389, %p390
      %p393 = scmp.ne.s32.totalorder %s378, %s392
      %p394 = scmp.eq.s32.totalorder %s48, 0
      %p395 = por %p393, %p394
      %s397 = sadd.s32 %s396, 1
      %p400 = scmp.eq.s32.totalorder %s42, 1
      %p401 = scmp.ne.s32.totalorder %s396, %s398
      %p402 = scmp.eq.s32.totalorder %s42, 0
      %p403 = por %p401, %p402
      %p404 = scmp.ne.s32.totalorder %s396, %s398
      %p405 = scmp.eq.s32.totalorder %s47, 1
      %p406 = por %p404, %p405
      %p407 = scmp.ne.s32.totalorder %s398, %s399
      %p408 = scmp.eq.s32.totalorder %s47, 0
      %p409 = por %p407, %p408
      %p410 = scmp.ne.s32.totalorder %s398, %s399
      %p411 = scmp.eq.s32.totalorder %s48, 1
      %p412 = por %p410, %p411
      %p414 = scmp.ne.s32.totalorder %s399, %s413
      %p415 = scmp.eq.s32.totalorder %s48, 0
      %p416 = por %p414, %p415
      %s418 = sadd.s32 %s417, 1
      %p421 = scmp.eq.s32.totalorder %s42, 1
      %p422 = scmp.ne.s32.totalorder %s417, %s419
      %p423 = scmp.eq.s32.totalorder %s42, 0
      %p424 = por %p422, %p423
      %p425 = scmp.ne.s32.totalorder %s417, %s419
      %p426 = scmp.eq.s32.totalorder %s47, 1
      %p427 = por %p425, %p426
      %p428 = scmp.ne.s32.totalorder %s419, %s420
      %p429 = scmp.eq.s32.totalorder %s47, 0
      %p430 = por %p428, %p429
      %p431 = scmp.ne.s32.totalorder %s419, %s420
      %p432 = scmp.eq.s32.totalorder %s48, 1
      %p433 = por %p431, %p432
      %p435 = scmp.ne.s32.totalorder %s420, %s434
      %p436 = scmp.eq.s32.totalorder %s48, 0
      %p437 = por %p435, %p436
      %s438 = ssub.s32 %s42, %s49
      %p439 = scmp.eq.s32.totalorder %s438, 0
      %s441 = sadd.s32 %s440, 1
      %s442 = scalar_select %p439, %s440, %s441
      %p445 = pneg %p439
      %p446 = scmp.eq.s32.totalorder %s42, 1
      %p447 = por %p445, %p446
      %p448 = scmp.ne.s32.totalorder %s440, %s443
      %p449 = scmp.eq.s32.totalorder %s42, 0
      %p450 = por %p448, %p449
      %p451 = scmp.ne.s32.totalorder %s440, %s443
      %p452 = scmp.eq.s32.totalorder %s47, 1
      %p453 = por %p451, %p452
      %p454 = scmp.ne.s32.totalorder %s443, %s444
      %p455 = scmp.eq.s32.totalorder %s47, 0
      %p456 = por %p454, %p455
      %p457 = scmp.ne.s32.totalorder %s443, %s444
      %p458 = scmp.eq.s32.totalorder %s48, 1
      %p459 = por %p457, %p458
      %p461 = scmp.ne.s32.totalorder %s444, %s460
      %p462 = scmp.eq.s32.totalorder %s48, 0
      %p463 = por %p461, %p462
      %s464 = ssub.s32 %s42, %s49
      %p465 = scmp.eq.s32.totalorder %s464, 0
      %s467 = sadd.s32 %s466, 1
      %s468 = scalar_select %p465, %s466, %s467
      %p471 = pneg %p465
      %p472 = scmp.eq.s32.totalorder %s42, 1
      %p473 = por %p471, %p472
      %p474 = scmp.ne.s32.totalorder %s466, %s469
      %p475 = scmp.eq.s32.totalorder %s42, 0
      %p476 = por %p474, %p475
      %p477 = scmp.ne.s32.totalorder %s466, %s469
      %p478 = scmp.eq.s32.totalorder %s47, 1
      %p479 = por %p477, %p478
      %p480 = scmp.ne.s32.totalorder %s469, %s470
      %p481 = scmp.eq.s32.totalorder %s47, 0
      %p482 = por %p480, %p481
      %p483 = scmp.ne.s32.totalorder %s469, %s470
      %p484 = scmp.eq.s32.totalorder %s48, 1
      %p485 = por %p483, %p484
      %p487 = scmp.ne.s32.totalorder %s470, %s486
      %p488 = scmp.eq.s32.totalorder %s48, 0
      %p489 = por %p487, %p488
      %s490 = ssub.s32 %s42, %s49
      %p491 = scmp.eq.s32.totalorder %s490, 0
      %s493 = sadd.s32 %s492, 1
      %s494 = scalar_select %p491, %s492, %s493
      %p497 = pneg %p491
      %p498 = scmp.eq.s32.totalorder %s42, 1
      %p499 = por %p497, %p498
      %p500 = scmp.ne.s32.totalorder %s492, %s495
      %p501 = scmp.eq.s32.totalorder %s42, 0
      %p502 = por %p500, %p501
      %p503 = scmp.ne.s32.totalorder %s492, %s495
      %p504 = scmp.eq.s32.totalorder %s47, 1
      %p505 = por %p503, %p504
      %p506 = scmp.ne.s32.totalorder %s495, %s496
      %p507 = scmp.eq.s32.totalorder %s47, 0
      %p508 = por %p506, %p507
      %p509 = scmp.ne.s32.totalorder %s495, %s496
      %p510 = scmp.eq.s32.totalorder %s48, 1
      %p511 = por %p509, %p510
      %p513 = scmp.ne.s32.totalorder %s496, %s512
      %p514 = scmp.eq.s32.totalorder %s48, 0
      %p515 = por %p513, %p514
      %s516 = ssub.s32 %s42, %s49
      %p517 = scmp.eq.s32.totalorder %s516, 0
      %s519 = sadd.s32 %s518, 1
      %s520 = scalar_select %p517, %s518, %s519
      %p523 = pneg %p517
      %p524 = scmp.eq.s32.totalorder %s42, 1
      %p525 = por %p523, %p524
      %p526 = scmp.ne.s32.totalorder %s518, %s521
      %p527 = scmp.eq.s32.totalorder %s42, 0
      %p528 = por %p526, %p527
      %p529 = scmp.ne.s32.totalorder %s518, %s521
      %p530 = scmp.eq.s32.totalorder %s47, 1
      %p531 = por %p529, %p530
      %p532 = scmp.ne.s32.totalorder %s521, %s522
      %p533 = scmp.eq.s32.totalorder %s47, 0
      %p534 = por %p532, %p533
      %p535 = scmp.ne.s32.totalorder %s521, %s522
      %p536 = scmp.eq.s32.totalorder %s48, 1
      %p537 = por %p535, %p536
      %p539 = scmp.ne.s32.totalorder %s522, %s538
      %p540 = scmp.eq.s32.totalorder %s48, 0
      %p541 = por %p539, %p540
      %p542 = scmp.le.s32.totalorder 1, %s42
      %p543 = scmp.lt.s32.totalorder %s42, 3
      %p544 = pnand %p542, %p543
      %p545 = pneg %p544
      // Predicated region
      $region9: #{tpu_custom_call.1} parent=5 // pred_check
        _
      $region10: #{tpu_custom_call.1} parent=5 // pred_check_branch
        %547 = sbr.rel (%p544) target = $region12
      $region11: #{tpu_custom_call.1} parent=5 // pred_region
        %s548 = ssub.s32 %s42, 1
        // Predicated region
        $region13: #{tpu_custom_call.1} parent=11 // pred_check
          %p549 = pneg %p115
        $region14: #{tpu_custom_call.1} parent=11 // pred_check_branch
          %551 = sbr.rel (%p549) target = $region16
        $region15: #{tpu_custom_call.1} parent=11 // pred_region
          _
        $region16: #{tpu_custom_call.1} parent=11 // pred_fallthru
          _
        // Predicated region
        $region17: #{tpu_custom_call.1} parent=11 // pred_check
          %p552 = pneg %p136
        $region18: #{tpu_custom_call.1} parent=11 // pred_check_branch
          %554 = sbr.rel (%p552) target = $region20
        $region19: #{tpu_custom_call.1} parent=11 // pred_region
          _
        $region20: #{tpu_custom_call.1} parent=11 // pred_fallthru
          _
        // Predicated region
        $region21: #{tpu_custom_call.1} parent=11 // pred_check
          %p555 = pneg %p157
        $region22: #{tpu_custom_call.1} parent=11 // pred_check_branch
          %557 = sbr.rel (%p555) target = $region24
        $region23: #{tpu_custom_call.1} parent=11 // pred_region
          _
        $region24: #{tpu_custom_call.1} parent=11 // pred_fallthru
          _
        // Predicated region
        $region25: #{tpu_custom_call.1} parent=11 // pred_check
          %p558 = pneg %p178
        $region26: #{tpu_custom_call.1} parent=11 // pred_check_branch
          %560 = sbr.rel (%p558) target = $region28
        $region27: #{tpu_custom_call.1} parent=11 // pred_region
          _
        $region28: #{tpu_custom_call.1} parent=11 // pred_fallthru
          _
        // Predicated region
        $region29: #{tpu_custom_call.1} parent=11 // pred_check
          %p561 = pneg %p199
        $region30: #{tpu_custom_call.1} parent=11 // pred_check_branch
          %563 = sbr.rel (%p561) target = $region32
        $region31: #{tpu_custom_call.1} parent=11 // pred_region
          _
        $region32: #{tpu_custom_call.1} parent=11 // pred_fallthru
          _
        // Predicated region
        $region33: #{tpu_custom_call.1} parent=11 // pred_check
          %p564 = pneg %p220
        $region34: #{tpu_custom_call.1} parent=11 // pred_check_branch
          %566 = sbr.rel (%p564) target = $region36
        $region35: #{tpu_custom_call.1} parent=11 // pred_region
          _
        $region36: #{tpu_custom_call.1} parent=11 // pred_fallthru
          _
        // Predicated region
        $region37: #{tpu_custom_call.1} parent=11 // pred_check
          %p567 = pneg %p241
        $region38: #{tpu_custom_call.1} parent=11 // pred_check_branch
          %569 = sbr.rel (%p567) target = $region40
        $region39: #{tpu_custom_call.1} parent=11 // pred_region
          %s571 = ssub.s32 256, 256
          %572 = vsyncadd [#allocation6], %s571
          %s573 = sshll.u32 [#allocation5], 4
          %s574 = int_to_ptr.vmem [resolvable:$true] %s573
          %579 = dma.hbm_to_vmem [thread:$0]  %s8, 256, %s574, [#allocation6], 64, 64, 4
        $region40: #{tpu_custom_call.1} parent=11 // pred_fallthru
          _
        // Predicated region
        $region41: #{tpu_custom_call.1} parent=11 // pred_check
          %p580 = pneg %p262
        $region42: #{tpu_custom_call.1} parent=11 // pred_check_branch
          %582 = sbr.rel (%p580) target = $region44
        $region43: #{tpu_custom_call.1} parent=11 // pred_region
          _
        $region44: #{tpu_custom_call.1} parent=11 // pred_fallthru
          _
        // Predicated region
        $region45: #{tpu_custom_call.1} parent=11 // pred_check
          %p583 = pneg %p283
        $region46: #{tpu_custom_call.1} parent=11 // pred_check_branch
          %585 = sbr.rel (%p583) target = $region48
        $region47: #{tpu_custom_call.1} parent=11 // pred_region
          %s587 = ssub.s32 256, 256
          %588 = vsyncadd [#allocation6], %s587
          %s589 = sshll.u32 [#allocation7], 4
          %s590 = int_to_ptr.vmem [resolvable:$true] %s589
          %595 = dma.hbm_to_vmem [thread:$0]  %s10, 256, %s590, [#allocation6], 64, 64, 4
        $region48: #{tpu_custom_call.1} parent=11 // pred_fallthru
          _
        // Predicated region
        $region49: #{tpu_custom_call.1} parent=11 // pred_check
          %p596 = pneg %p304
        $region50: #{tpu_custom_call.1} parent=11 // pred_check_branch
          %598 = sbr.rel (%p596) target = $region52
        $region51: #{tpu_custom_call.1} parent=11 // pred_region
          _
        $region52: #{tpu_custom_call.1} parent=11 // pred_fallthru
          _
        // Predicated region
        $region53: #{tpu_custom_call.1} parent=11 // pred_check
          %p599 = pneg %p325
        $region54: #{tpu_custom_call.1} parent=11 // pred_check_branch
          %601 = sbr.rel (%p599) target = $region56
        $region55: #{tpu_custom_call.1} parent=11 // pred_region
          _
        $region56: #{tpu_custom_call.1} parent=11 // pred_fallthru
          _
        // Predicated region
        $region57: #{tpu_custom_call.1} parent=11 // pred_check
          %p602 = pneg %p346
        $region58: #{tpu_custom_call.1} parent=11 // pred_check_branch
          %604 = sbr.rel (%p602) target = $region60
        $region59: #{tpu_custom_call.1} parent=11 // pred_region
          _
        $region60: #{tpu_custom_call.1} parent=11 // pred_fallthru
          _
        // Predicated region
        $region61: #{tpu_custom_call.1} parent=11 // pred_check
          %p605 = pneg %p367
        $region62: #{tpu_custom_call.1} parent=11 // pred_check_branch
          %607 = sbr.rel (%p605) target = $region64
        $region63: #{tpu_custom_call.1} parent=11 // pred_region
          %s609 = ssub.s32 256, 256
          %610 = vsyncadd [#allocation9], %s609
          %s611 = sshll.u32 [#allocation8], 4
          %s612 = int_to_ptr.vmem [resolvable:$true] %s611
          %617 = dma.hbm_to_vmem [thread:$0]  %s14, 256, %s612, [#allocation9], 64, 64, 4
        $region64: #{tpu_custom_call.1} parent=11 // pred_fallthru
          _
        // Predicated region
        $region65: #{tpu_custom_call.1} parent=11 // pred_check
          %p618 = pneg %p388
        $region66: #{tpu_custom_call.1} parent=11 // pred_check_branch
          %620 = sbr.rel (%p618) target = $region68
        $region67: #{tpu_custom_call.1} parent=11 // pred_region
          _
        $region68: #{tpu_custom_call.1} parent=11 // pred_fallthru
          _
        // Predicated region
        $region69: #{tpu_custom_call.1} parent=11 // pred_check
          %p621 = pneg %p409
        $region70: #{tpu_custom_call.1} parent=11 // pred_check_branch
          %623 = sbr.rel (%p621) target = $region72
        $region71: #{tpu_custom_call.1} parent=11 // pred_region
          _
        $region72: #{tpu_custom_call.1} parent=11 // pred_fallthru
          _
        // Predicated region
        $region73: #{tpu_custom_call.1} parent=11 // pred_check
          %p624 = pneg %p430
        $region74: #{tpu_custom_call.1} parent=11 // pred_check_branch
          %626 = sbr.rel (%p624) target = $region76
        $region75: #{tpu_custom_call.1} parent=11 // pred_region
          _
        $region76: #{tpu_custom_call.1} parent=11 // pred_fallthru
          _
      $region12: #{tpu_custom_call.1} parent=5 // pred_fallthru
        _
      %p627 = scmp.lt.s32.totalorder %s42, 2
      // Predicated region
      $region77: #{tpu_custom_call.1} parent=5 // pred_check
        %p628 = pneg %p627
      $region78: #{tpu_custom_call.1} parent=5 // pred_check_branch
        %630 = sbr.rel (%p628) target = $region80
      $region79: #{tpu_custom_call.1} parent=5 // pred_region
        // Predicated region
        $region81: #{tpu_custom_call.1} parent=79 // pred_check
          %p631 = pneg %p62
        $region82: #{tpu_custom_call.1} parent=79 // pred_check_branch
          %633 = sbr.rel (%p631) target = $region84
        $region83: #{tpu_custom_call.1} parent=79 // pred_region
          %p634 = scmp.lt.s32.totalorder %s42, 1
          %s635 = scalar_select %p634, %s42, 1
          %s636 = smul.addr %s635, 2
          %s637 = smul.addr %s636, 8
          %s638 = scalar_lea.vmem %s0, %s637
        $region84: #{tpu_custom_call.1} parent=79 // pred_fallthru
          _
        // Predicated region
        $region85: #{tpu_custom_call.1} parent=79 // pred_check
          %p639 = pneg %p88
        $region86: #{tpu_custom_call.1} parent=79 // pred_check_branch
          %641 = sbr.rel (%p639) target = $region88
        $region87: #{tpu_custom_call.1} parent=79 // pred_region
          %s642 = sand.u32 %s78, 1
          %s643 = scalar_lea.sflag [#allocation3], %s642
          %s644 = sand.u32 %s78, 1
          %s645 = smul.addr %s644, 16
          %s646 = scalar_lea.vmem [#allocation2], %s645
          %s648 = ssub.s32 256, 256
          %649 = vsyncadd %s643, %s648
          %s650 = smul.addr %s42, 2
          %s651 = smul.addr %s650, 128
          %s652 = scalar_lea.hbm %s1, %s651
          %s653 = sshll.u32 %s646, 4
          %s654 = int_to_ptr.vmem [resolvable:$true] %s653
          %659 = dma.hbm_to_vmem [thread:$0]  %s652, 256, %s654, %s643, 128, 128, 8
        $region88: #{tpu_custom_call.1} parent=79 // pred_fallthru
          _
      $region80: #{tpu_custom_call.1} parent=5 // pred_fallthru
        _
      %p660 = scmp.le.s32.totalorder 1, %s42
      %p661 = scmp.lt.s32.totalorder %s42, 3
      %p662 = pnand %p660, %p661
      %p663 = pneg %p662
      // Predicated region
      $region89: #{tpu_custom_call.1} parent=5 // pred_check
        _
      $region90: #{tpu_custom_call.1} parent=5 // pred_check_branch
        %665 = sbr.rel (%p662) target = $region92
      $region91: #{tpu_custom_call.1} parent=5 // pred_region
        %s666 = ssub.s32 %s42, 1
        %s667 = sand.u32 %s81, 1
        %s668 = scalar_lea.sflag [#allocation3], %s667
        %s669 = sand.u32 %s81, 1
        %s670 = smul.addr %s669, 16
        %s671 = scalar_lea.vmem [#allocation2], %s670
        // Predicated region
        $region93: #{tpu_custom_call.1} parent=91 // pred_check
          %p672 = pneg %p94
        $region94: #{tpu_custom_call.1} parent=91 // pred_check_branch
          %674 = sbr.rel (%p672) target = $region96
        $region95: #{tpu_custom_call.1} parent=91 // pred_region
          %675 = dma.done %s668, 256
        $region96: #{tpu_custom_call.1} parent=91 // pred_fallthru
          _
        // Predicated region
        $region97: #{tpu_custom_call.1} parent=91 // pred_check
          %p676 = pneg %p241
        $region98: #{tpu_custom_call.1} parent=91 // pred_check_branch
          %678 = sbr.rel (%p676) target = $region100
        $region99: #{tpu_custom_call.1} parent=91 // pred_region
          %679 = dma.done [#allocation6], 256
        $region100: #{tpu_custom_call.1} parent=91 // pred_fallthru
          _
        // Predicated region
        $region101: #{tpu_custom_call.1} parent=91 // pred_check
          %p680 = pneg %p283
        $region102: #{tpu_custom_call.1} parent=91 // pred_check_branch
          %682 = sbr.rel (%p680) target = $region104
        $region103: #{tpu_custom_call.1} parent=91 // pred_region
          %683 = dma.done [#allocation6], 256
        $region104: #{tpu_custom_call.1} parent=91 // pred_fallthru
          _
        // Predicated region
        $region105: #{tpu_custom_call.1} parent=91 // pred_check
          %p684 = pneg %p367
        $region106: #{tpu_custom_call.1} parent=91 // pred_check_branch
          %686 = sbr.rel (%p684) target = $region108
        $region107: #{tpu_custom_call.1} parent=91 // pred_region
          %687 = dma.done [#allocation9], 256
        $region108: #{tpu_custom_call.1} parent=91 // pred_fallthru
          _
        %p688 = scmp.lt.s32.totalorder %s47, 1
        %s689 = scalar_select %p688, %s47, 1
        %s690 = smul.addr %s689, 2
        %s691 = smul.addr %s690, 8
        %s692 = scalar_lea.vmem %s0, %s691
        %p693 = pneg %p68
        %p694 = pneg %p65
        %s695 = sand.u32 %s81, 1
        %s696 = scalar_lea.sflag [#allocation3], %s695
        %s697 = sand.u32 %s81, 1
        %s698 = smul.addr %s697, 16
        %s699 = scalar_lea.vmem [#allocation2], %s698
        %p700 = pneg %p94
        %p701 = pneg %p91
        %p702 = pneg %p115
        %p703 = pneg %p112
        %p704 = pneg %p136
        %p705 = pneg %p133
        %p706 = pneg %p157
        %p707 = pneg %p154
        %p708 = pneg %p178
        %p709 = pneg %p175
        %p710 = pneg %p199
        %p711 = pneg %p196
        %p712 = pneg %p220
        %p713 = pneg %p217
        %p714 = pneg %p241
        %p715 = pneg %p238
        %p716 = pneg %p262
        %p717 = pneg %p259
        %p718 = pneg %p283
        %p719 = pneg %p280
        %p720 = pneg %p304
        %p721 = pneg %p301
        %p722 = pneg %p325
        %p723 = pneg %p322
        %p724 = pneg %p346
        %p725 = pneg %p343
        %p726 = pneg %p367
        %p727 = pneg %p364
        %p728 = pneg %p388
        %p729 = pneg %p385
        %p730 = pneg %p409
        %p731 = pneg %p406
        %p732 = pneg %p430
        %p733 = pneg %p427
        %p734 = pneg %p456
        %p735 = pneg %p453
        %s736 = sand.u32 %s443, 1
        %s737 = scalar_lea.sflag [#allocation4], %s736
        %s738 = sand.u32 %s443, 1
        %s739 = smul.addr %s738, 16
        %s740 = scalar_lea.vmem [#allocation10], %s739
        %p741 = pneg %p482
        %p742 = pneg %p479
        %s743 = sand.u32 %s47, 1
        %s744 = scalar_lea.sflag [#allocation12], %s743
        %s745 = sand.u32 %s469, 1
        %s746 = smul.addr %s745, 16
        %s747 = scalar_lea.vmem [#allocation11], %s746
        %p748 = pneg %p508
        %p749 = pneg %p505
        %s750 = sand.u32 %s47, 1
        %s751 = scalar_lea.sflag [#allocation12], %s750
        %s752 = sand.u32 %s495, 1
        %s753 = smul.addr %s752, 16
        %s754 = scalar_lea.vmem [#allocation13], %s753
        %p755 = pneg %p534
        %p756 = pneg %p531
        %s757 = sand.u32 %s521, 1
        %s758 = scalar_lea.sflag [#allocation15], %s757
        %s759 = sand.u32 %s521, 1
        %s760 = smul.addr %s759, 64
        %s761 = scalar_lea.vmem [#allocation14], %s760
        %p762 = scmp.lt.s32.totalorder %s47, 1
        %s763 = scalar_select %p762, %s47, 1
        %s764 = smul.addr %s763, 2
        %s765 = smul.addr %s764, 8
        %s766 = scalar_lea.vmem %s0, %s765
        %v768 = vld [vmem:[%s766] sm:$0xff]
        %v769 = vld [vmem:[%s766 + $0x8] sm:$0xff]
        %v770 = vld [vmem:[%s671] sm:$0xff]
        %v771 = vld [vmem:[%s671 + $0x8] sm:$0xff]
        %v772 = vlaneseq
        %v773 = vshrl.u32 %v772, 7
        %v774 = vadd.s32 %v773, 8
        %v775 = vlaneseq
        %v776 = vand.u32 %v775, 127
        %v777 = vadd.s32 %v773, 1
        %v778 = vadd.s32 %v774, 1
        %vm779 = vcmp.eq.s32.totalorder %v776, %v777
        %vm780 = vcmp.eq.s32.totalorder %v776, %v778
        %v781 = vsub.s32 %v773, 1
        %v782 = vsub.s32 %v774, 1
        %vm783 = vcmp.eq.s32.totalorder %v776, %v781
        %vm784 = vcmp.eq.s32.totalorder %v776, %v782
        %vm785 = vcmp.eq.s32.totalorder %v776, %v773
        %vm786 = vcmp.eq.s32.totalorder %v776, %v774
        %v787 = vld [vmem:[%s2] sm:$0x1]
        %v788 = vld [vmem:[%s3] sm:$0x1]
        %vm789 = vcmask 261120
        %v790 = vsel %vm789, %v768, 0.0
        %791 = vadd.xlane.f32.xlu0 %v790
        %v792 = vpop.xlane.xlu0 %791
        %v793 = vsel %vm789, %v769, 0.0
        %794 = vadd.xlane.f32.xlu0 %v793
        %v795 = vpop.xlane.xlu0 %794
        %v796 = vrcp.pop 32.0
        %v797 = vmul.f32 %v792, %v796
        %v798 = vmul.f32 %v795, %v796
        %v799 = vsub.f32 %v768, %v797
        %v800 = vsub.f32 %v769, %v798
        %v801 = vmul.f32 %v799, %v799
        %v802 = vmul.f32 %v800, %v800
        %v803 = vsel %vm789, %v801, 0.0
        %804 = vadd.xlane.f32.xlu0 %v803
        %v805 = vpop.xlane.xlu0 %804
        %v806 = vsel %vm789, %v802, 0.0
        %807 = vadd.xlane.f32.xlu0 %v806
        %v808 = vpop.xlane.xlu0 %807
        %v809 = vmul.f32 %v805, %v796
        %v810 = vmul.f32 %v808, %v796
        %v811 = vadd.f32 %v809, 1e-05
        %v812 = vadd.f32 %v810, 1e-05
        %v813 = vrsqrt.pop %v811
        %v814 = vrsqrt.pop %v812
        %v815 = vmul.f32 %v799, %v813
        %v816 = vmul.f32 %v800, %v814
        %v818 = vlaneseq
        %v819 = vshrl.u32 %v818, 7
        %v820 = vsub.s32 0, %v819
        %v821 = vrot.slane %v787, %v820
        %v823 = vmul.f32 %v815, %v821
        %v824 = vmul.f32 %v816, %v821
        %v826 = vlaneseq
        %v827 = vshrl.u32 %v826, 7
        %v828 = vsub.s32 0, %v827
        %v829 = vrot.slane %v788, %v828
        %v831 = vadd.f32 %v823, %v829
        %v832 = vadd.f32 %v824, %v829
        %v833 = vpack.c.bf16 %v832, %v831
        %v834 = vld [vmem:[%s4] sm:$0xf]
        %v835 = vld [vmem:[%s4 + $0x4] sm:$0xf]
        %v836 = vld [vmem:[%s4 + $0x8] sm:$0xf]
        %v837 = vld [vmem:[%s4 + $0xc] sm:$0xf]
        %v838 = vld [vmem:[%s5] sm:$0x1]
        %v840 = vlaneseq
        %v841 = vshrl.u32 %v840, 7
        %v842 = vsub.s32 0, %v841
        %v843 = vrot.slane %v838, %v842
        %v849 = vunpack.c.l.b16 %v834
        %v850 = vunpack.c.l.b16 %v835
        %v851 = vunpack.c.l.b16 %v836
        %v852 = vunpack.c.l.b16 %v837
        %v853 = vpack.c.b16 %v850, %v849
        %v854 = vpack.c.b16 %v852, %v851
        %v858 = vsel %vm789, %v833, 0
        %860 = vmatprep.subr.bf16.mxu0 0
        %861 = vmatpush1.bf16.msra.mxu0 0
        %862 = vmatprep.subr.bf16.mxu0 0
        %863 = vmatpush1.bf16.msra.mxu0 0
        %864 = vmatprep.subr.bf16.mxu0 0
        %865 = vmatpush1.bf16.msra.mxu0 0
        %866 = vmatprep.subr.bf16.mxu0 0
        %867 = vmatpush1.bf16.msra.mxu0 0
        %868 = vmatprep.subr.bf16.mxu0 0
        %869 = vmatpush1.bf16.msra.mxu0 0
        %870 = vmatprep.subr.bf16.mxu0 0
        %871 = vmatpush1.bf16.msra.mxu0 0
        %872 = vmatprep.subr.bf16.mxu0 0
        %873 = vmatpush1.bf16.msra.mxu0 %v854
        %874 = vmatprep.subr.bf16.mxu0 0
        %875 = vmatpush1.bf16.msra.mxu0 %v853
        %876 = vmatprep.subr.bf16.mxu0 0
        %877 = vmatpush2.bf16.msra.mxu0 0
        %878 = vmatprep.subr.bf16.mxu0 0
        %879 = vmatpush2.bf16.msra.mxu0 0
        %880 = vmatprep.subr.bf16.mxu0 0
        %881 = vmatpush2.bf16.msra.mxu0 0
        %882 = vmatprep.subr.bf16.mxu0 0
        %883 = vmatpush2.bf16.msra.mxu0 0
        %884 = vmatprep.subr.bf16.mxu0 0
        %885 = vmatpush2.bf16.msra.mxu0 0
        %886 = vmatprep.subr.bf16.mxu0 0
        %887 = vmatpush2.bf16.msra.mxu0 0
        %888 = vmatprep.subr.bf16.mxu0 0
        %889 = vmatpush2.bf16.msra.mxu0 0
        %890 = vmatprep.subr.bf16.mxu0 0
        %891 = vmatpush2.bf16.msra.mxu0 0
        %892 = vmatprep.mubr.bf16.mxu0 0
        %893 = vmatmul.mubr.bf16.gmra.mxu0 %v858
        %v894 = vpop.f32.mrf.mxu0
        %v895 = vadd.f32 %v843, %v894
        %v896 = vpop.f32.mrf.mxu0
        %v897 = vpop.f32.mrf.mxu0
        %v898 = vadd.f32 %v843, %v897
        %v899 = vpop.f32.mrf.mxu0
        %900 = vdwg.mxu0
        %903 = vrot.lane.b32.xlu0 %v895, 96
        %v904 = vpop.permute.xlu0 %903
        %905 = vrot.lane.b32.xlu0 %v898, 96
        %v906 = vpop.permute.xlu0 %905
        %v909 = vrot.slane %v904, 1
        %v910 = vrot.slane %v906, 1
        %vm911 = vcmp.lt.s32.totalorder %v773, 7
        %v912 = vsel %vm911, %v909, %v910
        %v913 = vsel %vm911, %v910, %v909
        %v914 = vrot.slane %v904, 7
        %v915 = vrot.slane %v906, 7
        %vm916 = vcmp.lt.s32.totalorder %v773, 1
        %v917 = vsel %vm916, %v914, %v915
        %v918 = vsel %vm916, %v915, %v914
        %v919 = vmul.f32 %v895, %v912
        %v920 = vmul.f32 %v898, %v913
        %v921 = vsel %vm789, %v919, 0.0
        %922 = vadd.xlane.f32.xlu0 %v921
        %v923 = vpop.xlane.xlu0 %922
        %v924 = vsel %vm789, %v920, 0.0
        %925 = vadd.xlane.f32.xlu0 %v924
        %v926 = vpop.xlane.xlu0 %925
        %v927 = vmul.f32 %v923, 0.03125
        %v928 = vmul.f32 %v926, 0.03125
        %v929 = vmul.f32 %v895, %v918
        %v930 = vmul.f32 %v898, %v917
        %v931 = vsel %vm789, %v929, 0.0
        %932 = vadd.xlane.f32.xlu0 %v931
        %v933 = vpop.xlane.xlu0 %932
        %v934 = vsel %vm789, %v930, 0.0
        %935 = vadd.xlane.f32.xlu0 %v934
        %v936 = vpop.xlane.xlu0 %935
        %v937 = vmul.f32 %v933, 0.03125
        %v938 = vmul.f32 %v936, 0.03125
        %vm939 = vcmp.eq.s32.totalorder %v773, 15
        %vm940 = vcmp.eq.s32.totalorder %v774, 15
        %v941 = vsel %vm939, -1e+09, %v927
        %v942 = vsel %vm940, -1e+09, %v928
        %vm943 = vcmp.eq.s32.totalorder %v773, 0
        %vm944 = vcmp.eq.s32.totalorder %v774, 0
        %v945 = vsel %vm943, -1e+09, %v937
        %v946 = vsel %vm944, -1e+09, %v938
        %v947 = vmax.f32 %v941, %v945
        %v948 = vmax.f32 %v942, %v946
        %v949 = vsub.f32 %v941, %v947
        %v950 = vsub.f32 %v942, %v948
        %v951 = vmul.f32 %v949, 1.442695
        %v952 = vpow.pop %v951
        %v953 = vmul.f32 %v950, 1.442695
        %v954 = vpow.pop %v953
        %v955 = vsub.f32 %v945, %v947
        %v956 = vsub.f32 %v946, %v948
        %v957 = vmul.f32 %v955, 1.442695
        %v958 = vpow.pop %v957
        %v959 = vmul.f32 %v956, 1.442695
        %v960 = vpow.pop %v959
        %v961 = vadd.f32 %v952, %v958
        %v962 = vadd.f32 %v954, %v960
        %v963 = vrcp.pop %v961
        %v964 = vmul.f32 1.0, %v963
        %v965 = vrcp.pop %v962
        %v966 = vmul.f32 1.0, %v965
        %v967 = vmul.f32 %v952, %v964
        %v968 = vmul.f32 %v954, %v966
        %v969 = vmul.f32 %v958, %v964
        %v970 = vmul.f32 %v960, %v966
        %v971 = vsel %vm779, 1, 0
        %v972 = vsel %vm780, 1, 0
        %v973 = vcvt.s32.f32 %v971
        %v974 = vcvt.s32.f32 %v972
        %v975 = vsel %vm783, 1, 0
        %v976 = vsel %vm784, 1, 0
        %v977 = vcvt.s32.f32 %v975
        %v978 = vcvt.s32.f32 %v976
        %vm979 = vcmask 130048
        %v981 = vsel %vm979, %v973, 0
        %v984 = vsel %vm979, %v974, 0
        %986 = vmatprep.subr.mxu0 0.0
        %987 = vmatpush1.msra.mxu0 0.0
        %988 = vmatprep.subr.mxu0 0.0
        %989 = vmatpush1.msra.mxu0 0.0
        %990 = vmatprep.subr.mxu0 0.0
        %991 = vmatpush1.msra.mxu0 0.0
        %992 = vmatprep.subr.mxu0 0.0
        %993 = vmatpush1.msra.mxu0 0.0
        %994 = vmatprep.subr.mxu0 0.0
        %995 = vmatpush1.msra.mxu0 0.0
        %996 = vmatprep.subr.mxu0 0.0
        %997 = vmatpush1.msra.mxu0 0.0
        %998 = vmatprep.subr.mxu0 0.0
        %999 = vmatpush1.msra.mxu0 0.0
        %1000 = vmatprep.subr.mxu0 0.0
        %1001 = vmatpush1.msra.mxu0 0.0
        %1002 = vmatprep.subr.mxu0 0.0
        %1003 = vmatpush1.msra.mxu0 0.0
        %1004 = vmatprep.subr.mxu0 0.0
        %1005 = vmatpush1.msra.mxu0 0.0
        %1006 = vmatprep.subr.mxu0 0.0
        %1007 = vmatpush1.msra.mxu0 0.0
        %1008 = vmatprep.subr.mxu0 0.0
        %1009 = vmatpush1.msra.mxu0 0.0
        %1010 = vmatprep.subr.mxu0 0.0
        %1011 = vmatpush1.msra.mxu0 0.0
        %1012 = vmatprep.subr.mxu0 0.0
        %1013 = vmatpush1.msra.mxu0 0.0
        %1014 = vmatprep.subr.mxu0 0.0
        %1015 = vmatpush1.msra.mxu0 %v970
        %1016 = vmatprep.subr.mxu0 0.0
        %1017 = vmatpush1.msra.mxu0 %v969
        %1018 = vmatprep.subr.mxu0 0.0
        %1019 = vmatpush2.msra.mxu0 0.0
        %1020 = vmatprep.subr.mxu0 0.0
        %1021 = vmatpush2.msra.mxu0 0.0
        %1022 = vmatprep.subr.mxu0 0.0
        %1023 = vmatpush2.msra.mxu0 0.0
        %1024 = vmatprep.subr.mxu0 0.0
        %1025 = vmatpush2.msra.mxu0 0.0
        %1026 = vmatprep.subr.mxu0 0.0
        %1027 = vmatpush2.msra.mxu0 0.0
        %1028 = vmatprep.subr.mxu0 0.0
        %1029 = vmatpush2.msra.mxu0 0.0
        %1030 = vmatprep.subr.mxu0 0.0
        %1031 = vmatpush2.msra.mxu0 0.0
        %1032 = vmatprep.subr.mxu0 0.0
        %1033 = vmatpush2.msra.mxu0 0.0
        %1034 = vmatprep.subr.mxu0 0.0
        %1035 = vmatpush2.msra.mxu0 0.0
        %1036 = vmatprep.subr.mxu0 0.0
        %1037 = vmatpush2.msra.mxu0 0.0
        %1038 = vmatprep.subr.mxu0 0.0
        %1039 = vmatpush2.msra.mxu0 0.0
        %1040 = vmatprep.subr.mxu0 0.0
        %1041 = vmatpush2.msra.mxu0 0.0
        %1042 = vmatprep.subr.mxu0 0.0
        %1043 = vmatpush2.msra.mxu0 0.0
        %1044 = vmatprep.subr.mxu0 0.0
        %1045 = vmatpush2.msra.mxu0 0.0
        %1046 = vmatprep.subr.mxu0 0.0
        %1047 = vmatpush2.msra.mxu0 0.0
        %1048 = vmatprep.subr.mxu0 0.0
        %1049 = vmatpush2.msra.mxu0 0.0
        %1050 = vmatprep.mubr.f32.mxu0 0.0
        %1051 = vmatmul.mubr.f32.gmra.mxu0 %v981
        %v1052 = vpop.f32.mrf.mxu0
        %v1053 = vadd.f32 0.0, %v1052
        %v1054 = vpop.f32.mrf.mxu0
        %1055 = vmatprep.mubr.f32.mxu0 0.0
        %1056 = vmatmul.mubr.f32.gmra.mxu0 %v984
        %v1057 = vpop.f32.mrf.mxu0
        %v1058 = vadd.f32 0.0, %v1057
        %v1059 = vpop.f32.mrf.mxu0
        %1060 = vdwg.mxu0
        %v1061 = vmul.f32 %v967, %v1053
        %v1062 = vmul.f32 %v968, %v1058
        %v1063 = vadd.f32 %v1061, 1e-09
        %v1064 = vadd.f32 %v1062, 1e-09
        %v1065 = vrsqrt.pop %v1063
        %v1066 = vmul.f32 %v1063, %v1065
        %vm1067 = vcmp.eq.f32.partialorder %v1063, inf
        %v1068 = vsel %vm1067, %v1063, %v1066
        %vm1069 = vcmp.eq.f32.partialorder %v1063, 0.0
        %v1070 = vand.u32 %v1063, 2147483648
        %v1071 = vsel %vm1069, %v1070, %v1068
        %v1072 = vrsqrt.pop %v1064
        %v1073 = vmul.f32 %v1064, %v1072
        %vm1074 = vcmp.eq.f32.partialorder %v1064, inf
        %v1075 = vsel %vm1074, %v1064, %v1073
        %vm1076 = vcmp.eq.f32.partialorder %v1064, 0.0
        %v1077 = vand.u32 %v1064, 2147483648
        %v1078 = vsel %vm1076, %v1077, %v1075
        %v1080 = vsel %vm979, %v977, 0
        %v1083 = vsel %vm979, %v978, 0
        %1085 = vmatprep.subr.mxu0 0.0
        %1086 = vmatpush1.msra.mxu0 0.0
        %1087 = vmatprep.subr.mxu0 0.0
        %1088 = vmatpush1.msra.mxu0 0.0
        %1089 = vmatprep.subr.mxu0 0.0
        %1090 = vmatpush1.msra.mxu0 0.0
        %1091 = vmatprep.subr.mxu0 0.0
        %1092 = vmatpush1.msra.mxu0 0.0
        %1093 = vmatprep.subr.mxu0 0.0
        %1094 = vmatpush1.msra.mxu0 0.0
        %1095 = vmatprep.subr.mxu0 0.0
        %1096 = vmatpush1.msra.mxu0 0.0
        %1097 = vmatprep.subr.mxu0 0.0
        %1098 = vmatpush1.msra.mxu0 0.0
        %1099 = vmatprep.subr.mxu0 0.0
        %1100 = vmatpush1.msra.mxu0 0.0
        %1101 = vmatprep.subr.mxu0 0.0
        %1102 = vmatpush1.msra.mxu0 0.0
        %1103 = vmatprep.subr.mxu0 0.0
        %1104 = vmatpush1.msra.mxu0 0.0
        %1105 = vmatprep.subr.mxu0 0.0
        %1106 = vmatpush1.msra.mxu0 0.0
        %1107 = vmatprep.subr.mxu0 0.0
        %1108 = vmatpush1.msra.mxu0 0.0
        %1109 = vmatprep.subr.mxu0 0.0
        %1110 = vmatpush1.msra.mxu0 0.0
        %1111 = vmatprep.subr.mxu0 0.0
        %1112 = vmatpush1.msra.mxu0 0.0
        %1113 = vmatprep.subr.mxu0 0.0
        %1114 = vmatpush1.msra.mxu0 %v1078
        %1115 = vmatprep.subr.mxu0 0.0
        %1116 = vmatpush1.msra.mxu0 %v1071
        %1117 = vmatprep.subr.mxu0 0.0
        %1118 = vmatpush2.msra.mxu0 0.0
        %1119 = vmatprep.subr.mxu0 0.0
        %1120 = vmatpush2.msra.mxu0 0.0
        %1121 = vmatprep.subr.mxu0 0.0
        %1122 = vmatpush2.msra.mxu0 0.0
        %1123 = vmatprep.subr.mxu0 0.0
        %1124 = vmatpush2.msra.mxu0 0.0
        %1125 = vmatprep.subr.mxu0 0.0
        %1126 = vmatpush2.msra.mxu0 0.0
        %1127 = vmatprep.subr.mxu0 0.0
        %1128 = vmatpush2.msra.mxu0 0.0
        %1129 = vmatprep.subr.mxu0 0.0
        %1130 = vmatpush2.msra.mxu0 0.0
        %1131 = vmatprep.subr.mxu0 0.0
        %1132 = vmatpush2.msra.mxu0 0.0
        %1133 = vmatprep.subr.mxu0 0.0
        %1134 = vmatpush2.msra.mxu0 0.0
        %1135 = vmatprep.subr.mxu0 0.0
        %1136 = vmatpush2.msra.mxu0 0.0
        %1137 = vmatprep.subr.mxu0 0.0
        %1138 = vmatpush2.msra.mxu0 0.0
        %1139 = vmatprep.subr.mxu0 0.0
        %1140 = vmatpush2.msra.mxu0 0.0
        %1141 = vmatprep.subr.mxu0 0.0
        %1142 = vmatpush2.msra.mxu0 0.0
        %1143 = vmatprep.subr.mxu0 0.0
        %1144 = vmatpush2.msra.mxu0 0.0
        %1145 = vmatprep.subr.mxu0 0.0
        %1146 = vmatpush2.msra.mxu0 0.0
        %1147 = vmatprep.subr.mxu0 0.0
        %1148 = vmatpush2.msra.mxu0 0.0
        %1149 = vmatprep.mubr.f32.mxu0 0.0
        %1150 = vmatmul.mubr.f32.gmra.mxu0 %v1080
        %v1151 = vpop.f32.mrf.mxu0
        %v1152 = vadd.f32 0.0, %v1151
        %v1153 = vpop.f32.mrf.mxu0
        %1154 = vmatprep.mubr.f32.mxu0 0.0
        %1155 = vmatmul.mubr.f32.gmra.mxu0 %v1083
        %v1156 = vpop.f32.mrf.mxu0
        %v1157 = vadd.f32 0.0, %v1156
        %v1158 = vpop.f32.mrf.mxu0
        %1159 = vdwg.mxu0
        %1161 = vset.pattern.permute.xlu0 0
        %1162 = vperm.xlu0 %1161, %v1152
        %v1163 = vpop.permute.xlu0 %1162
        %1166 = vset.pattern.permute.xlu0 0
        %1167 = vperm.xlu0 %1166, %v1157
        %v1168 = vpop.permute.xlu0 %1167
        %v1170 = vsel %vm783, %v1163, 3.1622778e-05
        %v1171 = vsel %vm784, %v1168, 3.1622778e-05
        %1173 = vset.pattern.permute.xlu0 0
        %1174 = vperm.xlu0 %1173, %v1071
        %v1175 = vpop.permute.xlu0 %1174
        %1178 = vset.pattern.permute.xlu0 0
        %1179 = vperm.xlu0 %1178, %v1078
        %v1180 = vpop.permute.xlu0 %1179
        %v1182 = vsel %vm779, %v1175, %v1170
        %v1183 = vsel %vm780, %v1180, %v1171
        %v1184 = vsub.f32 1.0, %v770
        %v1185 = vsub.f32 1.0, %v771
        %v1186 = vmul.f32 %v1184, %v1182
        %v1187 = vmul.f32 %v1185, %v1183
        %v1188 = vadd.f32 %v770, %v1186
        %v1189 = vadd.f32 %v771, %v1187
        %v1190 = vsel %vm779, %v770, 0.0
        %v1191 = vsel %vm780, %v771, 0.0
        %v1192 = vsel %vm979, %v1190, 0.0
        %1193 = vadd.xlane.f32.xlu0 %v1192
        %v1194 = vpop.xlane.xlu0 %1193
        %v1195 = vsel %vm979, %v1191, 0.0
        %1196 = vadd.xlane.f32.xlu0 %v1195
        %v1197 = vpop.xlane.xlu0 %1196
        %v1198 = vsub.f32 1.0, %v1194
        %v1199 = vsub.f32 1.0, %v1197
        %v1200 = vmul.f32 %v1198, %v1071
        %v1201 = vmul.f32 %v1199, %v1078
        %v1202 = vadd.f32 %v1194, %v1200
        %v1203 = vadd.f32 %v1197, %v1201
        %v1204 = vadd.f32 %v1202, 1e-09
        %v1205 = vadd.f32 %v1203, 1e-09
        %v1206 = vlog2.pop %v1204
        %v1207 = vmul.f32 %v1206, 0.6931472
        %v1208 = vlog2.pop %v1205
        %v1209 = vmul.f32 %v1208, 0.6931472
        %vm1210 = vcmp.lt.s32.totalorder %v776, %v773
        %vm1211 = vcmp.lt.s32.totalorder %v776, %v774
        %v1212 = vsel %vm1210, 1, 0
        %v1213 = vsel %vm1211, 1, 0
        %v1214 = vcvt.s32.f32 %v1212
        %v1215 = vcvt.s32.f32 %v1213
        %v1217 = vsel %vm979, %v1214, 0
        %v1220 = vsel %vm979, %v1215, 0
        %1222 = vmatprep.subr.mxu0 0.0
        %1223 = vmatpush1.msra.mxu0 0.0
        %1224 = vmatprep.subr.mxu0 0.0
        %1225 = vmatpush1.msra.mxu0 0.0
        %1226 = vmatprep.subr.mxu0 0.0
        %1227 = vmatpush1.msra.mxu0 0.0
        %1228 = vmatprep.subr.mxu0 0.0
        %1229 = vmatpush1.msra.mxu0 0.0
        %1230 = vmatprep.subr.mxu0 0.0
        %1231 = vmatpush1.msra.mxu0 0.0
        %1232 = vmatprep.subr.mxu0 0.0
        %1233 = vmatpush1.msra.mxu0 0.0
        %1234 = vmatprep.subr.mxu0 0.0
        %1235 = vmatpush1.msra.mxu0 0.0
        %1236 = vmatprep.subr.mxu0 0.0
        %1237 = vmatpush1.msra.mxu0 0.0
        %1238 = vmatprep.subr.mxu0 0.0
        %1239 = vmatpush1.msra.mxu0 0.0
        %1240 = vmatprep.subr.mxu0 0.0
        %1241 = vmatpush1.msra.mxu0 0.0
        %1242 = vmatprep.subr.mxu0 0.0
        %1243 = vmatpush1.msra.mxu0 0.0
        %1244 = vmatprep.subr.mxu0 0.0
        %1245 = vmatpush1.msra.mxu0 0.0
        %1246 = vmatprep.subr.mxu0 0.0
        %1247 = vmatpush1.msra.mxu0 0.0
        %1248 = vmatprep.subr.mxu0 0.0
        %1249 = vmatpush1.msra.mxu0 0.0
        %1250 = vmatprep.subr.mxu0 0.0
        %1251 = vmatpush1.msra.mxu0 %v1209
        %1252 = vmatprep.subr.mxu0 0.0
        %1253 = vmatpush1.msra.mxu0 %v1207
        %1254 = vmatprep.subr.mxu0 0.0
        %1255 = vmatpush2.msra.mxu0 0.0
        %1256 = vmatprep.subr.mxu0 0.0
        %1257 = vmatpush2.msra.mxu0 0.0
        %1258 = vmatprep.subr.mxu0 0.0
        %1259 = vmatpush2.msra.mxu0 0.0
        %1260 = vmatprep.subr.mxu0 0.0
        %1261 = vmatpush2.msra.mxu0 0.0
        %1262 = vmatprep.subr.mxu0 0.0
        %1263 = vmatpush2.msra.mxu0 0.0
        %1264 = vmatprep.subr.mxu0 0.0
        %1265 = vmatpush2.msra.mxu0 0.0
        %1266 = vmatprep.subr.mxu0 0.0
        %1267 = vmatpush2.msra.mxu0 0.0
        %1268 = vmatprep.subr.mxu0 0.0
        %1269 = vmatpush2.msra.mxu0 0.0
        %1270 = vmatprep.subr.mxu0 0.0
        %1271 = vmatpush2.msra.mxu0 0.0
        %1272 = vmatprep.subr.mxu0 0.0
        %1273 = vmatpush2.msra.mxu0 0.0
        %1274 = vmatprep.subr.mxu0 0.0
        %1275 = vmatpush2.msra.mxu0 0.0
        %1276 = vmatprep.subr.mxu0 0.0
        %1277 = vmatpush2.msra.mxu0 0.0
        %1278 = vmatprep.subr.mxu0 0.0
        %1279 = vmatpush2.msra.mxu0 0.0
        %1280 = vmatprep.subr.mxu0 0.0
        %1281 = vmatpush2.msra.mxu0 0.0
        %1282 = vmatprep.subr.mxu0 0.0
        %1283 = vmatpush2.msra.mxu0 0.0
        %1284 = vmatprep.subr.mxu0 0.0
        %1285 = vmatpush2.msra.mxu0 0.0
        %1286 = vmatprep.mubr.f32.mxu0 0.0
        %1287 = vmatmul.mubr.f32.gmra.mxu0 %v1217
        %v1288 = vpop.f32.mrf.mxu0
        %v1289 = vadd.f32 0.0, %v1288
        %v1290 = vpop.f32.mrf.mxu0
        %1291 = vmatprep.mubr.f32.mxu0 0.0
        %1292 = vmatmul.mubr.f32.gmra.mxu0 %v1220
        %v1293 = vpop.f32.mrf.mxu0
        %v1294 = vadd.f32 0.0, %v1293
        %v1295 = vpop.f32.mrf.mxu0
        %1296 = vdwg.mxu0
        %vm1297 = vcmp.lt.s32.totalorder %v773, %v776
        %vm1298 = vcmp.lt.s32.totalorder %v774, %v776
        %1300 = vset.pattern.permute.xlu0 0
        %1301 = vperm.xlu0 %1300, %v1207
        %v1302 = vpop.permute.xlu0 %1301
        %1305 = vset.pattern.permute.xlu0 0
        %1306 = vperm.xlu0 %1305, %v1209
        %v1307 = vpop.permute.xlu0 %1306
        %v1309 = vsel %vm1297, %v1302, 0.0
        %v1310 = vsel %vm1298, %v1307, 0.0
        %v1311 = vsel %vm979, %v1309, 0.0
        %v1312 = vsel %vm979, %v1310, 0.0
        %v1313 = vadd.f32 %v1311, %v1312
        %v1314 = vrot.slane %v1313, 4
        %v1315 = vadd.f32 %v1313, %v1314
        %v1316 = vrot.slane %v1315, 2
        %v1317 = vadd.f32 %v1315, %v1316
        %v1318 = vrot.slane %v1317, 1
        %v1319 = vadd.f32 %v1317, %v1318
        %1321 = vset.pattern.permute.xlu0 0
        %1322 = vperm.xlu0 %1321, %v1289
        %v1323 = vpop.permute.xlu0 %1322
        %1326 = vset.pattern.permute.xlu0 0
        %1327 = vperm.xlu0 %1326, %v1294
        %v1328 = vpop.permute.xlu0 %1327
        %v1330 = vsub.f32 %v1319, %v1323
        %v1331 = vsub.f32 %v1319, %v1328
        %vm1332 = vcmp.ge.s32.totalorder %v776, %v773
        %vm1333 = vcmp.ge.s32.totalorder %v776, %v774
        %v1334 = vsub.f32 0.0, %v1330
        %v1335 = vsub.f32 0.0, %v1331
        %v1336 = vsel %vm1332, %v1330, %v1334
        %v1337 = vsel %vm1333, %v1331, %v1335
        %v1338 = vmul.f32 %v1336, 1.442695
        %v1339 = vpow.pop %v1338
        %v1340 = vmul.f32 %v1337, 1.442695
        %v1341 = vpow.pop %v1340
        %v1342 = vadd.f32 %v1339, 1e-09
        %v1343 = vadd.f32 %v1341, 1e-09
        %v1344 = vsel %vm785, %v1188, %v1342
        %v1345 = vsel %vm786, %v1189, %v1343
        %v1346 = vld [vmem:[%s6] sm:$0x1]
        %v1347 = vld [vmem:[%s7] sm:$0x1]
        %v1349 = vlaneseq
        %v1350 = vshrl.u32 %v1349, 7
        %v1351 = vsub.s32 0, %v1350
        %v1352 = vrot.slane %v1346, %v1351
        %v1354 = vmul.f32 %v815, %v1352
        %v1355 = vmul.f32 %v816, %v1352
        %v1357 = vlaneseq
        %v1358 = vshrl.u32 %v1357, 7
        %v1359 = vsub.s32 0, %v1358
        %v1360 = vrot.slane %v1347, %v1359
        %v1362 = vadd.f32 %v1354, %v1360
        %v1363 = vadd.f32 %v1355, %v1360
        %v1364 = vpack.c.bf16 %v1363, %v1362
        %v1365 = vld [vmem:[#allocation5] sm:$0xf]
        %v1366 = vld [vmem:[#allocation5 + $0x4] sm:$0xf]
        %v1367 = vld [vmem:[#allocation5 + $0x8] sm:$0xf]
        %v1368 = vld [vmem:[#allocation5 + $0xc] sm:$0xf]
        %v1369 = vld [vmem:[%s9] sm:$0x1]
        %v1371 = vlaneseq
        %v1372 = vshrl.u32 %v1371, 7
        %v1373 = vsub.s32 0, %v1372
        %v1374 = vrot.slane %v1369, %v1373
        %v1380 = vunpack.c.l.b16 %v1365
        %v1381 = vunpack.c.l.b16 %v1366
        %v1382 = vunpack.c.l.b16 %v1367
        %v1383 = vunpack.c.l.b16 %v1368
        %v1384 = vpack.c.b16 %v1381, %v1380
        %v1385 = vpack.c.b16 %v1383, %v1382
        %v1389 = vsel %vm789, %v1364, 0
        %1391 = vmatprep.subr.bf16.mxu0 0
        %1392 = vmatpush1.bf16.msra.mxu0 0
        %1393 = vmatprep.subr.bf16.mxu0 0
        %1394 = vmatpush1.bf16.msra.mxu0 0
        %1395 = vmatprep.subr.bf16.mxu0 0
        %1396 = vmatpush1.bf16.msra.mxu0 0
        %1397 = vmatprep.subr.bf16.mxu0 0
        %1398 = vmatpush1.bf16.msra.mxu0 0
        %1399 = vmatprep.subr.bf16.mxu0 0
        %1400 = vmatpush1.bf16.msra.mxu0 0
        %1401 = vmatprep.subr.bf16.mxu0 0
        %1402 = vmatpush1.bf16.msra.mxu0 0
        %1403 = vmatprep.subr.bf16.mxu0 0
        %1404 = vmatpush1.bf16.msra.mxu0 %v1385
        %1405 = vmatprep.subr.bf16.mxu0 0
        %1406 = vmatpush1.bf16.msra.mxu0 %v1384
        %1407 = vmatprep.subr.bf16.mxu0 0
        %1408 = vmatpush2.bf16.msra.mxu0 0
        %1409 = vmatprep.subr.bf16.mxu0 0
        %1410 = vmatpush2.bf16.msra.mxu0 0
        %1411 = vmatprep.subr.bf16.mxu0 0
        %1412 = vmatpush2.bf16.msra.mxu0 0
        %1413 = vmatprep.subr.bf16.mxu0 0
        %1414 = vmatpush2.bf16.msra.mxu0 0
        %1415 = vmatprep.subr.bf16.mxu0 0
        %1416 = vmatpush2.bf16.msra.mxu0 0
        %1417 = vmatprep.subr.bf16.mxu0 0
        %1418 = vmatpush2.bf16.msra.mxu0 0
        %1419 = vmatprep.subr.bf16.mxu0 0
        %1420 = vmatpush2.bf16.msra.mxu0 0
        %1421 = vmatprep.subr.bf16.mxu0 0
        %1422 = vmatpush2.bf16.msra.mxu0 0
        %1423 = vmatprep.mubr.bf16.mxu0 0
        %1424 = vmatmul.mubr.bf16.gmra.mxu0 %v1389
        %v1425 = vpop.f32.mrf.mxu0
        %v1426 = vadd.f32 %v1374, %v1425
        %v1427 = vpop.f32.mrf.mxu0
        %v1428 = vpop.f32.mrf.mxu0
        %v1429 = vadd.f32 %v1374, %v1428
        %v1430 = vpop.f32.mrf.mxu0
        %1431 = vdwg.mxu0
        %1434 = vrot.lane.b32.xlu0 %v1426, 120
        %v1435 = vpop.permute.xlu0 %1434
        %1436 = vrot.lane.b32.xlu0 %v1429, 120
        %v1437 = vpop.permute.xlu0 %1436
        %1440 = vrot.lane.b32.xlu0 %v1426, 112
        %v1441 = vpop.permute.xlu0 %1440
        %1442 = vrot.lane.b32.xlu0 %v1429, 112
        %v1443 = vpop.permute.xlu0 %1442
        %1446 = vrot.lane.b32.xlu0 %v1426, 104
        %v1447 = vpop.permute.xlu0 %1446
        %1448 = vrot.lane.b32.xlu0 %v1429, 104
        %v1449 = vpop.permute.xlu0 %1448
        %v1452 = vmul.f32 %v1426, 0.35355338
        %v1453 = vmul.f32 %v1429, 0.35355338
        %v1454 = vmul.f32 %v1435, 0.35355338
        %v1455 = vmul.f32 %v1437, 0.35355338
        %v1456 = vmul.f32 %v1441, 0.35355338
        %v1457 = vmul.f32 %v1443, 0.35355338
        %v1458 = vmul.f32 %v1447, 0.35355338
        %v1459 = vmul.f32 %v1449, 0.35355338
        %v1460 = vpack.c.bf16 %v1453, %v1452
        %v1461 = vpack.c.bf16 %v1455, %v1454
        %v1462 = vpack.c.bf16 %v1457, %v1456
        %v1463 = vpack.c.bf16 %v1459, %v1458
        %v1464 = vpack.c.bf16 %v1429, %v1426
        %v1465 = vpack.c.bf16 %v1437, %v1435
        %v1466 = vpack.c.bf16 %v1443, %v1441
        %v1467 = vpack.c.bf16 %v1449, %v1447
        %1469 = vrot.lane.b32.xlu0 %v1464, 96
        %v1470 = vpop.permute.xlu0 %1469
        %vm1471 = vcmask 64512
        %v1473 = vsel %vm1471, %v1460, 0
        %v1476 = vsel %vm1471, %v1470, 0
        %1478 = vmatprep.subr.bf16.mxu0 0
        %1479 = vmatpush1.bf16.xpose.msra.mxu0 0
        %1480 = vmatprep.subr.bf16.mxu0 0
        %1481 = vmatpush1.bf16.xpose.msra.mxu0 0
        %1482 = vmatprep.subr.bf16.mxu0 0
        %1483 = vmatpush1.bf16.xpose.msra.mxu0 0
        %1484 = vmatprep.subr.bf16.mxu0 0
        %1485 = vmatpush1.bf16.xpose.msra.mxu0 0
        %1486 = vmatprep.subr.bf16.mxu0 0
        %1487 = vmatpush1.bf16.xpose.msra.mxu0 0
        %1488 = vmatprep.subr.bf16.mxu0 0
        %1489 = vmatpush1.bf16.xpose.msra.mxu0 0
        %1490 = vmatprep.subr.bf16.mxu0 0
        %1491 = vmatpush1.bf16.xpose.msra.mxu0 0
        %1492 = vmatprep.subr.bf16.mxu0 0
        %1493 = vmatpush1.bf16.xpose.msra.mxu0 %v1476
        %1494 = vmatprep.subr.bf16.mxu0 0
        %1495 = vmatpush2.bf16.xpose.msra.mxu0 0
        %1496 = vmatprep.subr.bf16.mxu0 0
        %1497 = vmatpush2.bf16.xpose.msra.mxu0 0
        %1498 = vmatprep.subr.bf16.mxu0 0
        %1499 = vmatpush2.bf16.xpose.msra.mxu0 0
        %1500 = vmatprep.subr.bf16.mxu0 0
        %1501 = vmatpush2.bf16.xpose.msra.mxu0 0
        %1502 = vmatprep.subr.bf16.mxu0 0
        %1503 = vmatpush2.bf16.xpose.msra.mxu0 0
        %1504 = vmatprep.subr.bf16.mxu0 0
        %1505 = vmatpush2.bf16.xpose.msra.mxu0 0
        %1506 = vmatprep.subr.bf16.mxu0 0
        %1507 = vmatpush2.bf16.xpose.msra.mxu0 0
        %1508 = vmatprep.subr.bf16.mxu0 0
        %1509 = vmatpush2.bf16.xpose.msra.mxu0 0
        %1510 = vmatprep.mubr.bf16.mxu0 0
        %1511 = vmatmul.mubr.bf16.gmra.mxu0 %v1473
        %v1512 = vpop.f32.mrf.mxu0
        %v1513 = vadd.f32 0.0, %v1512
        %v1514 = vpop.f32.mrf.mxu0
        %v1515 = vpop.f32.mrf.mxu0
        %v1516 = vadd.f32 0.0, %v1515
        %v1517 = vpop.f32.mrf.mxu0
        %1518 = vdwg.mxu0
        %1520 = vrot.lane.b32.xlu0 %v1465, 96
        %v1521 = vpop.permute.xlu0 %1520
        %v1523 = vsel %vm1471, %v1461, 0
        %v1526 = vsel %vm1471, %v1521, 0
        %1528 = vmatprep.subr.bf16.mxu0 0
        %1529 = vmatpush1.bf16.xpose.msra.mxu0 0
        %1530 = vmatprep.subr.bf16.mxu0 0
        %1531 = vmatpush1.bf16.xpose.msra.mxu0 0
        %1532 = vmatprep.subr.bf16.mxu0 0
        %1533 = vmatpush1.bf16.xpose.msra.mxu0 0
        %1534 = vmatprep.subr.bf16.mxu0 0
        %1535 = vmatpush1.bf16.xpose.msra.mxu0 0
        %1536 = vmatprep.subr.bf16.mxu0 0
        %1537 = vmatpush1.bf16.xpose.msra.mxu0 0
        %1538 = vmatprep.subr.bf16.mxu0 0
        %1539 = vmatpush1.bf16.xpose.msra.mxu0 0
        %1540 = vmatprep.subr.bf16.mxu0 0
        %1541 = vmatpush1.bf16.xpose.msra.mxu0 0
        %1542 = vmatprep.subr.bf16.mxu0 0
        %1543 = vmatpush1.bf16.xpose.msra.mxu0 %v1526
        %1544 = vmatprep.subr.bf16.mxu0 0
        %1545 = vmatpush2.bf16.xpose.msra.mxu0 0
        %1546 = vmatprep.subr.bf16.mxu0 0
        %1547 = vmatpush2.bf16.xpose.msra.mxu0 0
        %1548 = vmatprep.subr.bf16.mxu0 0
        %1549 = vmatpush2.bf16.xpose.msra.mxu0 0
        %1550 = vmatprep.subr.bf16.mxu0 0
        %1551 = vmatpush2.bf16.xpose.msra.mxu0 0
        %1552 = vmatprep.subr.bf16.mxu0 0
        %1553 = vmatpush2.bf16.xpose.msra.mxu0 0
        %1554 = vmatprep.subr.bf16.mxu0 0
        %1555 = vmatpush2.bf16.xpose.msra.mxu0 0
        %1556 = vmatprep.subr.bf16.mxu0 0
        %1557 = vmatpush2.bf16.xpose.msra.mxu0 0
        %1558 = vmatprep.subr.bf16.mxu0 0
        %1559 = vmatpush2.bf16.xpose.msra.mxu0 0
        %1560 = vmatprep.mubr.bf16.mxu0 0
        %1561 = vmatmul.mubr.bf16.gmra.mxu0 %v1523
        %v1562 = vpop.f32.mrf.mxu0
        %v1563 = vadd.f32 0.0, %v1562
        %v1564 = vpop.f32.mrf.mxu0
        %v1565 = vpop.f32.mrf.mxu0
        %v1566 = vadd.f32 0.0, %v1565
        %v1567 = vpop.f32.mrf.mxu0
        %1568 = vdwg.mxu0
        %1570 = vrot.lane.b32.xlu0 %v1466, 96
        %v1571 = vpop.permute.xlu0 %1570
        %v1573 = vsel %vm1471, %v1462, 0
        %v1576 = vsel %vm1471, %v1571, 0
        %1578 = vmatprep.subr.bf16.mxu0 0
        %1579 = vmatpush1.bf16.xpose.msra.mxu0 0
        %1580 = vmatprep.subr.bf16.mxu0 0
        %1581 = vmatpush1.bf16.xpose.msra.mxu0 0
        %1582 = vmatprep.subr.bf16.mxu0 0
        %1583 = vmatpush1.bf16.xpose.msra.mxu0 0
        %1584 = vmatprep.subr.bf16.mxu0 0
        %1585 = vmatpush1.bf16.xpose.msra.mxu0 0
        %1586 = vmatprep.subr.bf16.mxu0 0
        %1587 = vmatpush1.bf16.xpose.msra.mxu0 0
        %1588 = vmatprep.subr.bf16.mxu0 0
        %1589 = vmatpush1.bf16.xpose.msra.mxu0 0
        %1590 = vmatprep.subr.bf16.mxu0 0
        %1591 = vmatpush1.bf16.xpose.msra.mxu0 0
        %1592 = vmatprep.subr.bf16.mxu0 0
        %1593 = vmatpush1.bf16.xpose.msra.mxu0 %v1576
        %1594 = vmatprep.subr.bf16.mxu0 0
        %1595 = vmatpush2.bf16.xpose.msra.mxu0 0
        %1596 = vmatprep.subr.bf16.mxu0 0
        %1597 = vmatpush2.bf16.xpose.msra.mxu0 0
        %1598 = vmatprep.subr.bf16.mxu0 0
        %1599 = vmatpush2.bf16.xpose.msra.mxu0 0
        %1600 = vmatprep.subr.bf16.mxu0 0
        %1601 = vmatpush2.bf16.xpose.msra.mxu0 0
        %1602 = vmatprep.subr.bf16.mxu0 0
        %1603 = vmatpush2.bf16.xpose.msra.mxu0 0
        %1604 = vmatprep.subr.bf16.mxu0 0
        %1605 = vmatpush2.bf16.xpose.msra.mxu0 0
        %1606 = vmatprep.subr.bf16.mxu0 0
        %1607 = vmatpush2.bf16.xpose.msra.mxu0 0
        %1608 = vmatprep.subr.bf16.mxu0 0
        %1609 = vmatpush2.bf16.xpose.msra.mxu0 0
        %1610 = vmatprep.mubr.bf16.mxu0 0
        %1611 = vmatmul.mubr.bf16.gmra.mxu0 %v1573
        %v1612 = vpop.f32.mrf.mxu0
        %v1613 = vadd.f32 0.0, %v1612
        %v1614 = vpop.f32.mrf.mxu0
        %v1615 = vpop.f32.mrf.mxu0
        %v1616 = vadd.f32 0.0, %v1615
        %v1617 = vpop.f32.mrf.mxu0
        %1618 = vdwg.mxu0
        %1620 = vrot.lane.b32.xlu0 %v1467, 96
        %v1621 = vpop.permute.xlu0 %1620
        %v1623 = vsel %vm1471, %v1463, 0
        %v1626 = vsel %vm1471, %v1621, 0
        %1628 = vmatprep.subr.bf16.mxu0 0
        %1629 = vmatpush1.bf16.xpose.msra.mxu0 0
        %1630 = vmatprep.subr.bf16.mxu0 0
        %1631 = vmatpush1.bf16.xpose.msra.mxu0 0
        %1632 = vmatprep.subr.bf16.mxu0 0
        %1633 = vmatpush1.bf16.xpose.msra.mxu0 0
        %1634 = vmatprep.subr.bf16.mxu0 0
        %1635 = vmatpush1.bf16.xpose.msra.mxu0 0
        %1636 = vmatprep.subr.bf16.mxu0 0
        %1637 = vmatpush1.bf16.xpose.msra.mxu0 0
        %1638 = vmatprep.subr.bf16.mxu0 0
        %1639 = vmatpush1.bf16.xpose.msra.mxu0 0
        %1640 = vmatprep.subr.bf16.mxu0 0
        %1641 = vmatpush1.bf16.xpose.msra.mxu0 0
        %1642 = vmatprep.subr.bf16.mxu0 0
        %1643 = vmatpush1.bf16.xpose.msra.mxu0 %v1626
        %1644 = vmatprep.subr.bf16.mxu0 0
        %1645 = vmatpush2.bf16.xpose.msra.mxu0 0
        %1646 = vmatprep.subr.bf16.mxu0 0
        %1647 = vmatpush2.bf16.xpose.msra.mxu0 0
        %1648 = vmatprep.subr.bf16.mxu0 0
        %1649 = vmatpush2.bf16.xpose.msra.mxu0 0
        %1650 = vmatprep.subr.bf16.mxu0 0
        %1651 = vmatpush2.bf16.xpose.msra.mxu0 0
        %1652 = vmatprep.subr.bf16.mxu0 0
        %1653 = vmatpush2.bf16.xpose.msra.mxu0 0
        %1654 = vmatprep.subr.bf16.mxu0 0
        %1655 = vmatpush2.bf16.xpose.msra.mxu0 0
        %1656 = vmatprep.subr.bf16.mxu0 0
        %1657 = vmatpush2.bf16.xpose.msra.mxu0 0
        %1658 = vmatprep.subr.bf16.mxu0 0
        %1659 = vmatpush2.bf16.xpose.msra.mxu0 0
        %1660 = vmatprep.mubr.bf16.mxu0 0
        %1661 = vmatmul.mubr.bf16.gmra.mxu0 %v1623
        %v1662 = vpop.f32.mrf.mxu0
        %v1663 = vadd.f32 0.0, %v1662
        %v1664 = vpop.f32.mrf.mxu0
        %v1665 = vpop.f32.mrf.mxu0
        %v1666 = vadd.f32 0.0, %v1665
        %v1667 = vpop.f32.mrf.mxu0
        %1668 = vdwg.mxu0
        %v1669 = vsel %vm979, %v1513, -inf
        %1670 = vmax.xlane.f32.xlu0 %v1669
        %v1671 = vpop.xlane.xlu0 %1670
        %v1672 = vsel %vm979, %v1516, -inf
        %1673 = vmax.xlane.f32.xlu0 %v1672
        %v1674 = vpop.xlane.xlu0 %1673
        %v1675 = vsel %vm979, %v1563, -inf
        %1676 = vmax.xlane.f32.xlu0 %v1675
        %v1677 = vpop.xlane.xlu0 %1676
        %v1678 = vsel %vm979, %v1566, -inf
        %1679 = vmax.xlane.f32.xlu0 %v1678
        %v1680 = vpop.xlane.xlu0 %1679
        %v1681 = vsel %vm979, %v1613, -inf
        %1682 = vmax.xlane.f32.xlu0 %v1681
        %v1683 = vpop.xlane.xlu0 %1682
        %v1684 = vsel %vm979, %v1616, -inf
        %1685 = vmax.xlane.f32.xlu0 %v1684
        %v1686 = vpop.xlane.xlu0 %1685
        %v1687 = vsel %vm979, %v1663, -inf
        %1688 = vmax.xlane.f32.xlu0 %v1687
        %v1689 = vpop.xlane.xlu0 %1688
        %v1690 = vsel %vm979, %v1666, -inf
        %1691 = vmax.xlane.f32.xlu0 %v1690
        %v1692 = vpop.xlane.xlu0 %1691
        %v1693 = vsub.f32 %v1513, %v1671
        %v1694 = vsub.f32 %v1516, %v1674
        %v1695 = vsub.f32 %v1563, %v1677
        %v1696 = vsub.f32 %v1566, %v1680
        %v1697 = vsub.f32 %v1613, %v1683
        %v1698 = vsub.f32 %v1616, %v1686
        %v1699 = vsub.f32 %v1663, %v1689
        %v1700 = vsub.f32 %v1666, %v1692
        %v1701 = vmul.f32 %v1693, 1.442695
        %v1702 = vpow.pop %v1701
        %v1703 = vmul.f32 %v1694, 1.442695
        %v1704 = vpow.pop %v1703
        %v1705 = vmul.f32 %v1695, 1.442695
        %v1706 = vpow.pop %v1705
        %v1707 = vmul.f32 %v1696, 1.442695
        %v1708 = vpow.pop %v1707
        %v1709 = vmul.f32 %v1697, 1.442695
        %v1710 = vpow.pop %v1709
        %v1711 = vmul.f32 %v1698, 1.442695
        %v1712 = vpow.pop %v1711
        %v1713 = vmul.f32 %v1699, 1.442695
        %v1714 = vpow.pop %v1713
        %v1715 = vmul.f32 %v1700, 1.442695
        %v1716 = vpow.pop %v1715
        %v1717 = vsel %vm979, %v1702, 0.0
        %1718 = vadd.xlane.f32.xlu0 %v1717
        %v1719 = vpop.xlane.xlu0 %1718
        %v1720 = vsel %vm979, %v1704, 0.0
        %1721 = vadd.xlane.f32.xlu0 %v1720
        %v1722 = vpop.xlane.xlu0 %1721
        %v1723 = vsel %vm979, %v1706, 0.0
        %1724 = vadd.xlane.f32.xlu0 %v1723
        %v1725 = vpop.xlane.xlu0 %1724
        %v1726 = vsel %vm979, %v1708, 0.0
        %1727 = vadd.xlane.f32.xlu0 %v1726
        %v1728 = vpop.xlane.xlu0 %1727
        %v1729 = vsel %vm979, %v1710, 0.0
        %1730 = vadd.xlane.f32.xlu0 %v1729
        %v1731 = vpop.xlane.xlu0 %1730
        %v1732 = vsel %vm979, %v1712, 0.0
        %1733 = vadd.xlane.f32.xlu0 %v1732
        %v1734 = vpop.xlane.xlu0 %1733
        %v1735 = vsel %vm979, %v1714, 0.0
        %1736 = vadd.xlane.f32.xlu0 %v1735
        %v1737 = vpop.xlane.xlu0 %1736
        %v1738 = vsel %vm979, %v1716, 0.0
        %1739 = vadd.xlane.f32.xlu0 %v1738
        %v1740 = vpop.xlane.xlu0 %1739
        %v1741 = vrcp.pop %v1719
        %v1742 = vrcp.pop %v1722
        %v1743 = vrcp.pop %v1725
        %v1744 = vrcp.pop %v1728
        %v1745 = vrcp.pop %v1731
        %v1746 = vrcp.pop %v1734
        %v1747 = vrcp.pop %v1737
        %v1748 = vrcp.pop %v1740
        %v1749 = vmul.f32 %v1702, %v1741
        %v1750 = vmul.f32 %v1704, %v1742
        %v1751 = vmul.f32 %v1706, %v1743
        %v1752 = vmul.f32 %v1708, %v1744
        %v1753 = vmul.f32 %v1710, %v1745
        %v1754 = vmul.f32 %v1712, %v1746
        %v1755 = vmul.f32 %v1714, %v1747
        %v1756 = vmul.f32 %v1716, %v1748
        %v1757 = vmul.f32 %v1749, %v1344
        %v1758 = vmul.f32 %v1750, %v1345
        %v1759 = vmul.f32 %v1751, %v1344
        %v1760 = vmul.f32 %v1752, %v1345
        %v1761 = vmul.f32 %v1753, %v1344
        %v1762 = vmul.f32 %v1754, %v1345
        %v1763 = vmul.f32 %v1755, %v1344
        %v1764 = vmul.f32 %v1756, %v1345
        %1765 = vst.msk [vmem:[%s761] sm:$0xff] %vm979, %v1757
        %1766 = vst.msk [vmem:[%s761 + $0x8] sm:$0xff] %vm979, %v1758
        %1767 = vst.msk [vmem:[%s761 + $0x10] sm:$0xff] %vm979, %v1759
        %1768 = vst.msk [vmem:[%s761 + $0x18] sm:$0xff] %vm979, %v1760
        %1769 = vst.msk [vmem:[%s761 + $0x20] sm:$0xff] %vm979, %v1761
        %1770 = vst.msk [vmem:[%s761 + $0x28] sm:$0xff] %vm979, %v1762
        %1771 = vst.msk [vmem:[%s761 + $0x30] sm:$0xff] %vm979, %v1763
        %1772 = vst.msk [vmem:[%s761 + $0x38] sm:$0xff] %vm979, %v1764
        %v1773 = vpack.c.bf16 %v1758, %v1757
        %v1774 = vpack.c.bf16 %v1760, %v1759
        %v1775 = vpack.c.bf16 %v1762, %v1761
        %v1776 = vpack.c.bf16 %v1764, %v1763
        %1777 = vrot.lane.b32.xlu0 %v1464, 64
        %v1778 = vpop.permute.xlu0 %1777
        %v1781 = vsel %vm979, %v1773, 0
        %1783 = vmatprep.subr.bf16.mxu0 0
        %1784 = vmatpush1.bf16.msra.mxu0 0
        %1785 = vmatprep.subr.bf16.mxu0 0
        %1786 = vmatpush1.bf16.msra.mxu0 0
        %1787 = vmatprep.subr.bf16.mxu0 0
        %1788 = vmatpush1.bf16.msra.mxu0 0
        %1789 = vmatprep.subr.bf16.mxu0 0
        %1790 = vmatpush1.bf16.msra.mxu0 0
        %1791 = vmatprep.subr.bf16.mxu0 0
        %1792 = vmatpush1.bf16.msra.mxu0 0
        %1793 = vmatprep.subr.bf16.mxu0 0
        %1794 = vmatpush1.bf16.msra.mxu0 0
        %1795 = vmatprep.subr.bf16.mxu0 0
        %1796 = vmatpush1.bf16.msra.mxu0 0
        %1797 = vmatprep.subr.bf16.mxu0 0
        %1798 = vmatpush1.bf16.msra.mxu0 %v1778
        %1799 = vmatprep.subr.bf16.mxu0 0
        %1800 = vmatpush2.bf16.msra.mxu0 0
        %1801 = vmatprep.subr.bf16.mxu0 0
        %1802 = vmatpush2.bf16.msra.mxu0 0
        %1803 = vmatprep.subr.bf16.mxu0 0
        %1804 = vmatpush2.bf16.msra.mxu0 0
        %1805 = vmatprep.subr.bf16.mxu0 0
        %1806 = vmatpush2.bf16.msra.mxu0 0
        %1807 = vmatprep.subr.bf16.mxu0 0
        %1808 = vmatpush2.bf16.msra.mxu0 0
        %1809 = vmatprep.subr.bf16.mxu0 0
        %1810 = vmatpush2.bf16.msra.mxu0 0
        %1811 = vmatprep.subr.bf16.mxu0 0
        %1812 = vmatpush2.bf16.msra.mxu0 0
        %1813 = vmatprep.subr.bf16.mxu0 0
        %1814 = vmatpush2.bf16.msra.mxu0 0
        %1815 = vmatprep.mubr.bf16.mxu0 0
        %1816 = vmatmul.mubr.bf16.gmra.mxu0 %v1781
        %v1817 = vpop.f32.mrf.mxu0
        %v1818 = vadd.f32 0.0, %v1817
        %v1819 = vpop.f32.mrf.mxu0
        %v1820 = vpop.f32.mrf.mxu0
        %v1821 = vadd.f32 0.0, %v1820
        %v1822 = vpop.f32.mrf.mxu0
        %1823 = vdwg.mxu0
        %1824 = vrot.lane.b32.xlu0 %v1465, 64
        %v1825 = vpop.permute.xlu0 %1824
        %v1828 = vsel %vm979, %v1774, 0
        %1830 = vmatprep.subr.bf16.mxu0 0
        %1831 = vmatpush1.bf16.msra.mxu0 0
        %1832 = vmatprep.subr.bf16.mxu0 0
        %1833 = vmatpush1.bf16.msra.mxu0 0
        %1834 = vmatprep.subr.bf16.mxu0 0
        %1835 = vmatpush1.bf16.msra.mxu0 0
        %1836 = vmatprep.subr.bf16.mxu0 0
        %1837 = vmatpush1.bf16.msra.mxu0 0
        %1838 = vmatprep.subr.bf16.mxu0 0
        %1839 = vmatpush1.bf16.msra.mxu0 0
        %1840 = vmatprep.subr.bf16.mxu0 0
        %1841 = vmatpush1.bf16.msra.mxu0 0
        %1842 = vmatprep.subr.bf16.mxu0 0
        %1843 = vmatpush1.bf16.msra.mxu0 0
        %1844 = vmatprep.subr.bf16.mxu0 0
        %1845 = vmatpush1.bf16.msra.mxu0 %v1825
        %1846 = vmatprep.subr.bf16.mxu0 0
        %1847 = vmatpush2.bf16.msra.mxu0 0
        %1848 = vmatprep.subr.bf16.mxu0 0
        %1849 = vmatpush2.bf16.msra.mxu0 0
        %1850 = vmatprep.subr.bf16.mxu0 0
        %1851 = vmatpush2.bf16.msra.mxu0 0
        %1852 = vmatprep.subr.bf16.mxu0 0
        %1853 = vmatpush2.bf16.msra.mxu0 0
        %1854 = vmatprep.subr.bf16.mxu0 0
        %1855 = vmatpush2.bf16.msra.mxu0 0
        %1856 = vmatprep.subr.bf16.mxu0 0
        %1857 = vmatpush2.bf16.msra.mxu0 0
        %1858 = vmatprep.subr.bf16.mxu0 0
        %1859 = vmatpush2.bf16.msra.mxu0 0
        %1860 = vmatprep.subr.bf16.mxu0 0
        %1861 = vmatpush2.bf16.msra.mxu0 0
        %1862 = vmatprep.mubr.bf16.mxu0 0
        %1863 = vmatmul.mubr.bf16.gmra.mxu0 %v1828
        %v1864 = vpop.f32.mrf.mxu0
        %v1865 = vadd.f32 0.0, %v1864
        %v1866 = vpop.f32.mrf.mxu0
        %v1867 = vpop.f32.mrf.mxu0
        %v1868 = vadd.f32 0.0, %v1867
        %v1869 = vpop.f32.mrf.mxu0
        %1870 = vdwg.mxu0
        %1871 = vrot.lane.b32.xlu0 %v1466, 64
        %v1872 = vpop.permute.xlu0 %1871
        %v1875 = vsel %vm979, %v1775, 0
        %1877 = vmatprep.subr.bf16.mxu0 0
        %1878 = vmatpush1.bf16.msra.mxu0 0
        %1879 = vmatprep.subr.bf16.mxu0 0
        %1880 = vmatpush1.bf16.msra.mxu0 0
        %1881 = vmatprep.subr.bf16.mxu0 0
        %1882 = vmatpush1.bf16.msra.mxu0 0
        %1883 = vmatprep.subr.bf16.mxu0 0
        %1884 = vmatpush1.bf16.msra.mxu0 0
        %1885 = vmatprep.subr.bf16.mxu0 0
        %1886 = vmatpush1.bf16.msra.mxu0 0
        %1887 = vmatprep.subr.bf16.mxu0 0
        %1888 = vmatpush1.bf16.msra.mxu0 0
        %1889 = vmatprep.subr.bf16.mxu0 0
        %1890 = vmatpush1.bf16.msra.mxu0 0
        %1891 = vmatprep.subr.bf16.mxu0 0
        %1892 = vmatpush1.bf16.msra.mxu0 %v1872
        %1893 = vmatprep.subr.bf16.mxu0 0
        %1894 = vmatpush2.bf16.msra.mxu0 0
        %1895 = vmatprep.subr.bf16.mxu0 0
        %1896 = vmatpush2.bf16.msra.mxu0 0
        %1897 = vmatprep.subr.bf16.mxu0 0
        %1898 = vmatpush2.bf16.msra.mxu0 0
        %1899 = vmatprep.subr.bf16.mxu0 0
        %1900 = vmatpush2.bf16.msra.mxu0 0
        %1901 = vmatprep.subr.bf16.mxu0 0
        %1902 = vmatpush2.bf16.msra.mxu0 0
        %1903 = vmatprep.subr.bf16.mxu0 0
        %1904 = vmatpush2.bf16.msra.mxu0 0
        %1905 = vmatprep.subr.bf16.mxu0 0
        %1906 = vmatpush2.bf16.msra.mxu0 0
        %1907 = vmatprep.subr.bf16.mxu0 0
        %1908 = vmatpush2.bf16.msra.mxu0 0
        %1909 = vmatprep.mubr.bf16.mxu0 0
        %1910 = vmatmul.mubr.bf16.gmra.mxu0 %v1875
        %v1911 = vpop.f32.mrf.mxu0
        %v1912 = vadd.f32 0.0, %v1911
        %v1913 = vpop.f32.mrf.mxu0
        %v1914 = vpop.f32.mrf.mxu0
        %v1915 = vadd.f32 0.0, %v1914
        %v1916 = vpop.f32.mrf.mxu0
        %1917 = vdwg.mxu0
        %1918 = vrot.lane.b32.xlu0 %v1467, 64
        %v1919 = vpop.permute.xlu0 %1918
        %v1922 = vsel %vm979, %v1776, 0
        %1924 = vmatprep.subr.bf16.mxu0 0
        %1925 = vmatpush1.bf16.msra.mxu0 0
        %1926 = vmatprep.subr.bf16.mxu0 0
        %1927 = vmatpush1.bf16.msra.mxu0 0
        %1928 = vmatprep.subr.bf16.mxu0 0
        %1929 = vmatpush1.bf16.msra.mxu0 0
        %1930 = vmatprep.subr.bf16.mxu0 0
        %1931 = vmatpush1.bf16.msra.mxu0 0
        %1932 = vmatprep.subr.bf16.mxu0 0
        %1933 = vmatpush1.bf16.msra.mxu0 0
        %1934 = vmatprep.subr.bf16.mxu0 0
        %1935 = vmatpush1.bf16.msra.mxu0 0
        %1936 = vmatprep.subr.bf16.mxu0 0
        %1937 = vmatpush1.bf16.msra.mxu0 0
        %1938 = vmatprep.subr.bf16.mxu0 0
        %1939 = vmatpush1.bf16.msra.mxu0 %v1919
        %1940 = vmatprep.subr.bf16.mxu0 0
        %1941 = vmatpush2.bf16.msra.mxu0 0
        %1942 = vmatprep.subr.bf16.mxu0 0
        %1943 = vmatpush2.bf16.msra.mxu0 0
        %1944 = vmatprep.subr.bf16.mxu0 0
        %1945 = vmatpush2.bf16.msra.mxu0 0
        %1946 = vmatprep.subr.bf16.mxu0 0
        %1947 = vmatpush2.bf16.msra.mxu0 0
        %1948 = vmatprep.subr.bf16.mxu0 0
        %1949 = vmatpush2.bf16.msra.mxu0 0
        %1950 = vmatprep.subr.bf16.mxu0 0
        %1951 = vmatpush2.bf16.msra.mxu0 0
        %1952 = vmatprep.subr.bf16.mxu0 0
        %1953 = vmatpush2.bf16.msra.mxu0 0
        %1954 = vmatprep.subr.bf16.mxu0 0
        %1955 = vmatpush2.bf16.msra.mxu0 0
        %1956 = vmatprep.mubr.bf16.mxu0 0
        %1957 = vmatmul.mubr.bf16.gmra.mxu0 %v1922
        %v1958 = vpop.f32.mrf.mxu0
        %v1959 = vadd.f32 0.0, %v1958
        %v1960 = vpop.f32.mrf.mxu0
        %v1961 = vpop.f32.mrf.mxu0
        %v1962 = vadd.f32 0.0, %v1961
        %v1963 = vpop.f32.mrf.mxu0
        %1964 = vdwg.mxu0
        %1967 = vrot.lane.b32.xlu0 %v1865, 8
        %v1968 = vpop.permute.xlu0 %1967
        %1969 = vrot.lane.b32.xlu0 %v1868, 8
        %v1970 = vpop.permute.xlu0 %1969
        %1975 = vrot.lane.b32.xlu0 %v1912, 16
        %v1976 = vpop.permute.xlu0 %1975
        %1977 = vrot.lane.b32.xlu0 %v1915, 16
        %v1978 = vpop.permute.xlu0 %1977
        %1983 = vrot.lane.b32.xlu0 %v1959, 24
        %v1984 = vpop.permute.xlu0 %1983
        %1985 = vrot.lane.b32.xlu0 %v1962, 24
        %v1986 = vpop.permute.xlu0 %1985
        %v1989 = vsel %vm1471, %v1818, %v1968
        %v1990 = vsel %vm1471, %v1821, %v1970
        %v1991 = vsel %vm979, %v1989, %v1976
        %v1992 = vsel %vm979, %v1990, %v1978
        %vm1993 = vcmask 195584
        %v1994 = vsel %vm1993, %v1991, %v1984
        %v1995 = vsel %vm1993, %v1992, %v1986
        %v1996 = vpack.c.bf16 %v1995, %v1994
        %v1997 = vld [vmem:[#allocation7] sm:$0xf]
        %v1998 = vld [vmem:[#allocation7 + $0x4] sm:$0xf]
        %v1999 = vld [vmem:[#allocation7 + $0x8] sm:$0xf]
        %v2000 = vld [vmem:[#allocation7 + $0xc] sm:$0xf]
        %v2001 = vld [vmem:[%s11] sm:$0x1]
        %v2003 = vlaneseq
        %v2004 = vshrl.u32 %v2003, 7
        %v2005 = vsub.s32 0, %v2004
        %v2006 = vrot.slane %v2001, %v2005
        %v2012 = vunpack.c.l.b16 %v1997
        %v2013 = vunpack.c.l.b16 %v1998
        %v2014 = vunpack.c.l.b16 %v1999
        %v2015 = vunpack.c.l.b16 %v2000
        %v2016 = vpack.c.b16 %v2013, %v2012
        %v2017 = vpack.c.b16 %v2015, %v2014
        %v2021 = vsel %vm789, %v1996, 0
        %2023 = vmatprep.subr.bf16.mxu0 0
        %2024 = vmatpush1.bf16.msra.mxu0 0
        %2025 = vmatprep.subr.bf16.mxu0 0
        %2026 = vmatpush1.bf16.msra.mxu0 0
        %2027 = vmatprep.subr.bf16.mxu0 0
        %2028 = vmatpush1.bf16.msra.mxu0 0
        %2029 = vmatprep.subr.bf16.mxu0 0
        %2030 = vmatpush1.bf16.msra.mxu0 0
        %2031 = vmatprep.subr.bf16.mxu0 0
        %2032 = vmatpush1.bf16.msra.mxu0 0
        %2033 = vmatprep.subr.bf16.mxu0 0
        %2034 = vmatpush1.bf16.msra.mxu0 0
        %2035 = vmatprep.subr.bf16.mxu0 0
        %2036 = vmatpush1.bf16.msra.mxu0 %v2017
        %2037 = vmatprep.subr.bf16.mxu0 0
        %2038 = vmatpush1.bf16.msra.mxu0 %v2016
        %2039 = vmatprep.subr.bf16.mxu0 0
        %2040 = vmatpush2.bf16.msra.mxu0 0
        %2041 = vmatprep.subr.bf16.mxu0 0
        %2042 = vmatpush2.bf16.msra.mxu0 0
        %2043 = vmatprep.subr.bf16.mxu0 0
        %2044 = vmatpush2.bf16.msra.mxu0 0
        %2045 = vmatprep.subr.bf16.mxu0 0
        %2046 = vmatpush2.bf16.msra.mxu0 0
        %2047 = vmatprep.subr.bf16.mxu0 0
        %2048 = vmatpush2.bf16.msra.mxu0 0
        %2049 = vmatprep.subr.bf16.mxu0 0
        %2050 = vmatpush2.bf16.msra.mxu0 0
        %2051 = vmatprep.subr.bf16.mxu0 0
        %2052 = vmatpush2.bf16.msra.mxu0 0
        %2053 = vmatprep.subr.bf16.mxu0 0
        %2054 = vmatpush2.bf16.msra.mxu0 0
        %2055 = vmatprep.mubr.bf16.mxu0 0
        %2056 = vmatmul.mubr.bf16.gmra.mxu0 %v2021
        %v2057 = vpop.f32.mrf.mxu0
        %v2058 = vadd.f32 %v2006, %v2057
        %v2059 = vpop.f32.mrf.mxu0
        %v2060 = vpop.f32.mrf.mxu0
        %v2061 = vadd.f32 %v2006, %v2060
        %v2062 = vpop.f32.mrf.mxu0
        %2063 = vdwg.mxu0
        %v2064 = vadd.f32 %v768, %v2058
        %v2065 = vadd.f32 %v769, %v2061
        %v2066 = vld [vmem:[%s12] sm:$0x1]
        %v2067 = vld [vmem:[%s13] sm:$0x1]
        %v2068 = vsel %vm789, %v2064, 0.0
        %2069 = vadd.xlane.f32.xlu0 %v2068
        %v2070 = vpop.xlane.xlu0 %2069
        %v2071 = vsel %vm789, %v2065, 0.0
        %2072 = vadd.xlane.f32.xlu0 %v2071
        %v2073 = vpop.xlane.xlu0 %2072
        %v2074 = vmul.f32 %v2070, %v796
        %v2075 = vmul.f32 %v2073, %v796
        %v2076 = vsub.f32 %v2064, %v2074
        %v2077 = vsub.f32 %v2065, %v2075
        %v2078 = vmul.f32 %v2076, %v2076
        %v2079 = vmul.f32 %v2077, %v2077
        %v2080 = vsel %vm789, %v2078, 0.0
        %2081 = vadd.xlane.f32.xlu0 %v2080
        %v2082 = vpop.xlane.xlu0 %2081
        %v2083 = vsel %vm789, %v2079, 0.0
        %2084 = vadd.xlane.f32.xlu0 %v2083
        %v2085 = vpop.xlane.xlu0 %2084
        %v2086 = vmul.f32 %v2082, %v796
        %v2087 = vmul.f32 %v2085, %v796
        %v2088 = vadd.f32 %v2086, 1e-05
        %v2089 = vadd.f32 %v2087, 1e-05
        %v2090 = vrsqrt.pop %v2088
        %v2091 = vrsqrt.pop %v2089
        %v2092 = vmul.f32 %v2076, %v2090
        %v2093 = vmul.f32 %v2077, %v2091
        %v2095 = vlaneseq
        %v2096 = vshrl.u32 %v2095, 7
        %v2097 = vsub.s32 0, %v2096
        %v2098 = vrot.slane %v2066, %v2097
        %v2100 = vmul.f32 %v2092, %v2098
        %v2101 = vmul.f32 %v2093, %v2098
        %v2103 = vlaneseq
        %v2104 = vshrl.u32 %v2103, 7
        %v2105 = vsub.s32 0, %v2104
        %v2106 = vrot.slane %v2067, %v2105
        %v2108 = vadd.f32 %v2100, %v2106
        %v2109 = vadd.f32 %v2101, %v2106
        %v2110 = vpack.c.bf16 %v2109, %v2108
        %v2111 = vld [vmem:[#allocation8] sm:$0xf]
        %v2112 = vld [vmem:[#allocation8 + $0x4] sm:$0xf]
        %v2113 = vld [vmem:[#allocation8 + $0x8] sm:$0xf]
        %v2114 = vld [vmem:[#allocation8 + $0xc] sm:$0xf]
        %v2115 = vld [vmem:[%s15] sm:$0x1]
        %v2117 = vlaneseq
        %v2118 = vshrl.u32 %v2117, 7
        %v2119 = vsub.s32 0, %v2118
        %v2120 = vrot.slane %v2115, %v2119
        %v2126 = vunpack.c.l.b16 %v2111
        %v2127 = vunpack.c.l.b16 %v2112
        %v2128 = vunpack.c.l.b16 %v2113
        %v2129 = vunpack.c.l.b16 %v2114
        %v2130 = vpack.c.b16 %v2127, %v2126
        %v2131 = vpack.c.b16 %v2129, %v2128
        %v2135 = vsel %vm789, %v2110, 0
        %2137 = vmatprep.subr.bf16.mxu0 0
        %2138 = vmatpush1.bf16.msra.mxu0 0
        %2139 = vmatprep.subr.bf16.mxu0 0
        %2140 = vmatpush1.bf16.msra.mxu0 0
        %2141 = vmatprep.subr.bf16.mxu0 0
        %2142 = vmatpush1.bf16.msra.mxu0 0
        %2143 = vmatprep.subr.bf16.mxu0 0
        %2144 = vmatpush1.bf16.msra.mxu0 0
        %2145 = vmatprep.subr.bf16.mxu0 0
        %2146 = vmatpush1.bf16.msra.mxu0 0
        %2147 = vmatprep.subr.bf16.mxu0 0
        %2148 = vmatpush1.bf16.msra.mxu0 0
        %2149 = vmatprep.subr.bf16.mxu0 0
        %2150 = vmatpush1.bf16.msra.mxu0 %v2131
        %2151 = vmatprep.subr.bf16.mxu0 0
        %2152 = vmatpush1.bf16.msra.mxu0 %v2130
        %2153 = vmatprep.subr.bf16.mxu0 0
        %2154 = vmatpush2.bf16.msra.mxu0 0
        %2155 = vmatprep.subr.bf16.mxu0 0
        %2156 = vmatpush2.bf16.msra.mxu0 0
        %2157 = vmatprep.subr.bf16.mxu0 0
        %2158 = vmatpush2.bf16.msra.mxu0 0
        %2159 = vmatprep.subr.bf16.mxu0 0
        %2160 = vmatpush2.bf16.msra.mxu0 0
        %2161 = vmatprep.subr.bf16.mxu0 0
        %2162 = vmatpush2.bf16.msra.mxu0 0
        %2163 = vmatprep.subr.bf16.mxu0 0
        %2164 = vmatpush2.bf16.msra.mxu0 0
        %2165 = vmatprep.subr.bf16.mxu0 0
        %2166 = vmatpush2.bf16.msra.mxu0 0
        %2167 = vmatprep.subr.bf16.mxu0 0
        %2168 = vmatpush2.bf16.msra.mxu0 0
        %2169 = vmatprep.mubr.bf16.mxu0 0
        %2170 = vmatmul.mubr.bf16.gmra.mxu0 %v2135
        %v2171 = vpop.f32.mrf.mxu0
        %v2172 = vadd.f32 %v2120, %v2171
        %v2173 = vpop.f32.mrf.mxu0
        %v2174 = vpop.f32.mrf.mxu0
        %v2175 = vadd.f32 %v2120, %v2174
        %v2176 = vpop.f32.mrf.mxu0
        %2177 = vdwg.mxu0
        %v2178 = vmax.f32 %v2172, 0.0
        %v2179 = vmax.f32 %v2175, 0.0
        %v2180 = vpack.c.bf16 %v2179, %v2178
        %v2181 = vld [vmem:[%s16] sm:$0xf]
        %v2182 = vld [vmem:[%s16 + $0x4] sm:$0xf]
        %v2183 = vld [vmem:[%s16 + $0x8] sm:$0xf]
        %v2184 = vld [vmem:[%s16 + $0xc] sm:$0xf]
        %v2185 = vld [vmem:[%s16 + $0x10] sm:$0xf]
        %v2186 = vld [vmem:[%s16 + $0x14] sm:$0xf]
        %v2187 = vld [vmem:[%s16 + $0x18] sm:$0xf]
        %v2188 = vld [vmem:[%s16 + $0x1c] sm:$0xf]
        %v2189 = vld [vmem:[%s17] sm:$0x1]
        %v2191 = vlaneseq
        %v2192 = vshrl.u32 %v2191, 7
        %v2193 = vsub.s32 0, %v2192
        %v2194 = vrot.slane %v2189, %v2193
        %v2204 = vunpack.c.l.b16 %v2181
        %v2205 = vunpack.c.l.b16 %v2182
        %v2206 = vunpack.c.l.b16 %v2183
        %v2207 = vunpack.c.l.b16 %v2184
        %v2208 = vunpack.c.l.b16 %v2185
        %v2209 = vunpack.c.l.b16 %v2186
        %v2210 = vunpack.c.l.b16 %v2187
        %v2211 = vunpack.c.l.b16 %v2188
        %v2212 = vpack.c.b16 %v2205, %v2204
        %v2213 = vpack.c.b16 %v2207, %v2206
        %v2214 = vpack.c.b16 %v2209, %v2208
        %v2215 = vpack.c.b16 %v2211, %v2210
        %vm2220 = vcmask 523264
        %v2222 = vsel %vm2220, %v2180, 0
        %2224 = vmatprep.subr.bf16.mxu0 0
        %2225 = vmatpush1.bf16.msra.mxu0 0
        %2226 = vmatprep.subr.bf16.mxu0 0
        %2227 = vmatpush1.bf16.msra.mxu0 0
        %2228 = vmatprep.subr.bf16.mxu0 0
        %2229 = vmatpush1.bf16.msra.mxu0 0
        %2230 = vmatprep.subr.bf16.mxu0 0
        %2231 = vmatpush1.bf16.msra.mxu0 0
        %2232 = vmatprep.subr.bf16.mxu0 0
        %2233 = vmatpush1.bf16.msra.mxu0 %v2215
        %2234 = vmatprep.subr.bf16.mxu0 0
        %2235 = vmatpush1.bf16.msra.mxu0 %v2214
        %2236 = vmatprep.subr.bf16.mxu0 0
        %2237 = vmatpush1.bf16.msra.mxu0 %v2213
        %2238 = vmatprep.subr.bf16.mxu0 0
        %2239 = vmatpush1.bf16.msra.mxu0 %v2212
        %2240 = vmatprep.subr.bf16.mxu0 0
        %2241 = vmatpush2.bf16.msra.mxu0 0
        %2242 = vmatprep.subr.bf16.mxu0 0
        %2243 = vmatpush2.bf16.msra.mxu0 0
        %2244 = vmatprep.subr.bf16.mxu0 0
        %2245 = vmatpush2.bf16.msra.mxu0 0
        %2246 = vmatprep.subr.bf16.mxu0 0
        %2247 = vmatpush2.bf16.msra.mxu0 0
        %2248 = vmatprep.subr.bf16.mxu0 0
        %2249 = vmatpush2.bf16.msra.mxu0 0
        %2250 = vmatprep.subr.bf16.mxu0 0
        %2251 = vmatpush2.bf16.msra.mxu0 0
        %2252 = vmatprep.subr.bf16.mxu0 0
        %2253 = vmatpush2.bf16.msra.mxu0 0
        %2254 = vmatprep.subr.bf16.mxu0 0
        %2255 = vmatpush2.bf16.msra.mxu0 0
        %2256 = vmatprep.mubr.bf16.mxu0 0
        %2257 = vmatmul.mubr.bf16.gmra.mxu0 %v2222
        %v2258 = vpop.f32.mrf.mxu0
        %v2259 = vadd.f32 %v2194, %v2258
        %v2260 = vpop.f32.mrf.mxu0
        %v2261 = vpop.f32.mrf.mxu0
        %v2262 = vadd.f32 %v2194, %v2261
        %v2263 = vpop.f32.mrf.mxu0
        %2264 = vdwg.mxu0
        %v2265 = vadd.f32 %v2064, %v2259
        %v2266 = vadd.f32 %v2065, %v2262
        %2267 = vst.msk [vmem:[%s740] sm:$0xff] %vm789, %v2265
        %2268 = vst.msk [vmem:[%s740 + $0x8] sm:$0xff] %vm789, %v2266
        %2269 = vst.msk [vmem:[%s747] sm:$0xff] %vm979, %v1344
        %2270 = vst.msk [vmem:[%s747 + $0x8] sm:$0xff] %vm979, %v1345
        %2271 = vst.msk [vmem:[%s754] sm:$0xff] %vm979, %v1188
        %2272 = vst.msk [vmem:[%s754 + $0x8] sm:$0xff] %vm979, %v1189
        %s2273 = sand.u32 %s443, 1
        %s2274 = scalar_lea.sflag [#allocation4], %s2273
        %s2275 = sand.u32 %s443, 1
        %s2276 = smul.addr %s2275, 16
        %s2277 = scalar_lea.vmem [#allocation10], %s2276
        %s2278 = sand.u32 %s47, 1
        %s2279 = scalar_lea.sflag [#allocation12], %s2278
        %s2280 = sand.u32 %s469, 1
        %s2281 = smul.addr %s2280, 16
        %s2282 = scalar_lea.vmem [#allocation11], %s2281
        %s2283 = sand.u32 %s47, 1
        %s2284 = scalar_lea.sflag [#allocation12], %s2283
        %s2285 = sand.u32 %s495, 1
        %s2286 = smul.addr %s2285, 16
        %s2287 = scalar_lea.vmem [#allocation13], %s2286
        %s2288 = sand.u32 %s521, 1
        %s2289 = scalar_lea.sflag [#allocation15], %s2288
        %s2290 = sand.u32 %s521, 1
        %s2291 = smul.addr %s2290, 64
        %s2292 = scalar_lea.vmem [#allocation14], %s2291
        // Predicated region
        $region109: #{tpu_custom_call.1} parent=91 // pred_check
          %p2293 = pneg %p453
        $region110: #{tpu_custom_call.1} parent=91 // pred_check_branch
          %2295 = sbr.rel (%p2293) target = $region112
        $region111: #{tpu_custom_call.1} parent=91 // pred_region
          %s2297 = ssub.s32 256, 256
          %2298 = vsyncadd %s2274, %s2297
          %s2299 = smul.addr %s47, 2
          %s2300 = smul.addr %s2299, 128
          %s2301 = scalar_lea.hbm %s18, %s2300
          %s2302 = sshll.u32 %s2277, 4
          %s2303 = int_to_ptr.vmem [resolvable:$true] %s2302
          %2308 = dma.vmem_to_hbm [thread:$0]  %s2303, 256, %s2301, %s2274, 128, 128, 8
        $region112: #{tpu_custom_call.1} parent=91 // pred_fallthru
          _
        // Predicated region
        $region113: #{tpu_custom_call.1} parent=91 // pred_check
          %p2309 = pneg %p479
        $region114: #{tpu_custom_call.1} parent=91 // pred_check_branch
          %2311 = sbr.rel (%p2309) target = $region116
        $region115: #{tpu_custom_call.1} parent=91 // pred_region
          %s2313 = ssub.s32 256, 256
          %2314 = vsyncadd %s2279, %s2313
          %s2315 = smul.addr %s47, 2
          %s2316 = smul.addr %s2315, 128
          %s2317 = scalar_lea.hbm %s19, %s2316
          %s2318 = sshll.u32 %s2282, 4
          %s2319 = int_to_ptr.vmem [resolvable:$true] %s2318
          %2324 = dma.vmem_to_hbm [thread:$0]  %s2319, 256, %s2317, %s2279, 128, 128, 8
        $region116: #{tpu_custom_call.1} parent=91 // pred_fallthru
          _
        // Predicated region
        $region117: #{tpu_custom_call.1} parent=91 // pred_check
          %p2325 = pneg %p505
        $region118: #{tpu_custom_call.1} parent=91 // pred_check_branch
          %2327 = sbr.rel (%p2325) target = $region120
        $region119: #{tpu_custom_call.1} parent=91 // pred_region
          %s2329 = ssub.s32 256, 256
          %2330 = vsyncadd %s2284, %s2329
          %s2331 = smul.addr %s47, 2
          %s2332 = smul.addr %s2331, 128
          %s2333 = scalar_lea.hbm %s20, %s2332
          %s2334 = sshll.u32 %s2287, 4
          %s2335 = int_to_ptr.vmem [resolvable:$true] %s2334
          %2340 = dma.vmem_to_hbm [thread:$0]  %s2335, 256, %s2333, %s2284, 128, 128, 8
        $region120: #{tpu_custom_call.1} parent=91 // pred_fallthru
          _
        // Predicated region
        $region121: #{tpu_custom_call.1} parent=91 // pred_check
          %p2341 = pneg %p531
        $region122: #{tpu_custom_call.1} parent=91 // pred_check_branch
          %2343 = sbr.rel (%p2341) target = $region124
        $region123: #{tpu_custom_call.1} parent=91 // pred_region
          %s2345 = ssub.s32 1024, 1024
          %2346 = vsyncadd %s2289, %s2345
          %s2347 = smul.addr %s47, 8
          %s2348 = smul.addr %s2347, 128
          %s2349 = scalar_lea.hbm %s21, %s2348
          %s2350 = sshll.u32 %s2292, 4
          %s2351 = int_to_ptr.vmem [resolvable:$true] %s2350
          %2356 = dma.vmem_to_hbm [thread:$0]  %s2351, 1024, %s2349, %s2289, 128, 128, 8
        $region124: #{tpu_custom_call.1} parent=91 // pred_fallthru
          _
      $region92: #{tpu_custom_call.1} parent=5 // pred_fallthru
        _
      %p2357 = scmp.le.s32.totalorder 2, %s42
      // Predicated region
      $region125: #{tpu_custom_call.1} parent=5 // pred_check
        %p2358 = pneg %p2357
      $region126: #{tpu_custom_call.1} parent=5 // pred_check_branch
        %2360 = sbr.rel (%p2358) target = $region128
      $region127: #{tpu_custom_call.1} parent=5 // pred_region
        %s2361 = ssub.s32 %s42, 2
        // Predicated region
        $region129: #{tpu_custom_call.1} parent=127 // pred_check
          %p2362 = pneg %p459
        $region130: #{tpu_custom_call.1} parent=127 // pred_check_branch
          %2364 = sbr.rel (%p2362) target = $region132
        $region131: #{tpu_custom_call.1} parent=127 // pred_region
          %s2365 = sand.u32 %s444, 1
          %s2366 = scalar_lea.sflag [#allocation4], %s2365
          %s2367 = sand.u32 %s444, 1
          %s2368 = smul.addr %s2367, 16
          %s2369 = scalar_lea.vmem [#allocation10], %s2368
          %2370 = dma.done %s2366, 256
        $region132: #{tpu_custom_call.1} parent=127 // pred_fallthru
          _
        // Predicated region
        $region133: #{tpu_custom_call.1} parent=127 // pred_check
          %p2371 = pneg %p485
        $region134: #{tpu_custom_call.1} parent=127 // pred_check_branch
          %2373 = sbr.rel (%p2371) target = $region136
        $region135: #{tpu_custom_call.1} parent=127 // pred_region
          %s2374 = sand.u32 %s48, 1
          %s2375 = scalar_lea.sflag [#allocation12], %s2374
          %s2376 = sand.u32 %s470, 1
          %s2377 = smul.addr %s2376, 16
          %s2378 = scalar_lea.vmem [#allocation11], %s2377
          %2379 = dma.done %s2375, 256
        $region136: #{tpu_custom_call.1} parent=127 // pred_fallthru
          _
        // Predicated region
        $region137: #{tpu_custom_call.1} parent=127 // pred_check
          %p2380 = pneg %p511
        $region138: #{tpu_custom_call.1} parent=127 // pred_check_branch
          %2382 = sbr.rel (%p2380) target = $region140
        $region139: #{tpu_custom_call.1} parent=127 // pred_region
          %s2383 = sand.u32 %s48, 1
          %s2384 = scalar_lea.sflag [#allocation12], %s2383
          %s2385 = sand.u32 %s496, 1
          %s2386 = smul.addr %s2385, 16
          %s2387 = scalar_lea.vmem [#allocation13], %s2386
          %2388 = dma.done %s2384, 256
        $region140: #{tpu_custom_call.1} parent=127 // pred_fallthru
          _
        // Predicated region
        $region141: #{tpu_custom_call.1} parent=127 // pred_check
          %p2389 = pneg %p537
        $region142: #{tpu_custom_call.1} parent=127 // pred_check_branch
          %2391 = sbr.rel (%p2389) target = $region144
        $region143: #{tpu_custom_call.1} parent=127 // pred_region
          %s2392 = sand.u32 %s522, 1
          %s2393 = scalar_lea.sflag [#allocation15], %s2392
          %s2394 = sand.u32 %s522, 1
          %s2395 = smul.addr %s2394, 64
          %s2396 = scalar_lea.vmem [#allocation14], %s2395
          %2397 = dma.done %s2393, 1024
        $region144: #{tpu_custom_call.1} parent=127 // pred_fallthru
          _
      $region128: #{tpu_custom_call.1} parent=5 // pred_fallthru
        _
    $region6: #{tpu_custom_call.1} parent=1 // loop_footer
      %s46 = sadd.s32 1, %s42
    $region7: #{tpu_custom_call.1} parent=1 // loop_footer_branch
      %41 = sbr.rel target = $region3
    $region8: #{tpu_custom_call.1} parent=1 // loop_exit
      _
    %2398 = vsyncpa [#allocation3], 1
    %s2399 = scalar_lea.sflag [#allocation3], 1
    %2400 = vsyncpa %s2399, 1
    %2401 = vsyncpa [#allocation6], 1
    %2402 = vsyncpa [#allocation9], 1
    %2403 = vsyncpa [#allocation4], 1
    %s2404 = scalar_lea.sflag [#allocation4], 1
    %2405 = vsyncpa %s2404, 1
    %2406 = vsyncpa [#allocation12], 1
    %s2407 = scalar_lea.sflag [#allocation12], 1
    %2408 = vsyncpa %s2407, 1
    %2409 = vsyncpa [#allocation15], 1
    %s2410 = scalar_lea.sflag [#allocation15], 1
    %2411 = vsyncpa %s2410, 1

</llo_original>
